<compile_context>
chip_gen: v5e
topology: v5e:2x2
jax: 0.10.0
libtpu: 0.0.40
codegen_flags: <defaults>
</compile_context>

<pallas_src>
import math
import jax
import jax.numpy as jnp
from jax.experimental import pallas as pl
from jax.experimental.pallas import tpu as pltpu


BN_EPS = 1e-5
C_PAD = 128          # all channel dims carried at a dense 128 lanes

# Branch configs (from the PyTorch module):
#   K0/s0/p0 : first conv (Cin=2 -> 64)        pk0/pp0 : first MaxPool (k == s)
#   Kc/pc    : the three stride-1 convs (->128) pk1/pp1 : final MaxPool (k == s)
BRANCH1 = dict(K0=64,  s0=8,  p0=24, pk0=8, pp0=4, Kc=8, pc=4, pk1=4, pp1=2)
BRANCH2 = dict(K0=512, s0=64, p0=24, pk0=4, pp0=2, Kc=6, pc=4, pk1=2, pp1=1)


def _derive_lengths(L, cfg):
    Lout0 = (L + 2 * cfg["p0"] - cfg["K0"]) // cfg["s0"] + 1
    P0 = (Lout0 + 2 * cfg["pp0"] - cfg["pk0"]) // cfg["pk0"] + 1
    L1 = P0 + 2 * cfg["pc"] - cfg["Kc"] + 1
    L2 = L1 + 2 * cfg["pc"] - cfg["Kc"] + 1
    L3 = L2 + 2 * cfg["pc"] - cfg["Kc"] + 1
    P1 = (L3 + 2 * cfg["pp1"] - cfg["pk1"]) // cfg["pk1"] + 1
    return Lout0, P0, L1, L2, L3, P1


def _lrelu(y):
    # LeakyReLU(negative_slope=0.01) == max(y, 0.01*y) for slope in (0, 1)
    return jnp.maximum(y, 0.01 * y)


# ---------------------------------------------------------------------------
# Fused per-branch Pallas kernel (one grid step == one batch element)
# ---------------------------------------------------------------------------

def _make_branch_kernel(cfg, lengths):
    Lout0, P0, L1, L2, L3, P1 = lengths
    Kc, pc = cfg["Kc"], cfg["pc"]
    pk0, pp0 = cfg["pk0"], cfg["pp0"]
    pk1, pp1 = cfg["pk1"], cfg["pp1"]

    def conv_stride1(x_ref, w_ref, b_ref, lout):
        # stride-1 conv as Kc shifted matmuls over a zero-padded VMEM scratch
        acc = jnp.dot(x_ref[pl.ds(0, lout), :], w_ref[0],
                      preferred_element_type=jnp.float32)
        for kk in range(1, Kc):
            acc = acc + jnp.dot(x_ref[pl.ds(kk, lout), :], w_ref[kk],
                                preferred_element_type=jnp.float32)
        return _lrelu(acc + b_ref[...])

    def kernel(p0_ref, w0_ref, b0_ref, w1_ref, b1_ref, w2_ref, b2_ref,
               w3_ref, b3_ref, o_ref, x1_ref, x2_ref, x3_ref):
        # zero the padded conv-input scratches (pad rows act as conv padding)
        x1_ref[...] = jnp.zeros_like(x1_ref)
        x2_ref[...] = jnp.zeros_like(x2_ref)
        x3_ref[...] = jnp.zeros_like(x3_ref)

        # conv0 (BN scale folded into weights) + shift + LeakyReLU
        h0 = _lrelu(jnp.dot(p0_ref[...], w0_ref[...],
                            preferred_element_type=jnp.float32) + b0_ref[...])

        # maxpool0 (k == s, disjoint windows; clipped windows == -inf padding)
        for w in range(P0):
            lo = max(0, w * pk0 - pp0)
            hi = min(Lout0, w * pk0 - pp0 + pk0)
            x1_ref[pl.ds(pc + w, 1), :] = jnp.max(h0[lo:hi, :], axis=0,
                                                  keepdims=True)

        # conv1..3 (+ Dropout == identity in eval mode) on VMEM-resident data
        h1 = conv_stride1(x1_ref, w1_ref, b1_ref, L1)
        x2_ref[pl.ds(pc, L1), :] = h1
        h2 = conv_stride1(x2_ref, w2_ref, b2_ref, L2)
        x3_ref[pl.ds(pc, L2), :] = h2
        h3 = conv_stride1(x3_ref, w3_ref, b3_ref, L3)

        # maxpool1 -> output rows (lane-dense 128-wide stores)
        for w in range(P1):
            lo = max(0, w * pk1 - pp1)
            hi = min(L3, w * pk1 - pp1 + pk1)
            o_ref[pl.ds(w, 1), :] = jnp.max(h3[lo:hi, :], axis=0,
                                            keepdims=True)

    return kernel


def _run_branch(x_blc, bp, cfg):
    """x_blc: (B, L, 2) channels-last.  Returns (B, P1, 128)."""
    B, L, cin = x_blc.shape
    K0, s0, p0 = cfg["K0"], cfg["s0"], cfg["p0"]
    lengths = _derive_lengths(L, cfg)
    Lout0, P0, L1, L2, L3, P1 = lengths
    CK0 = K0 * cin
    Kc, pc = cfg["Kc"], cfg["pc"]

    # conv0 im2col in natural (K-major, Cin-minor) gather order; bf16 operands.
    x_pad = jnp.pad(x_blc, ((0, 0), (p0, p0), (0, 0)))
    idx = jnp.arange(Lout0)[:, None] * s0 + jnp.arange(K0)[None, :]
    patches = x_pad[:, idx, :].reshape(B, Lout0, CK0).astype(jnp.bfloat16)

    kernel = _make_branch_kernel(cfg, lengths)

    grid_spec = pltpu.PrefetchScalarGridSpec(
        num_scalar_prefetch=0,
        grid=(B,),
        in_specs=[
            pl.BlockSpec((None, Lout0, CK0), lambda b: (b, 0, 0)),   # patches
            pl.BlockSpec((CK0, C_PAD), lambda b: (0, 0)),            # w0
            pl.BlockSpec((1, C_PAD), lambda b: (0, 0)),              # shift0
            pl.BlockSpec((Kc, C_PAD, C_PAD), lambda b: (0, 0, 0)),   # w1
            pl.BlockSpec((1, C_PAD), lambda b: (0, 0)),              # shift1
            pl.BlockSpec((Kc, C_PAD, C_PAD), lambda b: (0, 0, 0)),   # w2
            pl.BlockSpec((1, C_PAD), lambda b: (0, 0)),              # shift2
            pl.BlockSpec((Kc, C_PAD, C_PAD), lambda b: (0, 0, 0)),   # w3
            pl.BlockSpec((1, C_PAD), lambda b: (0, 0)),              # shift3
        ],
        out_specs=pl.BlockSpec((None, P1, C_PAD), lambda b: (b, 0, 0)),
        scratch_shapes=[
            pltpu.VMEM((P0 + 2 * pc, C_PAD), jnp.float32),   # conv1 padded input
            pltpu.VMEM((L1 + 2 * pc, C_PAD), jnp.float32),   # conv2 padded input
            pltpu.VMEM((L2 + 2 * pc, C_PAD), jnp.float32),   # conv3 padded input
        ],
    )
    out = pl.pallas_call(
        kernel,
        out_shape=jax.ShapeDtypeStruct((B, P1, C_PAD), jnp.float32),
        grid_spec=grid_spec,
        compiler_params=pltpu.CompilerParams(
            dimension_semantics=("parallel",)),     # batch splits across cores (v7x)
    )(patches, bp["w0"], bp["b0"], bp["w1"], bp["b1"],
      bp["w2"], bp["b2"], bp["w3"], bp["b3"])
    return out


# ---------------------------------------------------------------------------
# Parameter construction (deterministic, synthetic) + BN folding / padding
# ---------------------------------------------------------------------------

def _bn_affine(gamma, beta, rmean, rvar):
    scale = gamma / jnp.sqrt(rvar + BN_EPS)
    shift = beta - rmean * scale
    return scale, shift


def _raw_conv_bn(key, cin, cout, k):
    k1, k2, k3, k4, k5 = jax.random.split(key, 5)
    w = jax.random.normal(k1, (cout, cin, k), jnp.float32) / math.sqrt(cin * k)
    gamma = 1.0 + 0.1 * jax.random.normal(k2, (cout,), jnp.float32)
    beta = 0.1 * jax.random.normal(k3, (cout,), jnp.float32)
    rmean = 0.1 * jax.random.normal(k4, (cout,), jnp.float32)
    rvar = jax.random.uniform(k5, (cout,), jnp.float32, 0.5, 1.5)
    return w, gamma, beta, rmean, rvar


def _fuse_conv0(w, gamma, beta, rmean, rvar):
    """(Cout, Cin, K0) -> (K0*Cin, 128) bf16 with BN scale folded and Cout
    zero-padded to 128; shift -> (1, 128) f32 (zero in the padded lanes)."""
    cout, cin, k0 = w.shape
    scale, shift = _bn_affine(gamma, beta, rmean, rvar)
    wf = (w * scale[:, None, None]).transpose(0, 2, 1).reshape(cout, k0 * cin).T
    wf = jnp.pad(wf, ((0, 0), (0, C_PAD - cout)))
    shift = jnp.pad(shift, (0, C_PAD - cout)).reshape(1, C_PAD)
    return wf.astype(jnp.bfloat16), shift.astype(jnp.float32)


def _fuse_convk(w, gamma, beta, rmean, rvar):
    """(Cout, Cin, K) -> (K, 128, 128) f32 per-tap matrices (BN scale folded),
    Cin zero-padded to 128 if needed; shift -> (1, 128) f32."""
    cout, cin, k = w.shape
    scale, shift = _bn_affine(gamma, beta, rmean, rvar)
    wf = (w * scale[:, None, None]).transpose(2, 1, 0)          # (K, Cin, Cout)
    wf = jnp.pad(wf, ((0, 0), (0, C_PAD - cin), (0, C_PAD - cout)))
    shift = jnp.pad(shift, (0, C_PAD - cout)).reshape(1, C_PAD)
    return wf.astype(jnp.float32), shift.astype(jnp.float32)


def init_params(key):
    """Kernel-ready fused parameters (BN folded, channels padded to 128)."""
    keys = jax.random.split(key, 8)

    def branch(ks, k0, kc):
        w0, *bn0 = _raw_conv_bn(ks[0], 2, 64, k0)
        w1, *bn1 = _raw_conv_bn(ks[1], 64, 128, kc)
        w2, *bn2 = _raw_conv_bn(ks[2], 128, 128, kc)
        w3, *bn3 = _raw_conv_bn(ks[3], 128, 128, kc)
        p = {}
        p["w0"], p["b0"] = _fuse_conv0(w0, *bn0)
        p["w1"], p["b1"] = _fuse_convk(w1, *bn1)
        p["w2"], p["b2"] = _fuse_convk(w2, *bn2)
        p["w3"], p["b3"] = _fuse_convk(w3, *bn3)
        return p

    return {"f1": branch(keys[:4], BRANCH1["K0"], BRANCH1["Kc"]),
            "f2": branch(keys[4:], BRANCH2["K0"], BRANCH2["Kc"])}


# ---------------------------------------------------------------------------
# Forward pass (matches Temporal_feature_EEG.forward, eval mode)
# ---------------------------------------------------------------------------

def temporal_feature_eeg(y, params):
    """y: (B, 2, L) or (2, L) in PyTorch NCW layout.  Returns (B, F1+F2)."""
    if y.ndim == 2:
        y = y[None]
    B = y.shape[0]
    x = jnp.transpose(y, (0, 2, 1)).astype(jnp.float32)   # (B, L, 2) channels-last

    h1 = _run_branch(x, params["f1"], BRANCH1)             # (B, 5, 128)
    h2 = _run_branch(x, params["f2"], BRANCH2)             # (B, 7, 128)

    # Flatten exactly like PyTorch: (B, C, L) -> (B, C*L)
    y1 = jnp.transpose(h1, (0, 2, 1)).reshape(B, -1)
    y2 = jnp.transpose(h2, (0, 2, 1)).reshape(B, -1)
    return jnp.concatenate([y1, y2], axis=1)


# ---------------------------------------------------------------------------
if __name__ == "__main__":
    key = jax.random.PRNGKey(0)
    k_in, k_par = jax.random.split(key)

    B, C, L = 2, 2, 1024           # L >= 464 needed by the k=512 conv of branch 2
    y = jax.random.normal(k_in, (B, C, L), jnp.float32)
    params = init_params(k_par)

    fwd = jax.jit(temporal_feature_eeg)
    out = jax.block_until_ready(fwd(y, params))

    # branch1: L=1024 -> 127 -> pool 16 -> 17 -> 18 -> 19 -> pool 5 -> 128*5 = 640
    # branch2: L=1024 ->   9 -> pool  3 ->  6 ->  9 -> 12 -> pool 7 -> 128*7 = 896
    expected_feat = 128 * 5 + 128 * 7
    assert out.shape == (B, expected_feat), out.shape
    assert bool(jnp.all(jnp.isfinite(out)))
    print("KERNEL_OK")
</pallas_src>

<mosaic_0001>
module attributes {stable_mosaic.version = 11 : i64} {
  func.func @kernel(%arg0: i32, %arg1: memref<1x9x1024xbf16, #tpu.memory_space<vmem>>, %arg2: memref<1024x128xbf16, #tpu.memory_space<vmem>>, %arg3: memref<1x128xf32, #tpu.memory_space<vmem>>, %arg4: memref<6x128x128xf32, #tpu.memory_space<vmem>>, %arg5: memref<1x128xf32, #tpu.memory_space<vmem>>, %arg6: memref<6x128x128xf32, #tpu.memory_space<vmem>>, %arg7: memref<1x128xf32, #tpu.memory_space<vmem>>, %arg8: memref<6x128x128xf32, #tpu.memory_space<vmem>>, %arg9: memref<1x128xf32, #tpu.memory_space<vmem>>, %arg10: memref<1x7x128xf32, #tpu.memory_space<vmem>>, %arg11: memref<11x128xf32, #tpu.memory_space<vmem>>, %arg12: memref<14x128xf32, #tpu.memory_space<vmem>>, %arg13: memref<17x128xf32, #tpu.memory_space<vmem>>) attributes {dimension_semantics = [#tpu.dimension_semantics<parallel>], iteration_bounds = array<i64: 2>, scalar_prefetch = 0 : i64, scratch_operands = 3 : i64, tpu.core_type = #tpu.core_type<tc>, window_params = [{transform_indices = @transform_0, window_bounds = array<i64: 1, 9, 1024>}, {pipeline_mode = #tpu.pipeline_mode<synchronous>, transform_indices = @transform_1, window_bounds = array<i64: 1024, 128>}, {pipeline_mode = #tpu.pipeline_mode<synchronous>, transform_indices = @transform_2, window_bounds = array<i64: 1, 128>}, {pipeline_mode = #tpu.pipeline_mode<synchronous>, transform_indices = @transform_3, window_bounds = array<i64: 6, 128, 128>}, {pipeline_mode = #tpu.pipeline_mode<synchronous>, transform_indices = @transform_4, window_bounds = array<i64: 1, 128>}, {pipeline_mode = #tpu.pipeline_mode<synchronous>, transform_indices = @transform_5, window_bounds = array<i64: 6, 128, 128>}, {pipeline_mode = #tpu.pipeline_mode<synchronous>, transform_indices = @transform_6, window_bounds = array<i64: 1, 128>}, {pipeline_mode = #tpu.pipeline_mode<synchronous>, transform_indices = @transform_7, window_bounds = array<i64: 6, 128, 128>}, {pipeline_mode = #tpu.pipeline_mode<synchronous>, transform_indices = @transform_8, window_bounds = array<i64: 1, 128>}, {transform_indices = @transform_9, window_bounds = array<i64: 1, 7, 128>}]} {
    %cst = arith.constant 0.000000e+00 : f32
    %0 = vector.broadcast %cst : f32 to vector<11x128xf32>
    %c0 = arith.constant 0 : index
    %c0_0 = arith.constant 0 : index
    %1 = vector.load %arg11[%c0, %c0_0] : memref<11x128xf32, #tpu.memory_space<vmem>>, vector<11x128xf32>
    tpu.vector_store %arg11[%c0, %c0_0], %0 {strides = array<i32>} : memref<11x128xf32, #tpu.memory_space<vmem>>, vector<11x128xf32>,
    %cst_1 = arith.constant 0.000000e+00 : f32
    %2 = vector.broadcast %cst_1 : f32 to vector<14x128xf32>
    %c0_2 = arith.constant 0 : index
    %c0_3 = arith.constant 0 : index
    %3 = vector.load %arg12[%c0_2, %c0_3] : memref<14x128xf32, #tpu.memory_space<vmem>>, vector<14x128xf32>
    tpu.vector_store %arg12[%c0_2, %c0_3], %2 {strides = array<i32>} : memref<14x128xf32, #tpu.memory_space<vmem>>, vector<14x128xf32>,
    %cst_4 = arith.constant 0.000000e+00 : f32
    %4 = vector.broadcast %cst_4 : f32 to vector<17x128xf32>
    %c0_5 = arith.constant 0 : index
    %c0_6 = arith.constant 0 : index
    %5 = vector.load %arg13[%c0_5, %c0_6] : memref<17x128xf32, #tpu.memory_space<vmem>>, vector<17x128xf32>
    tpu.vector_store %arg13[%c0_5, %c0_6], %4 {strides = array<i32>} : memref<17x128xf32, #tpu.memory_space<vmem>>, vector<17x128xf32>,
    %c0_7 = arith.constant 0 : index
    %c0_8 = arith.constant 0 : index
    %c0_9 = arith.constant 0 : index
    %6 = vector.load %arg1[%c0_7, %c0_8, %c0_9] : memref<1x9x1024xbf16, #tpu.memory_space<vmem>>, vector<1x9x1024xbf16>
    %7 = vector.shape_cast %6 : vector<1x9x1024xbf16> to vector<9x1024xbf16>
    %c0_10 = arith.constant 0 : index
    %c0_11 = arith.constant 0 : index
    %8 = vector.load %arg2[%c0_10, %c0_11] : memref<1024x128xbf16, #tpu.memory_space<vmem>>, vector<1024x128xbf16>
    %cst_12 = arith.constant dense<0.000000e+00> : vector<9x128xf32>
    %9 = tpu.matmul %7, %8, %cst_12 {dimension_numbers = #tpu.dot_dimension_numbers<[1], [0], [0], [1], [0, 0, 1, 1], [], []>} : vector<9x1024xbf16>, vector<1024x128xbf16>, vector<9x128xf32> -> vector<9x128xf32>
    %c0_13 = arith.constant 0 : index
    %c0_14 = arith.constant 0 : index
    %10 = vector.load %arg3[%c0_13, %c0_14] : memref<1x128xf32, #tpu.memory_space<vmem>>, vector<1x128xf32>
    %11 = vector.broadcast %10 : vector<1x128xf32> to vector<9x128xf32>
    %12 = arith.addf %9, %11 : vector<9x128xf32>
    %cst_15 = arith.constant 0.00999999977 : f32
    %13 = vector.broadcast %cst_15 : f32 to vector<9x128xf32>
    %14 = arith.mulf %13, %12 : vector<9x128xf32>
    %15 = arith.maximumf %12, %14 : vector<9x128xf32>
    %16 = vector.extract_strided_slice %15 {offsets = [0, 0], sizes = [2, 128], strides = [1, 1]} : vector<9x128xf32> to vector<2x128xf32>
    %cst_16 = arith.constant dense<0xFF800000> : vector<128xf32>
    %17 = vector.multi_reduction <maximumf>, %16, %cst_16 [0] : vector<2x128xf32> to vector<128xf32>
    %18 = vector.shape_cast %17 : vector<128xf32> to vector<1x128xf32>
    %c4 = arith.constant 4 : index
    %c0_17 = arith.constant 0 : index
    %19 = vector.load %arg11[%c4, %c0_17] : memref<11x128xf32, #tpu.memory_space<vmem>>, vector<1x128xf32>
    tpu.vector_store %arg11[%c4, %c0_17], %18 {strides = array<i32>} : memref<11x128xf32, #tpu.memory_space<vmem>>, vector<1x128xf32>,
    %20 = vector.extract_strided_slice %15 {offsets = [2, 0], sizes = [4, 128], strides = [1, 1]} : vector<9x128xf32> to vector<4x128xf32>
    %cst_18 = arith.constant dense<0xFF800000> : vector<128xf32>
    %21 = vector.multi_reduction <maximumf>, %20, %cst_18 [0] : vector<4x128xf32> to vector<128xf32>
    %22 = vector.shape_cast %21 : vector<128xf32> to vector<1x128xf32>
    %c5 = arith.constant 5 : index
    %c0_19 = arith.constant 0 : index
    %23 = vector.load %arg11[%c5, %c0_19] : memref<11x128xf32, #tpu.memory_space<vmem>>, vector<1x128xf32>
    tpu.vector_store %arg11[%c5, %c0_19], %22 {strides = array<i32>} : memref<11x128xf32, #tpu.memory_space<vmem>>, vector<1x128xf32>,
    %24 = vector.extract_strided_slice %15 {offsets = [6, 0], sizes = [3, 128], strides = [1, 1]} : vector<9x128xf32> to vector<3x128xf32>
    %cst_20 = arith.constant dense<0xFF800000> : vector<128xf32>
    %25 = vector.multi_reduction <maximumf>, %24, %cst_20 [0] : vector<3x128xf32> to vector<128xf32>
    %26 = vector.shape_cast %25 : vector<128xf32> to vector<1x128xf32>
    %c6 = arith.constant 6 : index
    %c0_21 = arith.constant 0 : index
    %27 = vector.load %arg11[%c6, %c0_21] : memref<11x128xf32, #tpu.memory_space<vmem>>, vector<1x128xf32>
    tpu.vector_store %arg11[%c6, %c0_21], %26 {strides = array<i32>} : memref<11x128xf32, #tpu.memory_space<vmem>>, vector<1x128xf32>,
    %c0_22 = arith.constant 0 : index
    %c0_23 = arith.constant 0 : index
    %28 = vector.load %arg11[%c0_22, %c0_23] : memref<11x128xf32, #tpu.memory_space<vmem>>, vector<6x128xf32>
    %c0_24 = arith.constant 0 : index
    %c0_25 = arith.constant 0 : index
    %c0_26 = arith.constant 0 : index
    %29 = vector.load %arg4[%c0_24, %c0_25, %c0_26] : memref<6x128x128xf32, #tpu.memory_space<vmem>>, vector<1x128x128xf32>
    %30 = vector.shape_cast %29 : vector<1x128x128xf32> to vector<128x128xf32>
    %cst_27 = arith.constant dense<0.000000e+00> : vector<6x128xf32>
    %31 = tpu.matmul %28, %30, %cst_27 {dimension_numbers = #tpu.dot_dimension_numbers<[1], [0], [0], [1], [0, 0, 1, 1], [], []>} : vector<6x128xf32>, vector<128x128xf32>, vector<6x128xf32> -> vector<6x128xf32>
    %c1 = arith.constant 1 : index
    %c0_28 = arith.constant 0 : index
    %32 = vector.load %arg11[%c1, %c0_28] : memref<11x128xf32, #tpu.memory_space<vmem>>, vector<6x128xf32>
    %c1_29 = arith.constant 1 : index
    %c0_30 = arith.constant 0 : index
    %c0_31 = arith.constant 0 : index
    %33 = vector.load %arg4[%c1_29, %c0_30, %c0_31] : memref<6x128x128xf32, #tpu.memory_space<vmem>>, vector<1x128x128xf32>
    %34 = vector.shape_cast %33 : vector<1x128x128xf32> to vector<128x128xf32>
    %cst_32 = arith.constant dense<0.000000e+00> : vector<6x128xf32>
    %35 = tpu.matmul %32, %34, %cst_32 {dimension_numbers = #tpu.dot_dimension_numbers<[1], [0], [0], [1], [0, 0, 1, 1], [], []>} : vector<6x128xf32>, vector<128x128xf32>, vector<6x128xf32> -> vector<6x128xf32>
    %36 = arith.addf %31, %35 : vector<6x128xf32>
    %c2 = arith.constant 2 : index
    %c0_33 = arith.constant 0 : index
    %37 = vector.load %arg11[%c2, %c0_33] : memref<11x128xf32, #tpu.memory_space<vmem>>, vector<6x128xf32>
    %c2_34 = arith.constant 2 : index
    %c0_35 = arith.constant 0 : index
    %c0_36 = arith.constant 0 : index
    %38 = vector.load %arg4[%c2_34, %c0_35, %c0_36] : memref<6x128x128xf32, #tpu.memory_space<vmem>>, vector<1x128x128xf32>
    %39 = vector.shape_cast %38 : vector<1x128x128xf32> to vector<128x128xf32>
    %cst_37 = arith.constant dense<0.000000e+00> : vector<6x128xf32>
    %40 = tpu.matmul %37, %39, %cst_37 {dimension_numbers = #tpu.dot_dimension_numbers<[1], [0], [0], [1], [0, 0, 1, 1], [], []>} : vector<6x128xf32>, vector<128x128xf32>, vector<6x128xf32> -> vector<6x128xf32>
    %41 = arith.addf %36, %40 : vector<6x128xf32>
    %c3 = arith.constant 3 : index
    %c0_38 = arith.constant 0 : index
    %42 = vector.load %arg11[%c3, %c0_38] : memref<11x128xf32, #tpu.memory_space<vmem>>, vector<6x128xf32>
    %c3_39 = arith.constant 3 : index
    %c0_40 = arith.constant 0 : index
    %c0_41 = arith.constant 0 : index
    %43 = vector.load %arg4[%c3_39, %c0_40, %c0_41] : memref<6x128x128xf32, #tpu.memory_space<vmem>>, vector<1x128x128xf32>
    %44 = vector.shape_cast %43 : vector<1x128x128xf32> to vector<128x128xf32>
    %cst_42 = arith.constant dense<0.000000e+00> : vector<6x128xf32>
    %45 = tpu.matmul %42, %44, %cst_42 {dimension_numbers = #tpu.dot_dimension_numbers<[1], [0], [0], [1], [0, 0, 1, 1], [], []>} : vector<6x128xf32>, vector<128x128xf32>, vector<6x128xf32> -> vector<6x128xf32>
    %46 = arith.addf %41, %45 : vector<6x128xf32>
    %c4_43 = arith.constant 4 : index
    %c0_44 = arith.constant 0 : index
    %47 = vector.load %arg11[%c4_43, %c0_44] : memref<11x128xf32, #tpu.memory_space<vmem>>, vector<6x128xf32>
    %c4_45 = arith.constant 4 : index
    %c0_46 = arith.constant 0 : index
    %c0_47 = arith.constant 0 : index
    %48 = vector.load %arg4[%c4_45, %c0_46, %c0_47] : memref<6x128x128xf32, #tpu.memory_space<vmem>>, vector<1x128x128xf32>
    %49 = vector.shape_cast %48 : vector<1x128x128xf32> to vector<128x128xf32>
    %cst_48 = arith.constant dense<0.000000e+00> : vector<6x128xf32>
    %50 = tpu.matmul %47, %49, %cst_48 {dimension_numbers = #tpu.dot_dimension_numbers<[1], [0], [0], [1], [0, 0, 1, 1], [], []>} : vector<6x128xf32>, vector<128x128xf32>, vector<6x128xf32> -> vector<6x128xf32>
    %51 = arith.addf %46, %50 : vector<6x128xf32>
    %c5_49 = arith.constant 5 : index
    %c0_50 = arith.constant 0 : index
    %52 = vector.load %arg11[%c5_49, %c0_50] : memref<11x128xf32, #tpu.memory_space<vmem>>, vector<6x128xf32>
    %c5_51 = arith.constant 5 : index
    %c0_52 = arith.constant 0 : index
    %c0_53 = arith.constant 0 : index
    %53 = vector.load %arg4[%c5_51, %c0_52, %c0_53] : memref<6x128x128xf32, #tpu.memory_space<vmem>>, vector<1x128x128xf32>
    %54 = vector.shape_cast %53 : vector<1x128x128xf32> to vector<128x128xf32>
    %cst_54 = arith.constant dense<0.000000e+00> : vector<6x128xf32>
    %55 = tpu.matmul %52, %54, %cst_54 {dimension_numbers = #tpu.dot_dimension_numbers<[1], [0], [0], [1], [0, 0, 1, 1], [], []>} : vector<6x128xf32>, vector<128x128xf32>, vector<6x128xf32> -> vector<6x128xf32>
    %56 = arith.addf %51, %55 : vector<6x128xf32>
    %c0_55 = arith.constant 0 : index
    %c0_56 = arith.constant 0 : index
    %57 = vector.load %arg5[%c0_55, %c0_56] : memref<1x128xf32, #tpu.memory_space<vmem>>, vector<1x128xf32>
    %58 = vector.broadcast %57 : vector<1x128xf32> to vector<6x128xf32>
    %59 = arith.addf %56, %58 : vector<6x128xf32>
    %cst_57 = arith.constant 0.00999999977 : f32
    %60 = vector.broadcast %cst_57 : f32 to vector<6x128xf32>
    %61 = arith.mulf %60, %59 : vector<6x128xf32>
    %62 = arith.maximumf %59, %61 : vector<6x128xf32>
    %c4_58 = arith.constant 4 : index
    %c0_59 = arith.constant 0 : index
    %63 = vector.load %arg12[%c4_58, %c0_59] : memref<14x128xf32, #tpu.memory_space<vmem>>, vector<6x128xf32>
    tpu.vector_store %arg12[%c4_58, %c0_59], %62 {strides = array<i32>} : memref<14x128xf32, #tpu.memory_space<vmem>>, vector<6x128xf32>,
    %c0_60 = arith.constant 0 : index
    %c0_61 = arith.constant 0 : index
    %64 = vector.load %arg12[%c0_60, %c0_61] : memref<14x128xf32, #tpu.memory_space<vmem>>, vector<9x128xf32>
    %c0_62 = arith.constant 0 : index
    %c0_63 = arith.constant 0 : index
    %c0_64 = arith.constant 0 : index
    %65 = vector.load %arg6[%c0_62, %c0_63, %c0_64] : memref<6x128x128xf32, #tpu.memory_space<vmem>>, vector<1x128x128xf32>
    %66 = vector.shape_cast %65 : vector<1x128x128xf32> to vector<128x128xf32>
    %cst_65 = arith.constant dense<0.000000e+00> : vector<9x128xf32>
    %67 = tpu.matmul %64, %66, %cst_65 {dimension_numbers = #tpu.dot_dimension_numbers<[1], [0], [0], [1], [0, 0, 1, 1], [], []>} : vector<9x128xf32>, vector<128x128xf32>, vector<9x128xf32> -> vector<9x128xf32>
    %c1_66 = arith.constant 1 : index
    %c0_67 = arith.constant 0 : index
    %68 = vector.load %arg12[%c1_66, %c0_67] : memref<14x128xf32, #tpu.memory_space<vmem>>, vector<9x128xf32>
    %c1_68 = arith.constant 1 : index
    %c0_69 = arith.constant 0 : index
    %c0_70 = arith.constant 0 : index
    %69 = vector.load %arg6[%c1_68, %c0_69, %c0_70] : memref<6x128x128xf32, #tpu.memory_space<vmem>>, vector<1x128x128xf32>
    %70 = vector.shape_cast %69 : vector<1x128x128xf32> to vector<128x128xf32>
    %cst_71 = arith.constant dense<0.000000e+00> : vector<9x128xf32>
    %71 = tpu.matmul %68, %70, %cst_71 {dimension_numbers = #tpu.dot_dimension_numbers<[1], [0], [0], [1], [0, 0, 1, 1], [], []>} : vector<9x128xf32>, vector<128x128xf32>, vector<9x128xf32> -> vector<9x128xf32>
    %72 = arith.addf %67, %71 : vector<9x128xf32>
    %c2_72 = arith.constant 2 : index
    %c0_73 = arith.constant 0 : index
    %73 = vector.load %arg12[%c2_72, %c0_73] : memref<14x128xf32, #tpu.memory_space<vmem>>, vector<9x128xf32>
    %c2_74 = arith.constant 2 : index
    %c0_75 = arith.constant 0 : index
    %c0_76 = arith.constant 0 : index
    %74 = vector.load %arg6[%c2_74, %c0_75, %c0_76] : memref<6x128x128xf32, #tpu.memory_space<vmem>>, vector<1x128x128xf32>
    %75 = vector.shape_cast %74 : vector<1x128x128xf32> to vector<128x128xf32>
    %cst_77 = arith.constant dense<0.000000e+00> : vector<9x128xf32>
    %76 = tpu.matmul %73, %75, %cst_77 {dimension_numbers = #tpu.dot_dimension_numbers<[1], [0], [0], [1], [0, 0, 1, 1], [], []>} : vector<9x128xf32>, vector<128x128xf32>, vector<9x128xf32> -> vector<9x128xf32>
    %77 = arith.addf %72, %76 : vector<9x128xf32>
    %c3_78 = arith.constant 3 : index
    %c0_79 = arith.constant 0 : index
    %78 = vector.load %arg12[%c3_78, %c0_79] : memref<14x128xf32, #tpu.memory_space<vmem>>, vector<9x128xf32>
    %c3_80 = arith.constant 3 : index
    %c0_81 = arith.constant 0 : index
    %c0_82 = arith.constant 0 : index
    %79 = vector.load %arg6[%c3_80, %c0_81, %c0_82] : memref<6x128x128xf32, #tpu.memory_space<vmem>>, vector<1x128x128xf32>
    %80 = vector.shape_cast %79 : vector<1x128x128xf32> to vector<128x128xf32>
    %cst_83 = arith.constant dense<0.000000e+00> : vector<9x128xf32>
    %81 = tpu.matmul %78, %80, %cst_83 {dimension_numbers = #tpu.dot_dimension_numbers<[1], [0], [0], [1], [0, 0, 1, 1], [], []>} : vector<9x128xf32>, vector<128x128xf32>, vector<9x128xf32> -> vector<9x128xf32>
    %82 = arith.addf %77, %81 : vector<9x128xf32>
    %c4_84 = arith.constant 4 : index
    %c0_85 = arith.constant 0 : index
    %83 = vector.load %arg12[%c4_84, %c0_85] : memref<14x128xf32, #tpu.memory_space<vmem>>, vector<9x128xf32>
    %c4_86 = arith.constant 4 : index
    %c0_87 = arith.constant 0 : index
    %c0_88 = arith.constant 0 : index
    %84 = vector.load %arg6[%c4_86, %c0_87, %c0_88] : memref<6x128x128xf32, #tpu.memory_space<vmem>>, vector<1x128x128xf32>
    %85 = vector.shape_cast %84 : vector<1x128x128xf32> to vector<128x128xf32>
    %cst_89 = arith.constant dense<0.000000e+00> : vector<9x128xf32>
    %86 = tpu.matmul %83, %85, %cst_89 {dimension_numbers = #tpu.dot_dimension_numbers<[1], [0], [0], [1], [0, 0, 1, 1], [], []>} : vector<9x128xf32>, vector<128x128xf32>, vector<9x128xf32> -> vector<9x128xf32>
    %87 = arith.addf %82, %86 : vector<9x128xf32>
    %c5_90 = arith.constant 5 : index
    %c0_91 = arith.constant 0 : index
    %88 = vector.load %arg12[%c5_90, %c0_91] : memref<14x128xf32, #tpu.memory_space<vmem>>, vector<9x128xf32>
    %c5_92 = arith.constant 5 : index
    %c0_93 = arith.constant 0 : index
    %c0_94 = arith.constant 0 : index
    %89 = vector.load %arg6[%c5_92, %c0_93, %c0_94] : memref<6x128x128xf32, #tpu.memory_space<vmem>>, vector<1x128x128xf32>
    %90 = vector.shape_cast %89 : vector<1x128x128xf32> to vector<128x128xf32>
    %cst_95 = arith.constant dense<0.000000e+00> : vector<9x128xf32>
    %91 = tpu.matmul %88, %90, %cst_95 {dimension_numbers = #tpu.dot_dimension_numbers<[1], [0], [0], [1], [0, 0, 1, 1], [], []>} : vector<9x128xf32>, vector<128x128xf32>, vector<9x128xf32> -> vector<9x128xf32>
    %92 = arith.addf %87, %91 : vector<9x128xf32>
    %c0_96 = arith.constant 0 : index
    %c0_97 = arith.constant 0 : index
    %93 = vector.load %arg7[%c0_96, %c0_97] : memref<1x128xf32, #tpu.memory_space<vmem>>, vector<1x128xf32>
    %94 = vector.broadcast %93 : vector<1x128xf32> to vector<9x128xf32>
    %95 = arith.addf %92, %94 : vector<9x128xf32>
    %cst_98 = arith.constant 0.00999999977 : f32
    %96 = vector.broadcast %cst_98 : f32 to vector<9x128xf32>
    %97 = arith.mulf %96, %95 : vector<9x128xf32>
    %98 = arith.maximumf %95, %97 : vector<9x128xf32>
    %c4_99 = arith.constant 4 : index
    %c0_100 = arith.constant 0 : index
    %99 = vector.load %arg13[%c4_99, %c0_100] : memref<17x128xf32, #tpu.memory_space<vmem>>, vector<9x128xf32>
    tpu.vector_store %arg13[%c4_99, %c0_100], %98 {strides = array<i32>} : memref<17x128xf32, #tpu.memory_space<vmem>>, vector<9x128xf32>,
    %c0_101 = arith.constant 0 : index
    %c0_102 = arith.constant 0 : index
    %100 = vector.load %arg13[%c0_101, %c0_102] : memref<17x128xf32, #tpu.memory_space<vmem>>, vector<12x128xf32>
    %c0_103 = arith.constant 0 : index
    %c0_104 = arith.constant 0 : index
    %c0_105 = arith.constant 0 : index
    %101 = vector.load %arg8[%c0_103, %c0_104, %c0_105] : memref<6x128x128xf32, #tpu.memory_space<vmem>>, vector<1x128x128xf32>
    %102 = vector.shape_cast %101 : vector<1x128x128xf32> to vector<128x128xf32>
    %cst_106 = arith.constant dense<0.000000e+00> : vector<12x128xf32>
    %103 = tpu.matmul %100, %102, %cst_106 {dimension_numbers = #tpu.dot_dimension_numbers<[1], [0], [0], [1], [0, 0, 1, 1], [], []>} : vector<12x128xf32>, vector<128x128xf32>, vector<12x128xf32> -> vector<12x128xf32>
    %c1_107 = arith.constant 1 : index
    %c0_108 = arith.constant 0 : index
    %104 = vector.load %arg13[%c1_107, %c0_108] : memref<17x128xf32, #tpu.memory_space<vmem>>, vector<12x128xf32>
    %c1_109 = arith.constant 1 : index
    %c0_110 = arith.constant 0 : index
    %c0_111 = arith.constant 0 : index
    %105 = vector.load %arg8[%c1_109, %c0_110, %c0_111] : memref<6x128x128xf32, #tpu.memory_space<vmem>>, vector<1x128x128xf32>
    %106 = vector.shape_cast %105 : vector<1x128x128xf32> to vector<128x128xf32>
    %cst_112 = arith.constant dense<0.000000e+00> : vector<12x128xf32>
    %107 = tpu.matmul %104, %106, %cst_112 {dimension_numbers = #tpu.dot_dimension_numbers<[1], [0], [0], [1], [0, 0, 1, 1], [], []>} : vector<12x128xf32>, vector<128x128xf32>, vector<12x128xf32> -> vector<12x128xf32>
    %108 = arith.addf %103, %107 : vector<12x128xf32>
    %c2_113 = arith.constant 2 : index
    %c0_114 = arith.constant 0 : index
    %109 = vector.load %arg13[%c2_113, %c0_114] : memref<17x128xf32, #tpu.memory_space<vmem>>, vector<12x128xf32>
    %c2_115 = arith.constant 2 : index
    %c0_116 = arith.constant 0 : index
    %c0_117 = arith.constant 0 : index
    %110 = vector.load %arg8[%c2_115, %c0_116, %c0_117] : memref<6x128x128xf32, #tpu.memory_space<vmem>>, vector<1x128x128xf32>
    %111 = vector.shape_cast %110 : vector<1x128x128xf32> to vector<128x128xf32>
    %cst_118 = arith.constant dense<0.000000e+00> : vector<12x128xf32>
    %112 = tpu.matmul %109, %111, %cst_118 {dimension_numbers = #tpu.dot_dimension_numbers<[1], [0], [0], [1], [0, 0, 1, 1], [], []>} : vector<12x128xf32>, vector<128x128xf32>, vector<12x128xf32> -> vector<12x128xf32>
    %113 = arith.addf %108, %112 : vector<12x128xf32>
    %c3_119 = arith.constant 3 : index
    %c0_120 = arith.constant 0 : index
    %114 = vector.load %arg13[%c3_119, %c0_120] : memref<17x128xf32, #tpu.memory_space<vmem>>, vector<12x128xf32>
    %c3_121 = arith.constant 3 : index
    %c0_122 = arith.constant 0 : index
    %c0_123 = arith.constant 0 : index
    %115 = vector.load %arg8[%c3_121, %c0_122, %c0_123] : memref<6x128x128xf32, #tpu.memory_space<vmem>>, vector<1x128x128xf32>
    %116 = vector.shape_cast %115 : vector<1x128x128xf32> to vector<128x128xf32>
    %cst_124 = arith.constant dense<0.000000e+00> : vector<12x128xf32>
    %117 = tpu.matmul %114, %116, %cst_124 {dimension_numbers = #tpu.dot_dimension_numbers<[1], [0], [0], [1], [0, 0, 1, 1], [], []>} : vector<12x128xf32>, vector<128x128xf32>, vector<12x128xf32> -> vector<12x128xf32>
    %118 = arith.addf %113, %117 : vector<12x128xf32>
    %c4_125 = arith.constant 4 : index
    %c0_126 = arith.constant 0 : index
    %119 = vector.load %arg13[%c4_125, %c0_126] : memref<17x128xf32, #tpu.memory_space<vmem>>, vector<12x128xf32>
    %c4_127 = arith.constant 4 : index
    %c0_128 = arith.constant 0 : index
    %c0_129 = arith.constant 0 : index
    %120 = vector.load %arg8[%c4_127, %c0_128, %c0_129] : memref<6x128x128xf32, #tpu.memory_space<vmem>>, vector<1x128x128xf32>
    %121 = vector.shape_cast %120 : vector<1x128x128xf32> to vector<128x128xf32>
    %cst_130 = arith.constant dense<0.000000e+00> : vector<12x128xf32>
    %122 = tpu.matmul %119, %121, %cst_130 {dimension_numbers = #tpu.dot_dimension_numbers<[1], [0], [0], [1], [0, 0, 1, 1], [], []>} : vector<12x128xf32>, vector<128x128xf32>, vector<12x128xf32> -> vector<12x128xf32>
    %123 = arith.addf %118, %122 : vector<12x128xf32>
    %c5_131 = arith.constant 5 : index
    %c0_132 = arith.constant 0 : index
    %124 = vector.load %arg13[%c5_131, %c0_132] : memref<17x128xf32, #tpu.memory_space<vmem>>, vector<12x128xf32>
    %c5_133 = arith.constant 5 : index
    %c0_134 = arith.constant 0 : index
    %c0_135 = arith.constant 0 : index
    %125 = vector.load %arg8[%c5_133, %c0_134, %c0_135] : memref<6x128x128xf32, #tpu.memory_space<vmem>>, vector<1x128x128xf32>
    %126 = vector.shape_cast %125 : vector<1x128x128xf32> to vector<128x128xf32>
    %cst_136 = arith.constant dense<0.000000e+00> : vector<12x128xf32>
    %127 = tpu.matmul %124, %126, %cst_136 {dimension_numbers = #tpu.dot_dimension_numbers<[1], [0], [0], [1], [0, 0, 1, 1], [], []>} : vector<12x128xf32>, vector<128x128xf32>, vector<12x128xf32> -> vector<12x128xf32>
    %128 = arith.addf %123, %127 : vector<12x128xf32>
    %c0_137 = arith.constant 0 : index
    %c0_138 = arith.constant 0 : index
    %129 = vector.load %arg9[%c0_137, %c0_138] : memref<1x128xf32, #tpu.memory_space<vmem>>, vector<1x128xf32>
    %130 = vector.broadcast %129 : vector<1x128xf32> to vector<12x128xf32>
    %131 = arith.addf %128, %130 : vector<12x128xf32>
    %cst_139 = arith.constant 0.00999999977 : f32
    %132 = vector.broadcast %cst_139 : f32 to vector<12x128xf32>
    %133 = arith.mulf %132, %131 : vector<12x128xf32>
    %134 = arith.maximumf %131, %133 : vector<12x128xf32>
    %135 = vector.extract_strided_slice %134 {offsets = [0, 0], sizes = [1, 128], strides = [1, 1]} : vector<12x128xf32> to vector<1x128xf32>
    %cst_140 = arith.constant dense<0xFF800000> : vector<128xf32>
    %136 = vector.multi_reduction <maximumf>, %135, %cst_140 [0] : vector<1x128xf32> to vector<128xf32>
    %137 = vector.shape_cast %136 : vector<128xf32> to vector<1x128xf32>
    %c0_141 = arith.constant 0 : index
    %c0_142 = arith.constant 0 : index
    %c0_143 = arith.constant 0 : index
    %138 = vector.load %arg10[%c0_141, %c0_142, %c0_143] : memref<1x7x128xf32, #tpu.memory_space<vmem>>, vector<1x1x128xf32>
    %139 = vector.shape_cast %138 : vector<1x1x128xf32> to vector<1x128xf32>
    %140 = vector.shape_cast %137 : vector<1x128xf32> to vector<1x1x128xf32>
    tpu.vector_store %arg10[%c0_141, %c0_142, %c0_143], %140 {strides = array<i32>} : memref<1x7x128xf32, #tpu.memory_space<vmem>>, vector<1x1x128xf32>,
    %141 = vector.extract_strided_slice %134 {offsets = [1, 0], sizes = [2, 128], strides = [1, 1]} : vector<12x128xf32> to vector<2x128xf32>
    %cst_144 = arith.constant dense<0xFF800000> : vector<128xf32>
    %142 = vector.multi_reduction <maximumf>, %141, %cst_144 [0] : vector<2x128xf32> to vector<128xf32>
    %143 = vector.shape_cast %142 : vector<128xf32> to vector<1x128xf32>
    %c0_145 = arith.constant 0 : index
    %c1_146 = arith.constant 1 : index
    %c0_147 = arith.constant 0 : index
    %144 = vector.load %arg10[%c0_145, %c1_146, %c0_147] : memref<1x7x128xf32, #tpu.memory_space<vmem>>, vector<1x1x128xf32>
    %145 = vector.shape_cast %144 : vector<1x1x128xf32> to vector<1x128xf32>
    %146 = vector.shape_cast %143 : vector<1x128xf32> to vector<1x1x128xf32>
    tpu.vector_store %arg10[%c0_145, %c1_146, %c0_147], %146 {strides = array<i32>} : memref<1x7x128xf32, #tpu.memory_space<vmem>>, vector<1x1x128xf32>,
    %147 = vector.extract_strided_slice %134 {offsets = [3, 0], sizes = [2, 128], strides = [1, 1]} : vector<12x128xf32> to vector<2x128xf32>
    %cst_148 = arith.constant dense<0xFF800000> : vector<128xf32>
    %148 = vector.multi_reduction <maximumf>, %147, %cst_148 [0] : vector<2x128xf32> to vector<128xf32>
    %149 = vector.shape_cast %148 : vector<128xf32> to vector<1x128xf32>
    %c0_149 = arith.constant 0 : index
    %c2_150 = arith.constant 2 : index
    %c0_151 = arith.constant 0 : index
    %150 = vector.load %arg10[%c0_149, %c2_150, %c0_151] : memref<1x7x128xf32, #tpu.memory_space<vmem>>, vector<1x1x128xf32>
    %151 = vector.shape_cast %150 : vector<1x1x128xf32> to vector<1x128xf32>
    %152 = vector.shape_cast %149 : vector<1x128xf32> to vector<1x1x128xf32>
    tpu.vector_store %arg10[%c0_149, %c2_150, %c0_151], %152 {strides = array<i32>} : memref<1x7x128xf32, #tpu.memory_space<vmem>>, vector<1x1x128xf32>,
    %153 = vector.extract_strided_slice %134 {offsets = [5, 0], sizes = [2, 128], strides = [1, 1]} : vector<12x128xf32> to vector<2x128xf32>
    %cst_152 = arith.constant dense<0xFF800000> : vector<128xf32>
    %154 = vector.multi_reduction <maximumf>, %153, %cst_152 [0] : vector<2x128xf32> to vector<128xf32>
    %155 = vector.shape_cast %154 : vector<128xf32> to vector<1x128xf32>
    %c0_153 = arith.constant 0 : index
    %c3_154 = arith.constant 3 : index
    %c0_155 = arith.constant 0 : index
    %156 = vector.load %arg10[%c0_153, %c3_154, %c0_155] : memref<1x7x128xf32, #tpu.memory_space<vmem>>, vector<1x1x128xf32>
    %157 = vector.shape_cast %156 : vector<1x1x128xf32> to vector<1x128xf32>
    %158 = vector.shape_cast %155 : vector<1x128xf32> to vector<1x1x128xf32>
    tpu.vector_store %arg10[%c0_153, %c3_154, %c0_155], %158 {strides = array<i32>} : memref<1x7x128xf32, #tpu.memory_space<vmem>>, vector<1x1x128xf32>,
    %159 = vector.extract_strided_slice %134 {offsets = [7, 0], sizes = [2, 128], strides = [1, 1]} : vector<12x128xf32> to vector<2x128xf32>
    %cst_156 = arith.constant dense<0xFF800000> : vector<128xf32>
    %160 = vector.multi_reduction <maximumf>, %159, %cst_156 [0] : vector<2x128xf32> to vector<128xf32>
    %161 = vector.shape_cast %160 : vector<128xf32> to vector<1x128xf32>
    %c0_157 = arith.constant 0 : index
    %c4_158 = arith.constant 4 : index
    %c0_159 = arith.constant 0 : index
    %162 = vector.load %arg10[%c0_157, %c4_158, %c0_159] : memref<1x7x128xf32, #tpu.memory_space<vmem>>, vector<1x1x128xf32>
    %163 = vector.shape_cast %162 : vector<1x1x128xf32> to vector<1x128xf32>
    %164 = vector.shape_cast %161 : vector<1x128xf32> to vector<1x1x128xf32>
    tpu.vector_store %arg10[%c0_157, %c4_158, %c0_159], %164 {strides = array<i32>} : memref<1x7x128xf32, #tpu.memory_space<vmem>>, vector<1x1x128xf32>,
    %165 = vector.extract_strided_slice %134 {offsets = [9, 0], sizes = [2, 128], strides = [1, 1]} : vector<12x128xf32> to vector<2x128xf32>
    %cst_160 = arith.constant dense<0xFF800000> : vector<128xf32>
    %166 = vector.multi_reduction <maximumf>, %165, %cst_160 [0] : vector<2x128xf32> to vector<128xf32>
    %167 = vector.shape_cast %166 : vector<128xf32> to vector<1x128xf32>
    %c0_161 = arith.constant 0 : index
    %c5_162 = arith.constant 5 : index
    %c0_163 = arith.constant 0 : index
    %168 = vector.load %arg10[%c0_161, %c5_162, %c0_163] : memref<1x7x128xf32, #tpu.memory_space<vmem>>, vector<1x1x128xf32>
    %169 = vector.shape_cast %168 : vector<1x1x128xf32> to vector<1x128xf32>
    %170 = vector.shape_cast %167 : vector<1x128xf32> to vector<1x1x128xf32>
    tpu.vector_store %arg10[%c0_161, %c5_162, %c0_163], %170 {strides = array<i32>} : memref<1x7x128xf32, #tpu.memory_space<vmem>>, vector<1x1x128xf32>,
    %171 = vector.extract_strided_slice %134 {offsets = [11, 0], sizes = [1, 128], strides = [1, 1]} : vector<12x128xf32> to vector<1x128xf32>
    %cst_164 = arith.constant dense<0xFF800000> : vector<128xf32>
    %172 = vector.multi_reduction <maximumf>, %171, %cst_164 [0] : vector<1x128xf32> to vector<128xf32>
    %173 = vector.shape_cast %172 : vector<128xf32> to vector<1x128xf32>
    %c0_165 = arith.constant 0 : index
    %c6_166 = arith.constant 6 : index
    %c0_167 = arith.constant 0 : index
    %174 = vector.load %arg10[%c0_165, %c6_166, %c0_167] : memref<1x7x128xf32, #tpu.memory_space<vmem>>, vector<1x1x128xf32>
    %175 = vector.shape_cast %174 : vector<1x1x128xf32> to vector<1x128xf32>
    %176 = vector.shape_cast %173 : vector<1x128xf32> to vector<1x1x128xf32>
    tpu.vector_store %arg10[%c0_165, %c6_166, %c0_167], %176 {strides = array<i32>} : memref<1x7x128xf32, #tpu.memory_space<vmem>>, vector<1x1x128xf32>,
    return
  }
  func.func @transform_0(%arg0: i32) -> (i32, i32, i32) {
    %c0_i32 = arith.constant 0 : i32
    %c0_i32_0 = arith.constant 0 : i32
    %c0_i32_1 = arith.constant 0 : i32
    return %arg0, %c0_i32, %c0_i32_0 : i32, i32, i32
  }
  func.func @transform_1(%arg0: i32) -> (i32, i32) {
    %c0_i32 = arith.constant 0 : i32
    %c0_i32_0 = arith.constant 0 : i32
    %c0_i32_1 = arith.constant 0 : i32
    return %c0_i32, %c0_i32_0 : i32, i32
  }
  func.func @transform_2(%arg0: i32) -> (i32, i32) {
    %c0_i32 = arith.constant 0 : i32
    %c0_i32_0 = arith.constant 0 : i32
    %c0_i32_1 = arith.constant 0 : i32
    return %c0_i32, %c0_i32_0 : i32, i32
  }
  func.func @transform_3(%arg0: i32) -> (i32, i32, i32) {
    %c0_i32 = arith.constant 0 : i32
    %c0_i32_0 = arith.constant 0 : i32
    %c0_i32_1 = arith.constant 0 : i32
    %c0_i32_2 = arith.constant 0 : i32
    return %c0_i32, %c0_i32_0, %c0_i32_1 : i32, i32, i32
  }
  func.func @transform_4(%arg0: i32) -> (i32, i32) {
    %c0_i32 = arith.constant 0 : i32
    %c0_i32_0 = arith.constant 0 : i32
    %c0_i32_1 = arith.constant 0 : i32
    return %c0_i32, %c0_i32_0 : i32, i32
  }
  func.func @transform_5(%arg0: i32) -> (i32, i32, i32) {
    %c0_i32 = arith.constant 0 : i32
    %c0_i32_0 = arith.constant 0 : i32
    %c0_i32_1 = arith.constant 0 : i32
    %c0_i32_2 = arith.constant 0 : i32
    return %c0_i32, %c0_i32_0, %c0_i32_1 : i32, i32, i32
  }
  func.func @transform_6(%arg0: i32) -> (i32, i32) {
    %c0_i32 = arith.constant 0 : i32
    %c0_i32_0 = arith.constant 0 : i32
    %c0_i32_1 = arith.constant 0 : i32
    return %c0_i32, %c0_i32_0 : i32, i32
  }
  func.func @transform_7(%arg0: i32) -> (i32, i32, i32) {
    %c0_i32 = arith.constant 0 : i32
    %c0_i32_0 = arith.constant 0 : i32
    %c0_i32_1 = arith.constant 0 : i32
    %c0_i32_2 = arith.constant 0 : i32
    return %c0_i32, %c0_i32_0, %c0_i32_1 : i32, i32, i32
  }
  func.func @transform_8(%arg0: i32) -> (i32, i32) {
    %c0_i32 = arith.constant 0 : i32
    %c0_i32_0 = arith.constant 0 : i32
    %c0_i32_1 = arith.constant 0 : i32
    return %c0_i32, %c0_i32_0 : i32, i32
  }
  func.func @transform_9(%arg0: i32) -> (i32, i32, i32) {
    %c0_i32 = arith.constant 0 : i32
    %c0_i32_0 = arith.constant 0 : i32
    %c0_i32_1 = arith.constant 0 : i32
    return %arg0, %c0_i32, %c0_i32_0 : i32, i32, i32
  }
}

module attributes {stable_mosaic.version = 11 : i64} {
  func.func @kernel(%arg0: i32, %arg1: memref<1x127x128xbf16, #tpu.memory_space<vmem>>, %arg2: memref<128x128xbf16, #tpu.memory_space<vmem>>, %arg3: memref<1x128xf32, #tpu.memory_space<vmem>>, %arg4: memref<8x128x128xf32, #tpu.memory_space<vmem>>, %arg5: memref<1x128xf32, #tpu.memory_space<vmem>>, %arg6: memref<8x128x128xf32, #tpu.memory_space<vmem>>, %arg7: memref<1x128xf32, #tpu.memory_space<vmem>>, %arg8: memref<8x128x128xf32, #tpu.memory_space<vmem>>, %arg9: memref<1x128xf32, #tpu.memory_space<vmem>>, %arg10: memref<1x5x128xf32, #tpu.memory_space<vmem>>, %arg11: memref<24x128xf32, #tpu.memory_space<vmem>>, %arg12: memref<25x128xf32, #tpu.memory_space<vmem>>, %arg13: memref<26x128xf32, #tpu.memory_space<vmem>>) attributes {dimension_semantics = [#tpu.dimension_semantics<parallel>], iteration_bounds = array<i64: 2>, scalar_prefetch = 0 : i64, scratch_operands = 3 : i64, tpu.core_type = #tpu.core_type<tc>, window_params = [{transform_indices = @transform_0, window_bounds = array<i64: 1, 127, 128>}, {pipeline_mode = #tpu.pipeline_mode<synchronous>, transform_indices = @transform_1, window_bounds = array<i64: 128, 128>}, {pipeline_mode = #tpu.pipeline_mode<synchronous>, transform_indices = @transform_2, window_bounds = array<i64: 1, 128>}, {pipeline_mode = #tpu.pipeline_mode<synchronous>, transform_indices = @transform_3, window_bounds = array<i64: 8, 128, 128>}, {pipeline_mode = #tpu.pipeline_mode<synchronous>, transform_indices = @transform_4, window_bounds = array<i64: 1, 128>}, {pipeline_mode = #tpu.pipeline_mode<synchronous>, transform_indices = @transform_5, window_bounds = array<i64: 8, 128, 128>}, {pipeline_mode = #tpu.pipeline_mode<synchronous>, transform_indices = @transform_6, window_bounds = array<i64: 1, 128>}, {pipeline_mode = #tpu.pipeline_mode<synchronous>, transform_indices = @transform_7, window_bounds = array<i64: 8, 128, 128>}, {pipeline_mode = #tpu.pipeline_mode<synchronous>, transform_indices = @transform_8, window_bounds = array<i64: 1, 128>}, {transform_indices = @transform_9, window_bounds = array<i64: 1, 5, 128>}]} {
    %cst = arith.constant 0.000000e+00 : f32
    %0 = vector.broadcast %cst : f32 to vector<24x128xf32>
    %c0 = arith.constant 0 : index
    %c0_0 = arith.constant 0 : index
    %1 = vector.load %arg11[%c0, %c0_0] : memref<24x128xf32, #tpu.memory_space<vmem>>, vector<24x128xf32>
    tpu.vector_store %arg11[%c0, %c0_0], %0 {strides = array<i32>} : memref<24x128xf32, #tpu.memory_space<vmem>>, vector<24x128xf32>,
    %cst_1 = arith.constant 0.000000e+00 : f32
    %2 = vector.broadcast %cst_1 : f32 to vector<25x128xf32>
    %c0_2 = arith.constant 0 : index
    %c0_3 = arith.constant 0 : index
    %3 = vector.load %arg12[%c0_2, %c0_3] : memref<25x128xf32, #tpu.memory_space<vmem>>, vector<25x128xf32>
    tpu.vector_store %arg12[%c0_2, %c0_3], %2 {strides = array<i32>} : memref<25x128xf32, #tpu.memory_space<vmem>>, vector<25x128xf32>,
    %cst_4 = arith.constant 0.000000e+00 : f32
    %4 = vector.broadcast %cst_4 : f32 to vector<26x128xf32>
    %c0_5 = arith.constant 0 : index
    %c0_6 = arith.constant 0 : index
    %5 = vector.load %arg13[%c0_5, %c0_6] : memref<26x128xf32, #tpu.memory_space<vmem>>, vector<26x128xf32>
    tpu.vector_store %arg13[%c0_5, %c0_6], %4 {strides = array<i32>} : memref<26x128xf32, #tpu.memory_space<vmem>>, vector<26x128xf32>,
    %c0_7 = arith.constant 0 : index
    %c0_8 = arith.constant 0 : index
    %c0_9 = arith.constant 0 : index
    %6 = vector.load %arg1[%c0_7, %c0_8, %c0_9] : memref<1x127x128xbf16, #tpu.memory_space<vmem>>, vector<1x127x128xbf16>
    %7 = vector.shape_cast %6 : vector<1x127x128xbf16> to vector<127x128xbf16>
    %c0_10 = arith.constant 0 : index
    %c0_11 = arith.constant 0 : index
    %8 = vector.load %arg2[%c0_10, %c0_11] : memref<128x128xbf16, #tpu.memory_space<vmem>>, vector<128x128xbf16>
    %cst_12 = arith.constant dense<0.000000e+00> : vector<127x128xf32>
    %9 = tpu.matmul %7, %8, %cst_12 {dimension_numbers = #tpu.dot_dimension_numbers<[1], [0], [0], [1], [0, 0, 1, 1], [], []>} : vector<127x128xbf16>, vector<128x128xbf16>, vector<127x128xf32> -> vector<127x128xf32>
    %c0_13 = arith.constant 0 : index
    %c0_14 = arith.constant 0 : index
    %10 = vector.load %arg3[%c0_13, %c0_14] : memref<1x128xf32, #tpu.memory_space<vmem>>, vector<1x128xf32>
    %11 = vector.broadcast %10 : vector<1x128xf32> to vector<127x128xf32>
    %12 = arith.addf %9, %11 : vector<127x128xf32>
    %cst_15 = arith.constant 0.00999999977 : f32
    %13 = vector.broadcast %cst_15 : f32 to vector<127x128xf32>
    %14 = arith.mulf %13, %12 : vector<127x128xf32>
    %15 = arith.maximumf %12, %14 : vector<127x128xf32>
    %16 = vector.extract_strided_slice %15 {offsets = [0, 0], sizes = [4, 128], strides = [1, 1]} : vector<127x128xf32> to vector<4x128xf32>
    %cst_16 = arith.constant dense<0xFF800000> : vector<128xf32>
    %17 = vector.multi_reduction <maximumf>, %16, %cst_16 [0] : vector<4x128xf32> to vector<128xf32>
    %18 = vector.shape_cast %17 : vector<128xf32> to vector<1x128xf32>
    %c4 = arith.constant 4 : index
    %c0_17 = arith.constant 0 : index
    %19 = vector.load %arg11[%c4, %c0_17] : memref<24x128xf32, #tpu.memory_space<vmem>>, vector<1x128xf32>
    tpu.vector_store %arg11[%c4, %c0_17], %18 {strides = array<i32>} : memref<24x128xf32, #tpu.memory_space<vmem>>, vector<1x128xf32>,
    %20 = vector.extract_strided_slice %15 {offsets = [4, 0], sizes = [8, 128], strides = [1, 1]} : vector<127x128xf32> to vector<8x128xf32>
    %cst_18 = arith.constant dense<0xFF800000> : vector<128xf32>
    %21 = vector.multi_reduction <maximumf>, %20, %cst_18 [0] : vector<8x128xf32> to vector<128xf32>
    %22 = vector.shape_cast %21 : vector<128xf32> to vector<1x128xf32>
    %c5 = arith.constant 5 : index
    %c0_19 = arith.constant 0 : index
    %23 = vector.load %arg11[%c5, %c0_19] : memref<24x128xf32, #tpu.memory_space<vmem>>, vector<1x128xf32>
    tpu.vector_store %arg11[%c5, %c0_19], %22 {strides = array<i32>} : memref<24x128xf32, #tpu.memory_space<vmem>>, vector<1x128xf32>,
    %24 = vector.extract_strided_slice %15 {offsets = [12, 0], sizes = [8, 128], strides = [1, 1]} : vector<127x128xf32> to vector<8x128xf32>
    %cst_20 = arith.constant dense<0xFF800000> : vector<128xf32>
    %25 = vector.multi_reduction <maximumf>, %24, %cst_20 [0] : vector<8x128xf32> to vector<128xf32>
    %26 = vector.shape_cast %25 : vector<128xf32> to vector<1x128xf32>
    %c6 = arith.constant 6 : index
    %c0_21 = arith.constant 0 : index
    %27 = vector.load %arg11[%c6, %c0_21] : memref<24x128xf32, #tpu.memory_space<vmem>>, vector<1x128xf32>
    tpu.vector_store %arg11[%c6, %c0_21], %26 {strides = array<i32>} : memref<24x128xf32, #tpu.memory_space<vmem>>, vector<1x128xf32>,
    %28 = vector.extract_strided_slice %15 {offsets = [20, 0], sizes = [8, 128], strides = [1, 1]} : vector<127x128xf32> to vector<8x128xf32>
    %cst_22 = arith.constant dense<0xFF800000> : vector<128xf32>
    %29 = vector.multi_reduction <maximumf>, %28, %cst_22 [0] : vector<8x128xf32> to vector<128xf32>
    %30 = vector.shape_cast %29 : vector<128xf32> to vector<1x128xf32>
    %c7 = arith.constant 7 : index
    %c0_23 = arith.constant 0 : index
    %31 = vector.load %arg11[%c7, %c0_23] : memref<24x128xf32, #tpu.memory_space<vmem>>, vector<1x128xf32>
    tpu.vector_store %arg11[%c7, %c0_23], %30 {strides = array<i32>} : memref<24x128xf32, #tpu.memory_space<vmem>>, vector<1x128xf32>,
    %32 = vector.extract_strided_slice %15 {offsets = [28, 0], sizes = [8, 128], strides = [1, 1]} : vector<127x128xf32> to vector<8x128xf32>
    %cst_24 = arith.constant dense<0xFF800000> : vector<128xf32>
    %33 = vector.multi_reduction <maximumf>, %32, %cst_24 [0] : vector<8x128xf32> to vector<128xf32>
    %34 = vector.shape_cast %33 : vector<128xf32> to vector<1x128xf32>
    %c8 = arith.constant 8 : index
    %c0_25 = arith.constant 0 : index
    %35 = vector.load %arg11[%c8, %c0_25] : memref<24x128xf32, #tpu.memory_space<vmem>>, vector<1x128xf32>
    tpu.vector_store %arg11[%c8, %c0_25], %34 {strides = array<i32>} : memref<24x128xf32, #tpu.memory_space<vmem>>, vector<1x128xf32>,
    %36 = vector.extract_strided_slice %15 {offsets = [36, 0], sizes = [8, 128], strides = [1, 1]} : vector<127x128xf32> to vector<8x128xf32>
    %cst_26 = arith.constant dense<0xFF800000> : vector<128xf32>
    %37 = vector.multi_reduction <maximumf>, %36, %cst_26 [0] : vector<8x128xf32> to vector<128xf32>
    %38 = vector.shape_cast %37 : vector<128xf32> to vector<1x128xf32>
    %c9 = arith.constant 9 : index
    %c0_27 = arith.constant 0 : index
    %39 = vector.load %arg11[%c9, %c0_27] : memref<24x128xf32, #tpu.memory_space<vmem>>, vector<1x128xf32>
    tpu.vector_store %arg11[%c9, %c0_27], %38 {strides = array<i32>} : memref<24x128xf32, #tpu.memory_space<vmem>>, vector<1x128xf32>,
    %40 = vector.extract_strided_slice %15 {offsets = [44, 0], sizes = [8, 128], strides = [1, 1]} : vector<127x128xf32> to vector<8x128xf32>
    %cst_28 = arith.constant dense<0xFF800000> : vector<128xf32>
    %41 = vector.multi_reduction <maximumf>, %40, %cst_28 [0] : vector<8x128xf32> to vector<128xf32>
    %42 = vector.shape_cast %41 : vector<128xf32> to vector<1x128xf32>
    %c10 = arith.constant 10 : index
    %c0_29 = arith.constant 0 : index
    %43 = vector.load %arg11[%c10, %c0_29] : memref<24x128xf32, #tpu.memory_space<vmem>>, vector<1x128xf32>
    tpu.vector_store %arg11[%c10, %c0_29], %42 {strides = array<i32>} : memref<24x128xf32, #tpu.memory_space<vmem>>, vector<1x128xf32>,
    %44 = vector.extract_strided_slice %15 {offsets = [52, 0], sizes = [8, 128], strides = [1, 1]} : vector<127x128xf32> to vector<8x128xf32>
    %cst_30 = arith.constant dense<0xFF800000> : vector<128xf32>
    %45 = vector.multi_reduction <maximumf>, %44, %cst_30 [0] : vector<8x128xf32> to vector<128xf32>
    %46 = vector.shape_cast %45 : vector<128xf32> to vector<1x128xf32>
    %c11 = arith.constant 11 : index
    %c0_31 = arith.constant 0 : index
    %47 = vector.load %arg11[%c11, %c0_31] : memref<24x128xf32, #tpu.memory_space<vmem>>, vector<1x128xf32>
    tpu.vector_store %arg11[%c11, %c0_31], %46 {strides = array<i32>} : memref<24x128xf32, #tpu.memory_space<vmem>>, vector<1x128xf32>,
    %48 = vector.extract_strided_slice %15 {offsets = [60, 0], sizes = [8, 128], strides = [1, 1]} : vector<127x128xf32> to vector<8x128xf32>
    %cst_32 = arith.constant dense<0xFF800000> : vector<128xf32>
    %49 = vector.multi_reduction <maximumf>, %48, %cst_32 [0] : vector<8x128xf32> to vector<128xf32>
    %50 = vector.shape_cast %49 : vector<128xf32> to vector<1x128xf32>
    %c12 = arith.constant 12 : index
    %c0_33 = arith.constant 0 : index
    %51 = vector.load %arg11[%c12, %c0_33] : memref<24x128xf32, #tpu.memory_space<vmem>>, vector<1x128xf32>
    tpu.vector_store %arg11[%c12, %c0_33], %50 {strides = array<i32>} : memref<24x128xf32, #tpu.memory_space<vmem>>, vector<1x128xf32>,
    %52 = vector.extract_strided_slice %15 {offsets = [68, 0], sizes = [8, 128], strides = [1, 1]} : vector<127x128xf32> to vector<8x128xf32>
    %cst_34 = arith.constant dense<0xFF800000> : vector<128xf32>
    %53 = vector.multi_reduction <maximumf>, %52, %cst_34 [0] : vector<8x128xf32> to vector<128xf32>
    %54 = vector.shape_cast %53 : vector<128xf32> to vector<1x128xf32>
    %c13 = arith.constant 13 : index
    %c0_35 = arith.constant 0 : index
    %55 = vector.load %arg11[%c13, %c0_35] : memref<24x128xf32, #tpu.memory_space<vmem>>, vector<1x128xf32>
    tpu.vector_store %arg11[%c13, %c0_35], %54 {strides = array<i32>} : memref<24x128xf32, #tpu.memory_space<vmem>>, vector<1x128xf32>,
    %56 = vector.extract_strided_slice %15 {offsets = [76, 0], sizes = [8, 128], strides = [1, 1]} : vector<127x128xf32> to vector<8x128xf32>
    %cst_36 = arith.constant dense<0xFF800000> : vector<128xf32>
    %57 = vector.multi_reduction <maximumf>, %56, %cst_36 [0] : vector<8x128xf32> to vector<128xf32>
    %58 = vector.shape_cast %57 : vector<128xf32> to vector<1x128xf32>
    %c14 = arith.constant 14 : index
    %c0_37 = arith.constant 0 : index
    %59 = vector.load %arg11[%c14, %c0_37] : memref<24x128xf32, #tpu.memory_space<vmem>>, vector<1x128xf32>
    tpu.vector_store %arg11[%c14, %c0_37], %58 {strides = array<i32>} : memref<24x128xf32, #tpu.memory_space<vmem>>, vector<1x128xf32>,
    %60 = vector.extract_strided_slice %15 {offsets = [84, 0], sizes = [8, 128], strides = [1, 1]} : vector<127x128xf32> to vector<8x128xf32>
    %cst_38 = arith.constant dense<0xFF800000> : vector<128xf32>
    %61 = vector.multi_reduction <maximumf>, %60, %cst_38 [0] : vector<8x128xf32> to vector<128xf32>
    %62 = vector.shape_cast %61 : vector<128xf32> to vector<1x128xf32>
    %c15 = arith.constant 15 : index
    %c0_39 = arith.constant 0 : index
    %63 = vector.load %arg11[%c15, %c0_39] : memref<24x128xf32, #tpu.memory_space<vmem>>, vector<1x128xf32>
    tpu.vector_store %arg11[%c15, %c0_39], %62 {strides = array<i32>} : memref<24x128xf32, #tpu.memory_space<vmem>>, vector<1x128xf32>,
    %64 = vector.extract_strided_slice %15 {offsets = [92, 0], sizes = [8, 128], strides = [1, 1]} : vector<127x128xf32> to vector<8x128xf32>
    %cst_40 = arith.constant dense<0xFF800000> : vector<128xf32>
    %65 = vector.multi_reduction <maximumf>, %64, %cst_40 [0] : vector<8x128xf32> to vector<128xf32>
    %66 = vector.shape_cast %65 : vector<128xf32> to vector<1x128xf32>
    %c16 = arith.constant 16 : index
    %c0_41 = arith.constant 0 : index
    %67 = vector.load %arg11[%c16, %c0_41] : memref<24x128xf32, #tpu.memory_space<vmem>>, vector<1x128xf32>
    tpu.vector_store %arg11[%c16, %c0_41], %66 {strides = array<i32>} : memref<24x128xf32, #tpu.memory_space<vmem>>, vector<1x128xf32>,
    %68 = vector.extract_strided_slice %15 {offsets = [100, 0], sizes = [8, 128], strides = [1, 1]} : vector<127x128xf32> to vector<8x128xf32>
    %cst_42 = arith.constant dense<0xFF800000> : vector<128xf32>
    %69 = vector.multi_reduction <maximumf>, %68, %cst_42 [0] : vector<8x128xf32> to vector<128xf32>
    %70 = vector.shape_cast %69 : vector<128xf32> to vector<1x128xf32>
    %c17 = arith.constant 17 : index
    %c0_43 = arith.constant 0 : index
    %71 = vector.load %arg11[%c17, %c0_43] : memref<24x128xf32, #tpu.memory_space<vmem>>, vector<1x128xf32>
    tpu.vector_store %arg11[%c17, %c0_43], %70 {strides = array<i32>} : memref<24x128xf32, #tpu.memory_space<vmem>>, vector<1x128xf32>,
    %72 = vector.extract_strided_slice %15 {offsets = [108, 0], sizes = [8, 128], strides = [1, 1]} : vector<127x128xf32> to vector<8x128xf32>
    %cst_44 = arith.constant dense<0xFF800000> : vector<128xf32>
    %73 = vector.multi_reduction <maximumf>, %72, %cst_44 [0] : vector<8x128xf32> to vector<128xf32>
    %74 = vector.shape_cast %73 : vector<128xf32> to vector<1x128xf32>
    %c18 = arith.constant 18 : index
    %c0_45 = arith.constant 0 : index
    %75 = vector.load %arg11[%c18, %c0_45] : memref<24x128xf32, #tpu.memory_space<vmem>>, vector<1x128xf32>
    tpu.vector_store %arg11[%c18, %c0_45], %74 {strides = array<i32>} : memref<24x128xf32, #tpu.memory_space<vmem>>, vector<1x128xf32>,
    %76 = vector.extract_strided_slice %15 {offsets = [116, 0], sizes = [8, 128], strides = [1, 1]} : vector<127x128xf32> to vector<8x128xf32>
    %cst_46 = arith.constant dense<0xFF800000> : vector<128xf32>
    %77 = vector.multi_reduction <maximumf>, %76, %cst_46 [0] : vector<8x128xf32> to vector<128xf32>
    %78 = vector.shape_cast %77 : vector<128xf32> to vector<1x128xf32>
    %c19 = arith.constant 19 : index
    %c0_47 = arith.constant 0 : index
    %79 = vector.load %arg11[%c19, %c0_47] : memref<24x128xf32, #tpu.memory_space<vmem>>, vector<1x128xf32>
    tpu.vector_store %arg11[%c19, %c0_47], %78 {strides = array<i32>} : memref<24x128xf32, #tpu.memory_space<vmem>>, vector<1x128xf32>,
    %c0_48 = arith.constant 0 : index
    %c0_49 = arith.constant 0 : index
    %80 = vector.load %arg11[%c0_48, %c0_49] : memref<24x128xf32, #tpu.memory_space<vmem>>, vector<17x128xf32>
    %c0_50 = arith.constant 0 : index
    %c0_51 = arith.constant 0 : index
    %c0_52 = arith.constant 0 : index
    %81 = vector.load %arg4[%c0_50, %c0_51, %c0_52] : memref<8x128x128xf32, #tpu.memory_space<vmem>>, vector<1x128x128xf32>
    %82 = vector.shape_cast %81 : vector<1x128x128xf32> to vector<128x128xf32>
    %cst_53 = arith.constant dense<0.000000e+00> : vector<17x128xf32>
    %83 = tpu.matmul %80, %82, %cst_53 {dimension_numbers = #tpu.dot_dimension_numbers<[1], [0], [0], [1], [0, 0, 1, 1], [], []>} : vector<17x128xf32>, vector<128x128xf32>, vector<17x128xf32> -> vector<17x128xf32>
    %c1 = arith.constant 1 : index
    %c0_54 = arith.constant 0 : index
    %84 = vector.load %arg11[%c1, %c0_54] : memref<24x128xf32, #tpu.memory_space<vmem>>, vector<17x128xf32>
    %c1_55 = arith.constant 1 : index
    %c0_56 = arith.constant 0 : index
    %c0_57 = arith.constant 0 : index
    %85 = vector.load %arg4[%c1_55, %c0_56, %c0_57] : memref<8x128x128xf32, #tpu.memory_space<vmem>>, vector<1x128x128xf32>
    %86 = vector.shape_cast %85 : vector<1x128x128xf32> to vector<128x128xf32>
    %cst_58 = arith.constant dense<0.000000e+00> : vector<17x128xf32>
    %87 = tpu.matmul %84, %86, %cst_58 {dimension_numbers = #tpu.dot_dimension_numbers<[1], [0], [0], [1], [0, 0, 1, 1], [], []>} : vector<17x128xf32>, vector<128x128xf32>, vector<17x128xf32> -> vector<17x128xf32>
    %88 = arith.addf %83, %87 : vector<17x128xf32>
    %c2 = arith.constant 2 : index
    %c0_59 = arith.constant 0 : index
    %89 = vector.load %arg11[%c2, %c0_59] : memref<24x128xf32, #tpu.memory_space<vmem>>, vector<17x128xf32>
    %c2_60 = arith.constant 2 : index
    %c0_61 = arith.constant 0 : index
    %c0_62 = arith.constant 0 : index
    %90 = vector.load %arg4[%c2_60, %c0_61, %c0_62] : memref<8x128x128xf32, #tpu.memory_space<vmem>>, vector<1x128x128xf32>
    %91 = vector.shape_cast %90 : vector<1x128x128xf32> to vector<128x128xf32>
    %cst_63 = arith.constant dense<0.000000e+00> : vector<17x128xf32>
    %92 = tpu.matmul %89, %91, %cst_63 {dimension_numbers = #tpu.dot_dimension_numbers<[1], [0], [0], [1], [0, 0, 1, 1], [], []>} : vector<17x128xf32>, vector<128x128xf32>, vector<17x128xf32> -> vector<17x128xf32>
    %93 = arith.addf %88, %92 : vector<17x128xf32>
    %c3 = arith.constant 3 : index
    %c0_64 = arith.constant 0 : index
    %94 = vector.load %arg11[%c3, %c0_64] : memref<24x128xf32, #tpu.memory_space<vmem>>, vector<17x128xf32>
    %c3_65 = arith.constant 3 : index
    %c0_66 = arith.constant 0 : index
    %c0_67 = arith.constant 0 : index
    %95 = vector.load %arg4[%c3_65, %c0_66, %c0_67] : memref<8x128x128xf32, #tpu.memory_space<vmem>>, vector<1x128x128xf32>
    %96 = vector.shape_cast %95 : vector<1x128x128xf32> to vector<128x128xf32>
    %cst_68 = arith.constant dense<0.000000e+00> : vector<17x128xf32>
    %97 = tpu.matmul %94, %96, %cst_68 {dimension_numbers = #tpu.dot_dimension_numbers<[1], [0], [0], [1], [0, 0, 1, 1], [], []>} : vector<17x128xf32>, vector<128x128xf32>, vector<17x128xf32> -> vector<17x128xf32>
    %98 = arith.addf %93, %97 : vector<17x128xf32>
    %c4_69 = arith.constant 4 : index
    %c0_70 = arith.constant 0 : index
    %99 = vector.load %arg11[%c4_69, %c0_70] : memref<24x128xf32, #tpu.memory_space<vmem>>, vector<17x128xf32>
    %c4_71 = arith.constant 4 : index
    %c0_72 = arith.constant 0 : index
    %c0_73 = arith.constant 0 : index
    %100 = vector.load %arg4[%c4_71, %c0_72, %c0_73] : memref<8x128x128xf32, #tpu.memory_space<vmem>>, vector<1x128x128xf32>
    %101 = vector.shape_cast %100 : vector<1x128x128xf32> to vector<128x128xf32>
    %cst_74 = arith.constant dense<0.000000e+00> : vector<17x128xf32>
    %102 = tpu.matmul %99, %101, %cst_74 {dimension_numbers = #tpu.dot_dimension_numbers<[1], [0], [0], [1], [0, 0, 1, 1], [], []>} : vector<17x128xf32>, vector<128x128xf32>, vector<17x128xf32> -> vector<17x128xf32>
    %103 = arith.addf %98, %102 : vector<17x128xf32>
    %c5_75 = arith.constant 5 : index
    %c0_76 = arith.constant 0 : index
    %104 = vector.load %arg11[%c5_75, %c0_76] : memref<24x128xf32, #tpu.memory_space<vmem>>, vector<17x128xf32>
    %c5_77 = arith.constant 5 : index
    %c0_78 = arith.constant 0 : index
    %c0_79 = arith.constant 0 : index
    %105 = vector.load %arg4[%c5_77, %c0_78, %c0_79] : memref<8x128x128xf32, #tpu.memory_space<vmem>>, vector<1x128x128xf32>
    %106 = vector.shape_cast %105 : vector<1x128x128xf32> to vector<128x128xf32>
    %cst_80 = arith.constant dense<0.000000e+00> : vector<17x128xf32>
    %107 = tpu.matmul %104, %106, %cst_80 {dimension_numbers = #tpu.dot_dimension_numbers<[1], [0], [0], [1], [0, 0, 1, 1], [], []>} : vector<17x128xf32>, vector<128x128xf32>, vector<17x128xf32> -> vector<17x128xf32>
    %108 = arith.addf %103, %107 : vector<17x128xf32>
    %c6_81 = arith.constant 6 : index
    %c0_82 = arith.constant 0 : index
    %109 = vector.load %arg11[%c6_81, %c0_82] : memref<24x128xf32, #tpu.memory_space<vmem>>, vector<17x128xf32>
    %c6_83 = arith.constant 6 : index
    %c0_84 = arith.constant 0 : index
    %c0_85 = arith.constant 0 : index
    %110 = vector.load %arg4[%c6_83, %c0_84, %c0_85] : memref<8x128x128xf32, #tpu.memory_space<vmem>>, vector<1x128x128xf32>
    %111 = vector.shape_cast %110 : vector<1x128x128xf32> to vector<128x128xf32>
    %cst_86 = arith.constant dense<0.000000e+00> : vector<17x128xf32>
    %112 = tpu.matmul %109, %111, %cst_86 {dimension_numbers = #tpu.dot_dimension_numbers<[1], [0], [0], [1], [0, 0, 1, 1], [], []>} : vector<17x128xf32>, vector<128x128xf32>, vector<17x128xf32> -> vector<17x128xf32>
    %113 = arith.addf %108, %112 : vector<17x128xf32>
    %c7_87 = arith.constant 7 : index
    %c0_88 = arith.constant 0 : index
    %114 = vector.load %arg11[%c7_87, %c0_88] : memref<24x128xf32, #tpu.memory_space<vmem>>, vector<17x128xf32>
    %c7_89 = arith.constant 7 : index
    %c0_90 = arith.constant 0 : index
    %c0_91 = arith.constant 0 : index
    %115 = vector.load %arg4[%c7_89, %c0_90, %c0_91] : memref<8x128x128xf32, #tpu.memory_space<vmem>>, vector<1x128x128xf32>
    %116 = vector.shape_cast %115 : vector<1x128x128xf32> to vector<128x128xf32>
    %cst_92 = arith.constant dense<0.000000e+00> : vector<17x128xf32>
    %117 = tpu.matmul %114, %116, %cst_92 {dimension_numbers = #tpu.dot_dimension_numbers<[1], [0], [0], [1], [0, 0, 1, 1], [], []>} : vector<17x128xf32>, vector<128x128xf32>, vector<17x128xf32> -> vector<17x128xf32>
    %118 = arith.addf %113, %117 : vector<17x128xf32>
    %c0_93 = arith.constant 0 : index
    %c0_94 = arith.constant 0 : index
    %119 = vector.load %arg5[%c0_93, %c0_94] : memref<1x128xf32, #tpu.memory_space<vmem>>, vector<1x128xf32>
    %120 = vector.broadcast %119 : vector<1x128xf32> to vector<17x128xf32>
    %121 = arith.addf %118, %120 : vector<17x128xf32>
    %cst_95 = arith.constant 0.00999999977 : f32
    %122 = vector.broadcast %cst_95 : f32 to vector<17x128xf32>
    %123 = arith.mulf %122, %121 : vector<17x128xf32>
    %124 = arith.maximumf %121, %123 : vector<17x128xf32>
    %c4_96 = arith.constant 4 : index
    %c0_97 = arith.constant 0 : index
    %125 = vector.load %arg12[%c4_96, %c0_97] : memref<25x128xf32, #tpu.memory_space<vmem>>, vector<17x128xf32>
    tpu.vector_store %arg12[%c4_96, %c0_97], %124 {strides = array<i32>} : memref<25x128xf32, #tpu.memory_space<vmem>>, vector<17x128xf32>,
    %c0_98 = arith.constant 0 : index
    %c0_99 = arith.constant 0 : index
    %126 = vector.load %arg12[%c0_98, %c0_99] : memref<25x128xf32, #tpu.memory_space<vmem>>, vector<18x128xf32>
    %c0_100 = arith.constant 0 : index
    %c0_101 = arith.constant 0 : index
    %c0_102 = arith.constant 0 : index
    %127 = vector.load %arg6[%c0_100, %c0_101, %c0_102] : memref<8x128x128xf32, #tpu.memory_space<vmem>>, vector<1x128x128xf32>
    %128 = vector.shape_cast %127 : vector<1x128x128xf32> to vector<128x128xf32>
    %cst_103 = arith.constant dense<0.000000e+00> : vector<18x128xf32>
    %129 = tpu.matmul %126, %128, %cst_103 {dimension_numbers = #tpu.dot_dimension_numbers<[1], [0], [0], [1], [0, 0, 1, 1], [], []>} : vector<18x128xf32>, vector<128x128xf32>, vector<18x128xf32> -> vector<18x128xf32>
    %c1_104 = arith.constant 1 : index
    %c0_105 = arith.constant 0 : index
    %130 = vector.load %arg12[%c1_104, %c0_105] : memref<25x128xf32, #tpu.memory_space<vmem>>, vector<18x128xf32>
    %c1_106 = arith.constant 1 : index
    %c0_107 = arith.constant 0 : index
    %c0_108 = arith.constant 0 : index
    %131 = vector.load %arg6[%c1_106, %c0_107, %c0_108] : memref<8x128x128xf32, #tpu.memory_space<vmem>>, vector<1x128x128xf32>
    %132 = vector.shape_cast %131 : vector<1x128x128xf32> to vector<128x128xf32>
    %cst_109 = arith.constant dense<0.000000e+00> : vector<18x128xf32>
    %133 = tpu.matmul %130, %132, %cst_109 {dimension_numbers = #tpu.dot_dimension_numbers<[1], [0], [0], [1], [0, 0, 1, 1], [], []>} : vector<18x128xf32>, vector<128x128xf32>, vector<18x128xf32> -> vector<18x128xf32>
    %134 = arith.addf %129, %133 : vector<18x128xf32>
    %c2_110 = arith.constant 2 : index
    %c0_111 = arith.constant 0 : index
    %135 = vector.load %arg12[%c2_110, %c0_111] : memref<25x128xf32, #tpu.memory_space<vmem>>, vector<18x128xf32>
    %c2_112 = arith.constant 2 : index
    %c0_113 = arith.constant 0 : index
    %c0_114 = arith.constant 0 : index
    %136 = vector.load %arg6[%c2_112, %c0_113, %c0_114] : memref<8x128x128xf32, #tpu.memory_space<vmem>>, vector<1x128x128xf32>
    %137 = vector.shape_cast %136 : vector<1x128x128xf32> to vector<128x128xf32>
    %cst_115 = arith.constant dense<0.000000e+00> : vector<18x128xf32>
    %138 = tpu.matmul %135, %137, %cst_115 {dimension_numbers = #tpu.dot_dimension_numbers<[1], [0], [0], [1], [0, 0, 1, 1], [], []>} : vector<18x128xf32>, vector<128x128xf32>, vector<18x128xf32> -> vector<18x128xf32>
    %139 = arith.addf %134, %138 : vector<18x128xf32>
    %c3_116 = arith.constant 3 : index
    %c0_117 = arith.constant 0 : index
    %140 = vector.load %arg12[%c3_116, %c0_117] : memref<25x128xf32, #tpu.memory_space<vmem>>, vector<18x128xf32>
    %c3_118 = arith.constant 3 : index
    %c0_119 = arith.constant 0 : index
    %c0_120 = arith.constant 0 : index
    %141 = vector.load %arg6[%c3_118, %c0_119, %c0_120] : memref<8x128x128xf32, #tpu.memory_space<vmem>>, vector<1x128x128xf32>
    %142 = vector.shape_cast %141 : vector<1x128x128xf32> to vector<128x128xf32>
    %cst_121 = arith.constant dense<0.000000e+00> : vector<18x128xf32>
    %143 = tpu.matmul %140, %142, %cst_121 {dimension_numbers = #tpu.dot_dimension_numbers<[1], [0], [0], [1], [0, 0, 1, 1], [], []>} : vector<18x128xf32>, vector<128x128xf32>, vector<18x128xf32> -> vector<18x128xf32>
    %144 = arith.addf %139, %143 : vector<18x128xf32>
    %c4_122 = arith.constant 4 : index
    %c0_123 = arith.constant 0 : index
    %145 = vector.load %arg12[%c4_122, %c0_123] : memref<25x128xf32, #tpu.memory_space<vmem>>, vector<18x128xf32>
    %c4_124 = arith.constant 4 : index
    %c0_125 = arith.constant 0 : index
    %c0_126 = arith.constant 0 : index
    %146 = vector.load %arg6[%c4_124, %c0_125, %c0_126] : memref<8x128x128xf32, #tpu.memory_space<vmem>>, vector<1x128x128xf32>
    %147 = vector.shape_cast %146 : vector<1x128x128xf32> to vector<128x128xf32>
    %cst_127 = arith.constant dense<0.000000e+00> : vector<18x128xf32>
    %148 = tpu.matmul %145, %147, %cst_127 {dimension_numbers = #tpu.dot_dimension_numbers<[1], [0], [0], [1], [0, 0, 1, 1], [], []>} : vector<18x128xf32>, vector<128x128xf32>, vector<18x128xf32> -> vector<18x128xf32>
    %149 = arith.addf %144, %148 : vector<18x128xf32>
    %c5_128 = arith.constant 5 : index
    %c0_129 = arith.constant 0 : index
    %150 = vector.load %arg12[%c5_128, %c0_129] : memref<25x128xf32, #tpu.memory_space<vmem>>, vector<18x128xf32>
    %c5_130 = arith.constant 5 : index
    %c0_131 = arith.constant 0 : index
    %c0_132 = arith.constant 0 : index
    %151 = vector.load %arg6[%c5_130, %c0_131, %c0_132] : memref<8x128x128xf32, #tpu.memory_space<vmem>>, vector<1x128x128xf32>
    %152 = vector.shape_cast %151 : vector<1x128x128xf32> to vector<128x128xf32>
    %cst_133 = arith.constant dense<0.000000e+00> : vector<18x128xf32>
    %153 = tpu.matmul %150, %152, %cst_133 {dimension_numbers = #tpu.dot_dimension_numbers<[1], [0], [0], [1], [0, 0, 1, 1], [], []>} : vector<18x128xf32>, vector<128x128xf32>, vector<18x128xf32> -> vector<18x128xf32>
    %154 = arith.addf %149, %153 : vector<18x128xf32>
    %c6_134 = arith.constant 6 : index
    %c0_135 = arith.constant 0 : index
    %155 = vector.load %arg12[%c6_134, %c0_135] : memref<25x128xf32, #tpu.memory_space<vmem>>, vector<18x128xf32>
    %c6_136 = arith.constant 6 : index
    %c0_137 = arith.constant 0 : index
    %c0_138 = arith.constant 0 : index
    %156 = vector.load %arg6[%c6_136, %c0_137, %c0_138] : memref<8x128x128xf32, #tpu.memory_space<vmem>>, vector<1x128x128xf32>
    %157 = vector.shape_cast %156 : vector<1x128x128xf32> to vector<128x128xf32>
    %cst_139 = arith.constant dense<0.000000e+00> : vector<18x128xf32>
    %158 = tpu.matmul %155, %157, %cst_139 {dimension_numbers = #tpu.dot_dimension_numbers<[1], [0], [0], [1], [0, 0, 1, 1], [], []>} : vector<18x128xf32>, vector<128x128xf32>, vector<18x128xf32> -> vector<18x128xf32>
    %159 = arith.addf %154, %158 : vector<18x128xf32>
    %c7_140 = arith.constant 7 : index
    %c0_141 = arith.constant 0 : index
    %160 = vector.load %arg12[%c7_140, %c0_141] : memref<25x128xf32, #tpu.memory_space<vmem>>, vector<18x128xf32>
    %c7_142 = arith.constant 7 : index
    %c0_143 = arith.constant 0 : index
    %c0_144 = arith.constant 0 : index
    %161 = vector.load %arg6[%c7_142, %c0_143, %c0_144] : memref<8x128x128xf32, #tpu.memory_space<vmem>>, vector<1x128x128xf32>
    %162 = vector.shape_cast %161 : vector<1x128x128xf32> to vector<128x128xf32>
    %cst_145 = arith.constant dense<0.000000e+00> : vector<18x128xf32>
    %163 = tpu.matmul %160, %162, %cst_145 {dimension_numbers = #tpu.dot_dimension_numbers<[1], [0], [0], [1], [0, 0, 1, 1], [], []>} : vector<18x128xf32>, vector<128x128xf32>, vector<18x128xf32> -> vector<18x128xf32>
    %164 = arith.addf %159, %163 : vector<18x128xf32>
    %c0_146 = arith.constant 0 : index
    %c0_147 = arith.constant 0 : index
    %165 = vector.load %arg7[%c0_146, %c0_147] : memref<1x128xf32, #tpu.memory_space<vmem>>, vector<1x128xf32>
    %166 = vector.broadcast %165 : vector<1x128xf32> to vector<18x128xf32>
    %167 = arith.addf %164, %166 : vector<18x128xf32>
    %cst_148 = arith.constant 0.00999999977 : f32
    %168 = vector.broadcast %cst_148 : f32 to vector<18x128xf32>
    %169 = arith.mulf %168, %167 : vector<18x128xf32>
    %170 = arith.maximumf %167, %169 : vector<18x128xf32>
    %c4_149 = arith.constant 4 : index
    %c0_150 = arith.constant 0 : index
    %171 = vector.load %arg13[%c4_149, %c0_150] : memref<26x128xf32, #tpu.memory_space<vmem>>, vector<18x128xf32>
    tpu.vector_store %arg13[%c4_149, %c0_150], %170 {strides = array<i32>} : memref<26x128xf32, #tpu.memory_space<vmem>>, vector<18x128xf32>,
    %c0_151 = arith.constant 0 : index
    %c0_152 = arith.constant 0 : index
    %172 = vector.load %arg13[%c0_151, %c0_152] : memref<26x128xf32, #tpu.memory_space<vmem>>, vector<19x128xf32>
    %c0_153 = arith.constant 0 : index
    %c0_154 = arith.constant 0 : index
    %c0_155 = arith.constant 0 : index
    %173 = vector.load %arg8[%c0_153, %c0_154, %c0_155] : memref<8x128x128xf32, #tpu.memory_space<vmem>>, vector<1x128x128xf32>
    %174 = vector.shape_cast %173 : vector<1x128x128xf32> to vector<128x128xf32>
    %cst_156 = arith.constant dense<0.000000e+00> : vector<19x128xf32>
    %175 = tpu.matmul %172, %174, %cst_156 {dimension_numbers = #tpu.dot_dimension_numbers<[1], [0], [0], [1], [0, 0, 1, 1], [], []>} : vector<19x128xf32>, vector<128x128xf32>, vector<19x128xf32> -> vector<19x128xf32>
    %c1_157 = arith.constant 1 : index
    %c0_158 = arith.constant 0 : index
    %176 = vector.load %arg13[%c1_157, %c0_158] : memref<26x128xf32, #tpu.memory_space<vmem>>, vector<19x128xf32>
    %c1_159 = arith.constant 1 : index
    %c0_160 = arith.constant 0 : index
    %c0_161 = arith.constant 0 : index
    %177 = vector.load %arg8[%c1_159, %c0_160, %c0_161] : memref<8x128x128xf32, #tpu.memory_space<vmem>>, vector<1x128x128xf32>
    %178 = vector.shape_cast %177 : vector<1x128x128xf32> to vector<128x128xf32>
    %cst_162 = arith.constant dense<0.000000e+00> : vector<19x128xf32>
    %179 = tpu.matmul %176, %178, %cst_162 {dimension_numbers = #tpu.dot_dimension_numbers<[1], [0], [0], [1], [0, 0, 1, 1], [], []>} : vector<19x128xf32>, vector<128x128xf32>, vector<19x128xf32> -> vector<19x128xf32>
    %180 = arith.addf %175, %179 : vector<19x128xf32>
    %c2_163 = arith.constant 2 : index
    %c0_164 = arith.constant 0 : index
    %181 = vector.load %arg13[%c2_163, %c0_164] : memref<26x128xf32, #tpu.memory_space<vmem>>, vector<19x128xf32>
    %c2_165 = arith.constant 2 : index
    %c0_166 = arith.constant 0 : index
    %c0_167 = arith.constant 0 : index
    %182 = vector.load %arg8[%c2_165, %c0_166, %c0_167] : memref<8x128x128xf32, #tpu.memory_space<vmem>>, vector<1x128x128xf32>
    %183 = vector.shape_cast %182 : vector<1x128x128xf32> to vector<128x128xf32>
    %cst_168 = arith.constant dense<0.000000e+00> : vector<19x128xf32>
    %184 = tpu.matmul %181, %183, %cst_168 {dimension_numbers = #tpu.dot_dimension_numbers<[1], [0], [0], [1], [0, 0, 1, 1], [], []>} : vector<19x128xf32>, vector<128x128xf32>, vector<19x128xf32> -> vector<19x128xf32>
    %185 = arith.addf %180, %184 : vector<19x128xf32>
    %c3_169 = arith.constant 3 : index
    %c0_170 = arith.constant 0 : index
    %186 = vector.load %arg13[%c3_169, %c0_170] : memref<26x128xf32, #tpu.memory_space<vmem>>, vector<19x128xf32>
    %c3_171 = arith.constant 3 : index
    %c0_172 = arith.constant 0 : index
    %c0_173 = arith.constant 0 : index
    %187 = vector.load %arg8[%c3_171, %c0_172, %c0_173] : memref<8x128x128xf32, #tpu.memory_space<vmem>>, vector<1x128x128xf32>
    %188 = vector.shape_cast %187 : vector<1x128x128xf32> to vector<128x128xf32>
    %cst_174 = arith.constant dense<0.000000e+00> : vector<19x128xf32>
    %189 = tpu.matmul %186, %188, %cst_174 {dimension_numbers = #tpu.dot_dimension_numbers<[1], [0], [0], [1], [0, 0, 1, 1], [], []>} : vector<19x128xf32>, vector<128x128xf32>, vector<19x128xf32> -> vector<19x128xf32>
    %190 = arith.addf %185, %189 : vector<19x128xf32>
    %c4_175 = arith.constant 4 : index
    %c0_176 = arith.constant 0 : index
    %191 = vector.load %arg13[%c4_175, %c0_176] : memref<26x128xf32, #tpu.memory_space<vmem>>, vector<19x128xf32>
    %c4_177 = arith.constant 4 : index
    %c0_178 = arith.constant 0 : index
    %c0_179 = arith.constant 0 : index
    %192 = vector.load %arg8[%c4_177, %c0_178, %c0_179] : memref<8x128x128xf32, #tpu.memory_space<vmem>>, vector<1x128x128xf32>
    %193 = vector.shape_cast %192 : vector<1x128x128xf32> to vector<128x128xf32>
    %cst_180 = arith.constant dense<0.000000e+00> : vector<19x128xf32>
    %194 = tpu.matmul %191, %193, %cst_180 {dimension_numbers = #tpu.dot_dimension_numbers<[1], [0], [0], [1], [0, 0, 1, 1], [], []>} : vector<19x128xf32>, vector<128x128xf32>, vector<19x128xf32> -> vector<19x128xf32>
    %195 = arith.addf %190, %194 : vector<19x128xf32>
    %c5_181 = arith.constant 5 : index
    %c0_182 = arith.constant 0 : index
    %196 = vector.load %arg13[%c5_181, %c0_182] : memref<26x128xf32, #tpu.memory_space<vmem>>, vector<19x128xf32>
    %c5_183 = arith.constant 5 : index
    %c0_184 = arith.constant 0 : index
    %c0_185 = arith.constant 0 : index
    %197 = vector.load %arg8[%c5_183, %c0_184, %c0_185] : memref<8x128x128xf32, #tpu.memory_space<vmem>>, vector<1x128x128xf32>
    %198 = vector.shape_cast %197 : vector<1x128x128xf32> to vector<128x128xf32>
    %cst_186 = arith.constant dense<0.000000e+00> : vector<19x128xf32>
    %199 = tpu.matmul %196, %198, %cst_186 {dimension_numbers = #tpu.dot_dimension_numbers<[1], [0], [0], [1], [0, 0, 1, 1], [], []>} : vector<19x128xf32>, vector<128x128xf32>, vector<19x128xf32> -> vector<19x128xf32>
    %200 = arith.addf %195, %199 : vector<19x128xf32>
    %c6_187 = arith.constant 6 : index
    %c0_188 = arith.constant 0 : index
    %201 = vector.load %arg13[%c6_187, %c0_188] : memref<26x128xf32, #tpu.memory_space<vmem>>, vector<19x128xf32>
    %c6_189 = arith.constant 6 : index
    %c0_190 = arith.constant 0 : index
    %c0_191 = arith.constant 0 : index
    %202 = vector.load %arg8[%c6_189, %c0_190, %c0_191] : memref<8x128x128xf32, #tpu.memory_space<vmem>>, vector<1x128x128xf32>
    %203 = vector.shape_cast %202 : vector<1x128x128xf32> to vector<128x128xf32>
    %cst_192 = arith.constant dense<0.000000e+00> : vector<19x128xf32>
    %204 = tpu.matmul %201, %203, %cst_192 {dimension_numbers = #tpu.dot_dimension_numbers<[1], [0], [0], [1], [0, 0, 1, 1], [], []>} : vector<19x128xf32>, vector<128x128xf32>, vector<19x128xf32> -> vector<19x128xf32>
    %205 = arith.addf %200, %204 : vector<19x128xf32>
    %c7_193 = arith.constant 7 : index
    %c0_194 = arith.constant 0 : index
    %206 = vector.load %arg13[%c7_193, %c0_194] : memref<26x128xf32, #tpu.memory_space<vmem>>, vector<19x128xf32>
    %c7_195 = arith.constant 7 : index
    %c0_196 = arith.constant 0 : index
    %c0_197 = arith.constant 0 : index
    %207 = vector.load %arg8[%c7_195, %c0_196, %c0_197] : memref<8x128x128xf32, #tpu.memory_space<vmem>>, vector<1x128x128xf32>
    %208 = vector.shape_cast %207 : vector<1x128x128xf32> to vector<128x128xf32>
    %cst_198 = arith.constant dense<0.000000e+00> : vector<19x128xf32>
    %209 = tpu.matmul %206, %208, %cst_198 {dimension_numbers = #tpu.dot_dimension_numbers<[1], [0], [0], [1], [0, 0, 1, 1], [], []>} : vector<19x128xf32>, vector<128x128xf32>, vector<19x128xf32> -> vector<19x128xf32>
    %210 = arith.addf %205, %209 : vector<19x128xf32>
    %c0_199 = arith.constant 0 : index
    %c0_200 = arith.constant 0 : index
    %211 = vector.load %arg9[%c0_199, %c0_200] : memref<1x128xf32, #tpu.memory_space<vmem>>, vector<1x128xf32>
    %212 = vector.broadcast %211 : vector<1x128xf32> to vector<19x128xf32>
    %213 = arith.addf %210, %212 : vector<19x128xf32>
    %cst_201 = arith.constant 0.00999999977 : f32
    %214 = vector.broadcast %cst_201 : f32 to vector<19x128xf32>
    %215 = arith.mulf %214, %213 : vector<19x128xf32>
    %216 = arith.maximumf %213, %215 : vector<19x128xf32>
    %217 = vector.extract_strided_slice %216 {offsets = [0, 0], sizes = [2, 128], strides = [1, 1]} : vector<19x128xf32> to vector<2x128xf32>
    %cst_202 = arith.constant dense<0xFF800000> : vector<128xf32>
    %218 = vector.multi_reduction <maximumf>, %217, %cst_202 [0] : vector<2x128xf32> to vector<128xf32>
    %219 = vector.shape_cast %218 : vector<128xf32> to vector<1x128xf32>
    %c0_203 = arith.constant 0 : index
    %c0_204 = arith.constant 0 : index
    %c0_205 = arith.constant 0 : index
    %220 = vector.load %arg10[%c0_203, %c0_204, %c0_205] : memref<1x5x128xf32, #tpu.memory_space<vmem>>, vector<1x1x128xf32>
    %221 = vector.shape_cast %220 : vector<1x1x128xf32> to vector<1x128xf32>
    %222 = vector.shape_cast %219 : vector<1x128xf32> to vector<1x1x128xf32>
    tpu.vector_store %arg10[%c0_203, %c0_204, %c0_205], %222 {strides = array<i32>} : memref<1x5x128xf32, #tpu.memory_space<vmem>>, vector<1x1x128xf32>,
    %223 = vector.extract_strided_slice %216 {offsets = [2, 0], sizes = [4, 128], strides = [1, 1]} : vector<19x128xf32> to vector<4x128xf32>
    %cst_206 = arith.constant dense<0xFF800000> : vector<128xf32>
    %224 = vector.multi_reduction <maximumf>, %223, %cst_206 [0] : vector<4x128xf32> to vector<128xf32>
    %225 = vector.shape_cast %224 : vector<128xf32> to vector<1x128xf32>
    %c0_207 = arith.constant 0 : index
    %c1_208 = arith.constant 1 : index
    %c0_209 = arith.constant 0 : index
    %226 = vector.load %arg10[%c0_207, %c1_208, %c0_209] : memref<1x5x128xf32, #tpu.memory_space<vmem>>, vector<1x1x128xf32>
    %227 = vector.shape_cast %226 : vector<1x1x128xf32> to vector<1x128xf32>
    %228 = vector.shape_cast %225 : vector<1x128xf32> to vector<1x1x128xf32>
    tpu.vector_store %arg10[%c0_207, %c1_208, %c0_209], %228 {strides = array<i32>} : memref<1x5x128xf32, #tpu.memory_space<vmem>>, vector<1x1x128xf32>,
    %229 = vector.extract_strided_slice %216 {offsets = [6, 0], sizes = [4, 128], strides = [1, 1]} : vector<19x128xf32> to vector<4x128xf32>
    %cst_210 = arith.constant dense<0xFF800000> : vector<128xf32>
    %230 = vector.multi_reduction <maximumf>, %229, %cst_210 [0] : vector<4x128xf32> to vector<128xf32>
    %231 = vector.shape_cast %230 : vector<128xf32> to vector<1x128xf32>
    %c0_211 = arith.constant 0 : index
    %c2_212 = arith.constant 2 : index
    %c0_213 = arith.constant 0 : index
    %232 = vector.load %arg10[%c0_211, %c2_212, %c0_213] : memref<1x5x128xf32, #tpu.memory_space<vmem>>, vector<1x1x128xf32>
    %233 = vector.shape_cast %232 : vector<1x1x128xf32> to vector<1x128xf32>
    %234 = vector.shape_cast %231 : vector<1x128xf32> to vector<1x1x128xf32>
    tpu.vector_store %arg10[%c0_211, %c2_212, %c0_213], %234 {strides = array<i32>} : memref<1x5x128xf32, #tpu.memory_space<vmem>>, vector<1x1x128xf32>,
    %235 = vector.extract_strided_slice %216 {offsets = [10, 0], sizes = [4, 128], strides = [1, 1]} : vector<19x128xf32> to vector<4x128xf32>
    %cst_214 = arith.constant dense<0xFF800000> : vector<128xf32>
    %236 = vector.multi_reduction <maximumf>, %235, %cst_214 [0] : vector<4x128xf32> to vector<128xf32>
    %237 = vector.shape_cast %236 : vector<128xf32> to vector<1x128xf32>
    %c0_215 = arith.constant 0 : index
    %c3_216 = arith.constant 3 : index
    %c0_217 = arith.constant 0 : index
    %238 = vector.load %arg10[%c0_215, %c3_216, %c0_217] : memref<1x5x128xf32, #tpu.memory_space<vmem>>, vector<1x1x128xf32>
    %239 = vector.shape_cast %238 : vector<1x1x128xf32> to vector<1x128xf32>
    %240 = vector.shape_cast %237 : vector<1x128xf32> to vector<1x1x128xf32>
    tpu.vector_store %arg10[%c0_215, %c3_216, %c0_217], %240 {strides = array<i32>} : memref<1x5x128xf32, #tpu.memory_space<vmem>>, vector<1x1x128xf32>,
    %241 = vector.extract_strided_slice %216 {offsets = [14, 0], sizes = [4, 128], strides = [1, 1]} : vector<19x128xf32> to vector<4x128xf32>
    %cst_218 = arith.constant dense<0xFF800000> : vector<128xf32>
    %242 = vector.multi_reduction <maximumf>, %241, %cst_218 [0] : vector<4x128xf32> to vector<128xf32>
    %243 = vector.shape_cast %242 : vector<128xf32> to vector<1x128xf32>
    %c0_219 = arith.constant 0 : index
    %c4_220 = arith.constant 4 : index
    %c0_221 = arith.constant 0 : index
    %244 = vector.load %arg10[%c0_219, %c4_220, %c0_221] : memref<1x5x128xf32, #tpu.memory_space<vmem>>, vector<1x1x128xf32>
    %245 = vector.shape_cast %244 : vector<1x1x128xf32> to vector<1x128xf32>
    %246 = vector.shape_cast %243 : vector<1x128xf32> to vector<1x1x128xf32>
    tpu.vector_store %arg10[%c0_219, %c4_220, %c0_221], %246 {strides = array<i32>} : memref<1x5x128xf32, #tpu.memory_space<vmem>>, vector<1x1x128xf32>,
    return
  }
  func.func @transform_0(%arg0: i32) -> (i32, i32, i32) {
    %c0_i32 = arith.constant 0 : i32
    %c0_i32_0 = arith.constant 0 : i32
    %c0_i32_1 = arith.constant 0 : i32
    return %arg0, %c0_i32, %c0_i32_0 : i32, i32, i32
  }
  func.func @transform_1(%arg0: i32) -> (i32, i32) {
    %c0_i32 = arith.constant 0 : i32
    %c0_i32_0 = arith.constant 0 : i32
    %c0_i32_1 = arith.constant 0 : i32
    return %c0_i32, %c0_i32_0 : i32, i32
  }
  func.func @transform_2(%arg0: i32) -> (i32, i32) {
    %c0_i32 = arith.constant 0 : i32
    %c0_i32_0 = arith.constant 0 : i32
    %c0_i32_1 = arith.constant 0 : i32
    return %c0_i32, %c0_i32_0 : i32, i32
  }
  func.func @transform_3(%arg0: i32) -> (i32, i32, i32) {
    %c0_i32 = arith.constant 0 : i32
    %c0_i32_0 = arith.constant 0 : i32
    %c0_i32_1 = arith.constant 0 : i32
    %c0_i32_2 = arith.constant 0 : i32
    return %c0_i32, %c0_i32_0, %c0_i32_1 : i32, i32, i32
  }
  func.func @transform_4(%arg0: i32) -> (i32, i32) {
    %c0_i32 = arith.constant 0 : i32
    %c0_i32_0 = arith.constant 0 : i32
    %c0_i32_1 = arith.constant 0 : i32
    return %c0_i32, %c0_i32_0 : i32, i32
  }
  func.func @transform_5(%arg0: i32) -> (i32, i32, i32) {
    %c0_i32 = arith.constant 0 : i32
    %c0_i32_0 = arith.constant 0 : i32
    %c0_i32_1 = arith.constant 0 : i32
    %c0_i32_2 = arith.constant 0 : i32
    return %c0_i32, %c0_i32_0, %c0_i32_1 : i32, i32, i32
  }
  func.func @transform_6(%arg0: i32) -> (i32, i32) {
    %c0_i32 = arith.constant 0 : i32
    %c0_i32_0 = arith.constant 0 : i32
    %c0_i32_1 = arith.constant 0 : i32
    return %c0_i32, %c0_i32_0 : i32, i32
  }
  func.func @transform_7(%arg0: i32) -> (i32, i32, i32) {
    %c0_i32 = arith.constant 0 : i32
    %c0_i32_0 = arith.constant 0 : i32
    %c0_i32_1 = arith.constant 0 : i32
    %c0_i32_2 = arith.constant 0 : i32
    return %c0_i32, %c0_i32_0, %c0_i32_1 : i32, i32, i32
  }
  func.func @transform_8(%arg0: i32) -> (i32, i32) {
    %c0_i32 = arith.constant 0 : i32
    %c0_i32_0 = arith.constant 0 : i32
    %c0_i32_1 = arith.constant 0 : i32
    return %c0_i32, %c0_i32_0 : i32, i32
  }
  func.func @transform_9(%arg0: i32) -> (i32, i32, i32) {
    %c0_i32 = arith.constant 0 : i32
    %c0_i32_0 = arith.constant 0 : i32
    %c0_i32_1 = arith.constant 0 : i32
    return %arg0, %c0_i32, %c0_i32_0 : i32, i32, i32
  }
}

</mosaic_0001>

<llo_original>
// kernel: temporal_feature_eeg.3
$region0: #{temporal_feature_eeg.3}
  #allocation0 [shape = 'u32[]', space=smem, size = 0x4, offset = 0x4, fixed_abs, tag = 'smem constant byte address 0x4 - core index']
  #allocation1 [shape = 'u32[72,128]{1,0:T(1,128)}', space=vmem, size = 0x9000, scoped, tag = 'internal scratch']
  #allocation2 [shape = 'f32[11,128]{1,0:T(8,128)}', space=vmem, size = 0x2000, scoped, tag = 'scratch operand']
  #allocation3 [shape = 'f32[14,128]{1,0:T(8,128)}', space=vmem, size = 0x2000, scoped, tag = 'scratch operand']
  #allocation4 [shape = 'f32[17,128]{1,0:T(8,128)}', space=vmem, size = 0x3000, scoped, tag = 'scratch operand']
  %s0 = inlined_call_operand.vmem [shape: bf16[2,9,1024], index: 0, kind: input, shape index: {}]
  %s1 = inlined_call_operand.vmem [shape: bf16[1024,128], index: 1, kind: input, shape index: {}]
  %s2 = inlined_call_operand.vmem [shape: f32[1,128], index: 2, kind: input, shape index: {}]
  %s3 = inlined_call_operand.vmem [shape: f32[6,128,128], index: 3, kind: input, shape index: {}]
  %s4 = inlined_call_operand.vmem [shape: f32[1,128], index: 4, kind: input, shape index: {}]
  %s5 = inlined_call_operand.vmem [shape: f32[6,128,128], index: 5, kind: input, shape index: {}]
  %s6 = inlined_call_operand.vmem [shape: f32[1,128], index: 6, kind: input, shape index: {}]
  %s7 = inlined_call_operand.vmem [shape: f32[6,128,128], index: 7, kind: input, shape index: {}]
  %s8 = inlined_call_operand.vmem [shape: f32[1,128], index: 8, kind: input, shape index: {}]
  %s9 = inlined_call_operand.vmem [shape: f32[2,7,128], index: 9, kind: output, shape index: {}]
  %s10 = sld [smem:[#allocation0]]
  $region69: #{temporal_feature_eeg.3} parent=0
    _
  %s12 = ssub.s32 1, %s10
  %s13 = scalar_select 0, %s12, %s10
  loop: start=0, step=1, limit=4
  $region2: #{temporal_feature_eeg.3} parent=0 // loop_pre_header
    _
  $region3: #{temporal_feature_eeg.3} parent=0 // loop_header
    %s15 = sphi 0, %s19
    %p16 = scmp.ge.s32.totalorder %s15, 4
    %s25 = sphi 0, %s27
    %s28 = sphi 0, %s25
    %s29 = sphi 0, %s28
    %s45 = sphi 0, %s29
    %s49 = sphi 0, %s49
    %s51 = sphi 0, %s49
    %s52 = sphi 0, %s51
    %s66 = sphi 0, %s52
    %s70 = sphi 0, %s70
    %s72 = sphi 0, %s70
    %s73 = sphi 0, %s72
    %s87 = sphi 0, %s73
    %s91 = sphi 0, %s91
    %s93 = sphi 0, %s91
    %s94 = sphi 0, %s93
    %s108 = sphi 0, %s94
    %s112 = sphi 0, %s112
    %s114 = sphi 0, %s112
    %s115 = sphi 0, %s114
    %s129 = sphi 0, %s115
    %s133 = sphi 0, %s133
    %s135 = sphi 0, %s133
    %s136 = sphi 0, %s135
    %s150 = sphi 0, %s136
    %s154 = sphi 0, %s154
    %s156 = sphi 0, %s154
    %s157 = sphi 0, %s156
    %s171 = sphi 0, %s157
    %s175 = sphi 0, %s175
    %s177 = sphi 0, %s175
    %s178 = sphi 0, %s177
    %s192 = sphi 0, %s178
    %s196 = sphi 0, %s196
    %s198 = sphi 0, %s196
    %s199 = sphi 0, %s198
    %s213 = sphi 0, %s199
    %s219 = sphi 0, %s221
    %s222 = sphi 0, %s219
    %s223 = sphi 0, %s222
    %s239 = sphi 0, %s223
  $region4: #{temporal_feature_eeg.3} parent=0 // loop_header_branch
    %18 = sbr.rel (%p16) target = $region8
  $region5: #{temporal_feature_eeg.3} parent=0 // loop_body
    %s20 = ssub.s32 %s15, 1
    %s21 = ssub.s32 %s15, 2
    %s22 = sadd.s32 %s15, 1
    %s23 = ssub.s32 %s15, %s22
    %p24 = scmp.eq.s32.totalorder %s23, 0
    %s26 = sadd.s32 %s25, 1
    %s27 = scalar_select %p24, %s25, %s26
    %p30 = pneg %p24
    %p31 = scmp.eq.s32.totalorder %s15, 1
    %p32 = por %p30, %p31
    %p33 = scmp.ne.s32.totalorder %s25, %s28
    %p34 = scmp.eq.s32.totalorder %s15, 0
    %p35 = por %p33, %p34
    %p36 = scmp.ne.s32.totalorder %s25, %s28
    %p37 = scmp.eq.s32.totalorder %s20, 1
    %p38 = por %p36, %p37
    %p39 = scmp.ne.s32.totalorder %s28, %s29
    %p40 = scmp.eq.s32.totalorder %s20, 0
    %p41 = por %p39, %p40
    %p42 = scmp.ne.s32.totalorder %s28, %s29
    %p43 = scmp.eq.s32.totalorder %s21, 1
    %p44 = por %p42, %p43
    %p46 = scmp.ne.s32.totalorder %s29, %s45
    %p47 = scmp.eq.s32.totalorder %s21, 0
    %p48 = por %p46, %p47
    %s50 = sadd.s32 %s49, 1
    %p53 = scmp.eq.s32.totalorder %s15, 1
    %p54 = scmp.ne.s32.totalorder %s49, %s51
    %p55 = scmp.eq.s32.totalorder %s15, 0
    %p56 = por %p54, %p55
    %p57 = scmp.ne.s32.totalorder %s49, %s51
    %p58 = scmp.eq.s32.totalorder %s20, 1
    %p59 = por %p57, %p58
    %p60 = scmp.ne.s32.totalorder %s51, %s52
    %p61 = scmp.eq.s32.totalorder %s20, 0
    %p62 = por %p60, %p61
    %p63 = scmp.ne.s32.totalorder %s51, %s52
    %p64 = scmp.eq.s32.totalorder %s21, 1
    %p65 = por %p63, %p64
    %p67 = scmp.ne.s32.totalorder %s52, %s66
    %p68 = scmp.eq.s32.totalorder %s21, 0
    %p69 = por %p67, %p68
    %s71 = sadd.s32 %s70, 1
    %p74 = scmp.eq.s32.totalorder %s15, 1
    %p75 = scmp.ne.s32.totalorder %s70, %s72
    %p76 = scmp.eq.s32.totalorder %s15, 0
    %p77 = por %p75, %p76
    %p78 = scmp.ne.s32.totalorder %s70, %s72
    %p79 = scmp.eq.s32.totalorder %s20, 1
    %p80 = por %p78, %p79
    %p81 = scmp.ne.s32.totalorder %s72, %s73
    %p82 = scmp.eq.s32.totalorder %s20, 0
    %p83 = por %p81, %p82
    %p84 = scmp.ne.s32.totalorder %s72, %s73
    %p85 = scmp.eq.s32.totalorder %s21, 1
    %p86 = por %p84, %p85
    %p88 = scmp.ne.s32.totalorder %s73, %s87
    %p89 = scmp.eq.s32.totalorder %s21, 0
    %p90 = por %p88, %p89
    %s92 = sadd.s32 %s91, 1
    %p95 = scmp.eq.s32.totalorder %s15, 1
    %p96 = scmp.ne.s32.totalorder %s91, %s93
    %p97 = scmp.eq.s32.totalorder %s15, 0
    %p98 = por %p96, %p97
    %p99 = scmp.ne.s32.totalorder %s91, %s93
    %p100 = scmp.eq.s32.totalorder %s20, 1
    %p101 = por %p99, %p100
    %p102 = scmp.ne.s32.totalorder %s93, %s94
    %p103 = scmp.eq.s32.totalorder %s20, 0
    %p104 = por %p102, %p103
    %p105 = scmp.ne.s32.totalorder %s93, %s94
    %p106 = scmp.eq.s32.totalorder %s21, 1
    %p107 = por %p105, %p106
    %p109 = scmp.ne.s32.totalorder %s94, %s108
    %p110 = scmp.eq.s32.totalorder %s21, 0
    %p111 = por %p109, %p110
    %s113 = sadd.s32 %s112, 1
    %p116 = scmp.eq.s32.totalorder %s15, 1
    %p117 = scmp.ne.s32.totalorder %s112, %s114
    %p118 = scmp.eq.s32.totalorder %s15, 0
    %p119 = por %p117, %p118
    %p120 = scmp.ne.s32.totalorder %s112, %s114
    %p121 = scmp.eq.s32.totalorder %s20, 1
    %p122 = por %p120, %p121
    %p123 = scmp.ne.s32.totalorder %s114, %s115
    %p124 = scmp.eq.s32.totalorder %s20, 0
    %p125 = por %p123, %p124
    %p126 = scmp.ne.s32.totalorder %s114, %s115
    %p127 = scmp.eq.s32.totalorder %s21, 1
    %p128 = por %p126, %p127
    %p130 = scmp.ne.s32.totalorder %s115, %s129
    %p131 = scmp.eq.s32.totalorder %s21, 0
    %p132 = por %p130, %p131
    %s134 = sadd.s32 %s133, 1
    %p137 = scmp.eq.s32.totalorder %s15, 1
    %p138 = scmp.ne.s32.totalorder %s133, %s135
    %p139 = scmp.eq.s32.totalorder %s15, 0
    %p140 = por %p138, %p139
    %p141 = scmp.ne.s32.totalorder %s133, %s135
    %p142 = scmp.eq.s32.totalorder %s20, 1
    %p143 = por %p141, %p142
    %p144 = scmp.ne.s32.totalorder %s135, %s136
    %p145 = scmp.eq.s32.totalorder %s20, 0
    %p146 = por %p144, %p145
    %p147 = scmp.ne.s32.totalorder %s135, %s136
    %p148 = scmp.eq.s32.totalorder %s21, 1
    %p149 = por %p147, %p148
    %p151 = scmp.ne.s32.totalorder %s136, %s150
    %p152 = scmp.eq.s32.totalorder %s21, 0
    %p153 = por %p151, %p152
    %s155 = sadd.s32 %s154, 1
    %p158 = scmp.eq.s32.totalorder %s15, 1
    %p159 = scmp.ne.s32.totalorder %s154, %s156
    %p160 = scmp.eq.s32.totalorder %s15, 0
    %p161 = por %p159, %p160
    %p162 = scmp.ne.s32.totalorder %s154, %s156
    %p163 = scmp.eq.s32.totalorder %s20, 1
    %p164 = por %p162, %p163
    %p165 = scmp.ne.s32.totalorder %s156, %s157
    %p166 = scmp.eq.s32.totalorder %s20, 0
    %p167 = por %p165, %p166
    %p168 = scmp.ne.s32.totalorder %s156, %s157
    %p169 = scmp.eq.s32.totalorder %s21, 1
    %p170 = por %p168, %p169
    %p172 = scmp.ne.s32.totalorder %s157, %s171
    %p173 = scmp.eq.s32.totalorder %s21, 0
    %p174 = por %p172, %p173
    %s176 = sadd.s32 %s175, 1
    %p179 = scmp.eq.s32.totalorder %s15, 1
    %p180 = scmp.ne.s32.totalorder %s175, %s177
    %p181 = scmp.eq.s32.totalorder %s15, 0
    %p182 = por %p180, %p181
    %p183 = scmp.ne.s32.totalorder %s175, %s177
    %p184 = scmp.eq.s32.totalorder %s20, 1
    %p185 = por %p183, %p184
    %p186 = scmp.ne.s32.totalorder %s177, %s178
    %p187 = scmp.eq.s32.totalorder %s20, 0
    %p188 = por %p186, %p187
    %p189 = scmp.ne.s32.totalorder %s177, %s178
    %p190 = scmp.eq.s32.totalorder %s21, 1
    %p191 = por %p189, %p190
    %p193 = scmp.ne.s32.totalorder %s178, %s192
    %p194 = scmp.eq.s32.totalorder %s21, 0
    %p195 = por %p193, %p194
    %s197 = sadd.s32 %s196, 1
    %p200 = scmp.eq.s32.totalorder %s15, 1
    %p201 = scmp.ne.s32.totalorder %s196, %s198
    %p202 = scmp.eq.s32.totalorder %s15, 0
    %p203 = por %p201, %p202
    %p204 = scmp.ne.s32.totalorder %s196, %s198
    %p205 = scmp.eq.s32.totalorder %s20, 1
    %p206 = por %p204, %p205
    %p207 = scmp.ne.s32.totalorder %s198, %s199
    %p208 = scmp.eq.s32.totalorder %s20, 0
    %p209 = por %p207, %p208
    %p210 = scmp.ne.s32.totalorder %s198, %s199
    %p211 = scmp.eq.s32.totalorder %s21, 1
    %p212 = por %p210, %p211
    %p214 = scmp.ne.s32.totalorder %s199, %s213
    %p215 = scmp.eq.s32.totalorder %s21, 0
    %p216 = por %p214, %p215
    %s217 = ssub.s32 %s15, %s22
    %p218 = scmp.eq.s32.totalorder %s217, 0
    %s220 = sadd.s32 %s219, 1
    %s221 = scalar_select %p218, %s219, %s220
    %p224 = pneg %p218
    %p225 = scmp.eq.s32.totalorder %s15, 1
    %p226 = por %p224, %p225
    %p227 = scmp.ne.s32.totalorder %s219, %s222
    %p228 = scmp.eq.s32.totalorder %s15, 0
    %p229 = por %p227, %p228
    %p230 = scmp.ne.s32.totalorder %s219, %s222
    %p231 = scmp.eq.s32.totalorder %s20, 1
    %p232 = por %p230, %p231
    %p233 = scmp.ne.s32.totalorder %s222, %s223
    %p234 = scmp.eq.s32.totalorder %s20, 0
    %p235 = por %p233, %p234
    %p236 = scmp.ne.s32.totalorder %s222, %s223
    %p237 = scmp.eq.s32.totalorder %s21, 1
    %p238 = por %p236, %p237
    %p240 = scmp.ne.s32.totalorder %s223, %s239
    %p241 = scmp.eq.s32.totalorder %s21, 0
    %p242 = por %p240, %p241
    %p243 = scmp.le.s32.totalorder 1, %s15
    %p244 = scmp.lt.s32.totalorder %s15, 3
    %p245 = pnand %p243, %p244
    %p246 = pneg %p245
    // Predicated region
    $region9: #{temporal_feature_eeg.3} parent=5 // pred_check
      _
    $region10: #{temporal_feature_eeg.3} parent=5 // pred_check_branch
      %248 = sbr.rel (%p245) target = $region12
    $region11: #{temporal_feature_eeg.3} parent=5 // pred_region
      %s249 = ssub.s32 %s15, 1
      // Predicated region
      $region13: #{temporal_feature_eeg.3} parent=11 // pred_check
        %p250 = pneg %p62
      $region14: #{temporal_feature_eeg.3} parent=11 // pred_check_branch
        %252 = sbr.rel (%p250) target = $region16
      $region15: #{temporal_feature_eeg.3} parent=11 // pred_region
        _
      $region16: #{temporal_feature_eeg.3} parent=11 // pred_fallthru
        _
      // Predicated region
      $region17: #{temporal_feature_eeg.3} parent=11 // pred_check
        %p253 = pneg %p83
      $region18: #{temporal_feature_eeg.3} parent=11 // pred_check_branch
        %255 = sbr.rel (%p253) target = $region20
      $region19: #{temporal_feature_eeg.3} parent=11 // pred_region
        _
      $region20: #{temporal_feature_eeg.3} parent=11 // pred_fallthru
        _
      // Predicated region
      $region21: #{temporal_feature_eeg.3} parent=11 // pred_check
        %p256 = pneg %p104
      $region22: #{temporal_feature_eeg.3} parent=11 // pred_check_branch
        %258 = sbr.rel (%p256) target = $region24
      $region23: #{temporal_feature_eeg.3} parent=11 // pred_region
        _
      $region24: #{temporal_feature_eeg.3} parent=11 // pred_fallthru
        _
      // Predicated region
      $region25: #{temporal_feature_eeg.3} parent=11 // pred_check
        %p259 = pneg %p125
      $region26: #{temporal_feature_eeg.3} parent=11 // pred_check_branch
        %261 = sbr.rel (%p259) target = $region28
      $region27: #{temporal_feature_eeg.3} parent=11 // pred_region
        _
      $region28: #{temporal_feature_eeg.3} parent=11 // pred_fallthru
        _
      // Predicated region
      $region29: #{temporal_feature_eeg.3} parent=11 // pred_check
        %p262 = pneg %p146
      $region30: #{temporal_feature_eeg.3} parent=11 // pred_check_branch
        %264 = sbr.rel (%p262) target = $region32
      $region31: #{temporal_feature_eeg.3} parent=11 // pred_region
        _
      $region32: #{temporal_feature_eeg.3} parent=11 // pred_fallthru
        _
      // Predicated region
      $region33: #{temporal_feature_eeg.3} parent=11 // pred_check
        %p265 = pneg %p167
      $region34: #{temporal_feature_eeg.3} parent=11 // pred_check_branch
        %267 = sbr.rel (%p265) target = $region36
      $region35: #{temporal_feature_eeg.3} parent=11 // pred_region
        _
      $region36: #{temporal_feature_eeg.3} parent=11 // pred_fallthru
        _
      // Predicated region
      $region37: #{temporal_feature_eeg.3} parent=11 // pred_check
        %p268 = pneg %p188
      $region38: #{temporal_feature_eeg.3} parent=11 // pred_check_branch
        %270 = sbr.rel (%p268) target = $region40
      $region39: #{temporal_feature_eeg.3} parent=11 // pred_region
        _
      $region40: #{temporal_feature_eeg.3} parent=11 // pred_fallthru
        _
      // Predicated region
      $region41: #{temporal_feature_eeg.3} parent=11 // pred_check
        %p271 = pneg %p209
      $region42: #{temporal_feature_eeg.3} parent=11 // pred_check_branch
        %273 = sbr.rel (%p271) target = $region44
      $region43: #{temporal_feature_eeg.3} parent=11 // pred_region
        _
      $region44: #{temporal_feature_eeg.3} parent=11 // pred_fallthru
        _
    $region12: #{temporal_feature_eeg.3} parent=5 // pred_fallthru
      _
    %p274 = scmp.lt.s32.totalorder %s15, 2
    // Predicated region
    $region45: #{temporal_feature_eeg.3} parent=5 // pred_check
      %p275 = pneg %p274
    $region46: #{temporal_feature_eeg.3} parent=5 // pred_check_branch
      %277 = sbr.rel (%p275) target = $region48
    $region47: #{temporal_feature_eeg.3} parent=5 // pred_region
      // Predicated region
      $region49: #{temporal_feature_eeg.3} parent=47 // pred_check
        %p278 = pneg %p35
      $region50: #{temporal_feature_eeg.3} parent=47 // pred_check_branch
        %280 = sbr.rel (%p278) target = $region52
      $region51: #{temporal_feature_eeg.3} parent=47 // pred_region
        %p281 = scmp.lt.s32.totalorder %s15, 1
        %s282 = scalar_select %p281, %s15, 1
        %s283 = smul.addr %s282, 16
        %s284 = smul.addr %s283, 4
        %s285 = scalar_lea.vmem %s0, %s284
      $region52: #{temporal_feature_eeg.3} parent=47 // pred_fallthru
        _
    $region48: #{temporal_feature_eeg.3} parent=5 // pred_fallthru
      _
    %p286 = scmp.le.s32.totalorder 1, %s15
    %p287 = scmp.lt.s32.totalorder %s15, 3
    %p288 = pnand %p286, %p287
    %p289 = pneg %p288
    // Predicated region
    $region53: #{temporal_feature_eeg.3} parent=5 // pred_check
      _
    $region54: #{temporal_feature_eeg.3} parent=5 // pred_check_branch
      %291 = sbr.rel (%p288) target = $region56
    $region55: #{temporal_feature_eeg.3} parent=5 // pred_region
      %s292 = ssub.s32 %s15, 1
      %p293 = scmp.lt.s32.totalorder %s20, 1
      %s294 = scalar_select %p293, %s20, 1
      %s295 = smul.addr %s294, 16
      %s296 = smul.addr %s295, 4
      %s297 = scalar_lea.vmem %s0, %s296
      %p298 = pneg %p41
      %p299 = pneg %p38
      %p300 = pneg %p62
      %p301 = pneg %p59
      %p302 = pneg %p83
      %p303 = pneg %p80
      %p304 = pneg %p104
      %p305 = pneg %p101
      %p306 = pneg %p125
      %p307 = pneg %p122
      %p308 = pneg %p146
      %p309 = pneg %p143
      %p310 = pneg %p167
      %p311 = pneg %p164
      %p312 = pneg %p188
      %p313 = pneg %p185
      %p314 = pneg %p209
      %p315 = pneg %p206
      %p316 = pneg %p235
      %p317 = pneg %p232
      %p318 = scmp.lt.s32.totalorder %s20, 1
      %s319 = scalar_select %p318, %s20, 1
      %s320 = smul.addr %s319, 8
      %s321 = scalar_lea.vmem %s9, %s320
      %p322 = scmp.lt.s32.totalorder %s20, 1
      %s323 = scalar_select %p322, %s20, 1
      %s324 = smul.addr %s323, 16
      %s325 = smul.addr %s324, 4
      %s326 = scalar_lea.vmem %s0, %s325
      %p327 = scmp.lt.s32.totalorder %s20, 1
      %s328 = scalar_select %p327, %s20, 1
      %s329 = smul.addr %s328, 8
      %s330 = scalar_lea.vmem %s9, %s329
      %331 = vst [vmem:[#allocation2] sm:$0xff] 0.0
      %332 = vst [vmem:[#allocation2 + $0x8] sm:$0x7] 0.0
      %333 = vst [vmem:[#allocation3] sm:$0xff] 0.0
      %334 = vst [vmem:[#allocation3 + $0x8] sm:$0x3f] 0.0
      %335 = vst [vmem:[#allocation4] sm:$0xff] 0.0
      %336 = vst [vmem:[#allocation4 + $0x8] sm:$0xff] 0.0
      %337 = vst [vmem:[#allocation4 + $0x10] sm:$0x1] 0.0
      %v338 = vld [vmem:[%s326] sm:$0xff]
      %v339 = vld [vmem:[%s326 + $0x8] sm:$0xff]
      %v340 = vld [vmem:[%s326 + $0x10] sm:$0xff]
      %v341 = vld [vmem:[%s326 + $0x18] sm:$0xff]
      %v342 = vld [vmem:[%s326 + $0x20] sm:$0x11]
      %v343 = vld [vmem:[%s326 + $0x28] sm:$0x11]
      %v344 = vld [vmem:[%s326 + $0x30] sm:$0x11]
      %v345 = vld [vmem:[%s326 + $0x38] sm:$0x11]
      %v346 = vld [vmem:[%s1] sm:$0xf]
      %v347 = vld [vmem:[%s1 + $0x4] sm:$0xf]
      %v348 = vld [vmem:[%s1 + $0x8] sm:$0xf]
      %v349 = vld [vmem:[%s1 + $0xc] sm:$0xf]
      %v350 = vld [vmem:[%s1 + $0x10] sm:$0xf]
      %v351 = vld [vmem:[%s1 + $0x14] sm:$0xf]
      %v352 = vld [vmem:[%s1 + $0x18] sm:$0xf]
      %v353 = vld [vmem:[%s1 + $0x1c] sm:$0xf]
      %v354 = vld [vmem:[%s1 + $0x20] sm:$0xf]
      %v355 = vld [vmem:[%s1 + $0x24] sm:$0xf]
      %v356 = vld [vmem:[%s1 + $0x28] sm:$0xf]
      %v357 = vld [vmem:[%s1 + $0x2c] sm:$0xf]
      %v358 = vld [vmem:[%s1 + $0x30] sm:$0xf]
      %v359 = vld [vmem:[%s1 + $0x34] sm:$0xf]
      %v360 = vld [vmem:[%s1 + $0x38] sm:$0xf]
      %v361 = vld [vmem:[%s1 + $0x3c] sm:$0xf]
      %v362 = vld [vmem:[%s1 + $0x40] sm:$0xf]
      %v363 = vld [vmem:[%s1 + $0x44] sm:$0xf]
      %v364 = vld [vmem:[%s1 + $0x48] sm:$0xf]
      %v365 = vld [vmem:[%s1 + $0x4c] sm:$0xf]
      %v366 = vld [vmem:[%s1 + $0x50] sm:$0xf]
      %v367 = vld [vmem:[%s1 + $0x54] sm:$0xf]
      %v368 = vld [vmem:[%s1 + $0x58] sm:$0xf]
      %v369 = vld [vmem:[%s1 + $0x5c] sm:$0xf]
      %v370 = vld [vmem:[%s1 + $0x60] sm:$0xf]
      %v371 = vld [vmem:[%s1 + $0x64] sm:$0xf]
      %v372 = vld [vmem:[%s1 + $0x68] sm:$0xf]
      %v373 = vld [vmem:[%s1 + $0x6c] sm:$0xf]
      %v374 = vld [vmem:[%s1 + $0x70] sm:$0xf]
      %v375 = vld [vmem:[%s1 + $0x74] sm:$0xf]
      %v376 = vld [vmem:[%s1 + $0x78] sm:$0xf]
      %v377 = vld [vmem:[%s1 + $0x7c] sm:$0xf]
      %v378 = vld [vmem:[%s1 + $0x80] sm:$0xf]
      %v379 = vld [vmem:[%s1 + $0x84] sm:$0xf]
      %v380 = vld [vmem:[%s1 + $0x88] sm:$0xf]
      %v381 = vld [vmem:[%s1 + $0x8c] sm:$0xf]
      %v382 = vld [vmem:[%s1 + $0x90] sm:$0xf]
      %v383 = vld [vmem:[%s1 + $0x94] sm:$0xf]
      %v384 = vld [vmem:[%s1 + $0x98] sm:$0xf]
      %v385 = vld [vmem:[%s1 + $0x9c] sm:$0xf]
      %v386 = vld [vmem:[%s1 + $0xa0] sm:$0xf]
      %v387 = vld [vmem:[%s1 + $0xa4] sm:$0xf]
      %v388 = vld [vmem:[%s1 + $0xa8] sm:$0xf]
      %v389 = vld [vmem:[%s1 + $0xac] sm:$0xf]
      %v390 = vld [vmem:[%s1 + $0xb0] sm:$0xf]
      %v391 = vld [vmem:[%s1 + $0xb4] sm:$0xf]
      %v392 = vld [vmem:[%s1 + $0xb8] sm:$0xf]
      %v393 = vld [vmem:[%s1 + $0xbc] sm:$0xf]
      %v394 = vld [vmem:[%s1 + $0xc0] sm:$0xf]
      %v395 = vld [vmem:[%s1 + $0xc4] sm:$0xf]
      %v396 = vld [vmem:[%s1 + $0xc8] sm:$0xf]
      %v397 = vld [vmem:[%s1 + $0xcc] sm:$0xf]
      %v398 = vld [vmem:[%s1 + $0xd0] sm:$0xf]
      %v399 = vld [vmem:[%s1 + $0xd4] sm:$0xf]
      %v400 = vld [vmem:[%s1 + $0xd8] sm:$0xf]
      %v401 = vld [vmem:[%s1 + $0xdc] sm:$0xf]
      %v402 = vld [vmem:[%s1 + $0xe0] sm:$0xf]
      %v403 = vld [vmem:[%s1 + $0xe4] sm:$0xf]
      %v404 = vld [vmem:[%s1 + $0xe8] sm:$0xf]
      %v405 = vld [vmem:[%s1 + $0xec] sm:$0xf]
      %v406 = vld [vmem:[%s1 + $0xf0] sm:$0xf]
      %v407 = vld [vmem:[%s1 + $0xf4] sm:$0xf]
      %v408 = vld [vmem:[%s1 + $0xf8] sm:$0xf]
      %v409 = vld [vmem:[%s1 + $0xfc] sm:$0xf]
      %v410 = vld [vmem:[%s1 + $0x100] sm:$0xf]
      %v411 = vld [vmem:[%s1 + $0x104] sm:$0xf]
      %v412 = vld [vmem:[%s1 + $0x108] sm:$0xf]
      %v413 = vld [vmem:[%s1 + $0x10c] sm:$0xf]
      %v414 = vld [vmem:[%s1 + $0x110] sm:$0xf]
      %v415 = vld [vmem:[%s1 + $0x114] sm:$0xf]
      %v416 = vld [vmem:[%s1 + $0x118] sm:$0xf]
      %v417 = vld [vmem:[%s1 + $0x11c] sm:$0xf]
      %v418 = vld [vmem:[%s1 + $0x120] sm:$0xf]
      %v419 = vld [vmem:[%s1 + $0x124] sm:$0xf]
      %v420 = vld [vmem:[%s1 + $0x128] sm:$0xf]
      %v421 = vld [vmem:[%s1 + $0x12c] sm:$0xf]
      %v422 = vld [vmem:[%s1 + $0x130] sm:$0xf]
      %v423 = vld [vmem:[%s1 + $0x134] sm:$0xf]
      %v424 = vld [vmem:[%s1 + $0x138] sm:$0xf]
      %v425 = vld [vmem:[%s1 + $0x13c] sm:$0xf]
      %v426 = vld [vmem:[%s1 + $0x140] sm:$0xf]
      %v427 = vld [vmem:[%s1 + $0x144] sm:$0xf]
      %v428 = vld [vmem:[%s1 + $0x148] sm:$0xf]
      %v429 = vld [vmem:[%s1 + $0x14c] sm:$0xf]
      %v430 = vld [vmem:[%s1 + $0x150] sm:$0xf]
      %v431 = vld [vmem:[%s1 + $0x154] sm:$0xf]
      %v432 = vld [vmem:[%s1 + $0x158] sm:$0xf]
      %v433 = vld [vmem:[%s1 + $0x15c] sm:$0xf]
      %v434 = vld [vmem:[%s1 + $0x160] sm:$0xf]
      %v435 = vld [vmem:[%s1 + $0x164] sm:$0xf]
      %v436 = vld [vmem:[%s1 + $0x168] sm:$0xf]
      %v437 = vld [vmem:[%s1 + $0x16c] sm:$0xf]
      %v438 = vld [vmem:[%s1 + $0x170] sm:$0xf]
      %v439 = vld [vmem:[%s1 + $0x174] sm:$0xf]
      %v440 = vld [vmem:[%s1 + $0x178] sm:$0xf]
      %v441 = vld [vmem:[%s1 + $0x17c] sm:$0xf]
      %v442 = vld [vmem:[%s1 + $0x180] sm:$0xf]
      %v443 = vld [vmem:[%s1 + $0x184] sm:$0xf]
      %v444 = vld [vmem:[%s1 + $0x188] sm:$0xf]
      %v445 = vld [vmem:[%s1 + $0x18c] sm:$0xf]
      %v446 = vld [vmem:[%s1 + $0x190] sm:$0xf]
      %v447 = vld [vmem:[%s1 + $0x194] sm:$0xf]
      %v448 = vld [vmem:[%s1 + $0x198] sm:$0xf]
      %v449 = vld [vmem:[%s1 + $0x19c] sm:$0xf]
      %v450 = vld [vmem:[%s1 + $0x1a0] sm:$0xf]
      %v451 = vld [vmem:[%s1 + $0x1a4] sm:$0xf]
      %v452 = vld [vmem:[%s1 + $0x1a8] sm:$0xf]
      %v453 = vld [vmem:[%s1 + $0x1ac] sm:$0xf]
      %v454 = vld [vmem:[%s1 + $0x1b0] sm:$0xf]
      %v455 = vld [vmem:[%s1 + $0x1b4] sm:$0xf]
      %v456 = vld [vmem:[%s1 + $0x1b8] sm:$0xf]
      %v457 = vld [vmem:[%s1 + $0x1bc] sm:$0xf]
      %v458 = vld [vmem:[%s1 + $0x1c0] sm:$0xf]
      %v459 = vld [vmem:[%s1 + $0x1c4] sm:$0xf]
      %v460 = vld [vmem:[%s1 + $0x1c8] sm:$0xf]
      %v461 = vld [vmem:[%s1 + $0x1cc] sm:$0xf]
      %v462 = vld [vmem:[%s1 + $0x1d0] sm:$0xf]
      %v463 = vld [vmem:[%s1 + $0x1d4] sm:$0xf]
      %v464 = vld [vmem:[%s1 + $0x1d8] sm:$0xf]
      %v465 = vld [vmem:[%s1 + $0x1dc] sm:$0xf]
      %v466 = vld [vmem:[%s1 + $0x1e0] sm:$0xf]
      %v467 = vld [vmem:[%s1 + $0x1e4] sm:$0xf]
      %v468 = vld [vmem:[%s1 + $0x1e8] sm:$0xf]
      %v469 = vld [vmem:[%s1 + $0x1ec] sm:$0xf]
      %v470 = vld [vmem:[%s1 + $0x1f0] sm:$0xf]
      %v471 = vld [vmem:[%s1 + $0x1f4] sm:$0xf]
      %v472 = vld [vmem:[%s1 + $0x1f8] sm:$0xf]
      %v473 = vld [vmem:[%s1 + $0x1fc] sm:$0xf]
      %v474 = vld [vmem:[%s2] sm:$0x1]
      %v476 = vperm.slane %v474, 0
      %v486 = vunpack.c.l.b16 %v338
      %v487 = vunpack.c.h.b16 %v338
      %v488 = vunpack.c.l.b16 %v339
      %v489 = vunpack.c.h.b16 %v339
      %v490 = vunpack.c.l.b16 %v340
      %v491 = vunpack.c.h.b16 %v340
      %v492 = vunpack.c.l.b16 %v341
      %v493 = vunpack.c.h.b16 %v341
      %v494 = vunpack.c.l.b16 %v342
      %v495 = vunpack.c.h.b16 %v342
      %v496 = vunpack.c.l.b16 %v343
      %v497 = vunpack.c.h.b16 %v343
      %v498 = vunpack.c.l.b16 %v344
      %v499 = vunpack.c.h.b16 %v344
      %v500 = vunpack.c.l.b16 %v345
      %v501 = vunpack.c.h.b16 %v345
      %v502 = vpack.c.b16 %v494, %v486
      %v503 = vpack.c.b16 %v495, %v487
      %v504 = vpack.c.b16 %v496, %v488
      %v505 = vpack.c.b16 %v497, %v489
      %v506 = vpack.c.b16 %v498, %v490
      %v507 = vpack.c.b16 %v499, %v491
      %v508 = vpack.c.b16 %v500, %v492
      %v509 = vpack.c.b16 %v501, %v493
      %v646 = vunpack.c.l.b16 %v346
      %v647 = vunpack.c.l.b16 %v347
      %v648 = vunpack.c.l.b16 %v348
      %v649 = vunpack.c.l.b16 %v349
      %v650 = vunpack.c.l.b16 %v350
      %v651 = vunpack.c.l.b16 %v351
      %v652 = vunpack.c.l.b16 %v352
      %v653 = vunpack.c.l.b16 %v353
      %v654 = vunpack.c.l.b16 %v354
      %v655 = vunpack.c.l.b16 %v355
      %v656 = vunpack.c.l.b16 %v356
      %v657 = vunpack.c.l.b16 %v357
      %v658 = vunpack.c.l.b16 %v358
      %v659 = vunpack.c.l.b16 %v359
      %v660 = vunpack.c.l.b16 %v360
      %v661 = vunpack.c.l.b16 %v361
      %v662 = vunpack.c.l.b16 %v362
      %v663 = vunpack.c.l.b16 %v363
      %v664 = vunpack.c.l.b16 %v364
      %v665 = vunpack.c.l.b16 %v365
      %v666 = vunpack.c.l.b16 %v366
      %v667 = vunpack.c.l.b16 %v367
      %v668 = vunpack.c.l.b16 %v368
      %v669 = vunpack.c.l.b16 %v369
      %v670 = vunpack.c.l.b16 %v370
      %v671 = vunpack.c.l.b16 %v371
      %v672 = vunpack.c.l.b16 %v372
      %v673 = vunpack.c.l.b16 %v373
      %v674 = vunpack.c.l.b16 %v374
      %v675 = vunpack.c.l.b16 %v375
      %v676 = vunpack.c.l.b16 %v376
      %v677 = vunpack.c.l.b16 %v377
      %v678 = vunpack.c.l.b16 %v378
      %v679 = vunpack.c.l.b16 %v379
      %v680 = vunpack.c.l.b16 %v380
      %v681 = vunpack.c.l.b16 %v381
      %v682 = vunpack.c.l.b16 %v382
      %v683 = vunpack.c.l.b16 %v383
      %v684 = vunpack.c.l.b16 %v384
      %v685 = vunpack.c.l.b16 %v385
      %v686 = vunpack.c.l.b16 %v386
      %v687 = vunpack.c.l.b16 %v387
      %v688 = vunpack.c.l.b16 %v388
      %v689 = vunpack.c.l.b16 %v389
      %v690 = vunpack.c.l.b16 %v390
      %v691 = vunpack.c.l.b16 %v391
      %v692 = vunpack.c.l.b16 %v392
      %v693 = vunpack.c.l.b16 %v393
      %v694 = vunpack.c.l.b16 %v394
      %v695 = vunpack.c.l.b16 %v395
      %v696 = vunpack.c.l.b16 %v396
      %v697 = vunpack.c.l.b16 %v397
      %v698 = vunpack.c.l.b16 %v398
      %v699 = vunpack.c.l.b16 %v399
      %v700 = vunpack.c.l.b16 %v400
      %v701 = vunpack.c.l.b16 %v401
      %v702 = vunpack.c.l.b16 %v402
      %v703 = vunpack.c.l.b16 %v403
      %v704 = vunpack.c.l.b16 %v404
      %v705 = vunpack.c.l.b16 %v405
      %v706 = vunpack.c.l.b16 %v406
      %v707 = vunpack.c.l.b16 %v407
      %v708 = vunpack.c.l.b16 %v408
      %v709 = vunpack.c.l.b16 %v409
      %v710 = vunpack.c.l.b16 %v410
      %v711 = vunpack.c.l.b16 %v411
      %v712 = vunpack.c.l.b16 %v412
      %v713 = vunpack.c.l.b16 %v413
      %v714 = vunpack.c.l.b16 %v414
      %v715 = vunpack.c.l.b16 %v415
      %v716 = vunpack.c.l.b16 %v416
      %v717 = vunpack.c.l.b16 %v417
      %v718 = vunpack.c.l.b16 %v418
      %v719 = vunpack.c.l.b16 %v419
      %v720 = vunpack.c.l.b16 %v420
      %v721 = vunpack.c.l.b16 %v421
      %v722 = vunpack.c.l.b16 %v422
      %v723 = vunpack.c.l.b16 %v423
      %v724 = vunpack.c.l.b16 %v424
      %v725 = vunpack.c.l.b16 %v425
      %v726 = vunpack.c.l.b16 %v426
      %v727 = vunpack.c.l.b16 %v427
      %v728 = vunpack.c.l.b16 %v428
      %v729 = vunpack.c.l.b16 %v429
      %v730 = vunpack.c.l.b16 %v430
      %v731 = vunpack.c.l.b16 %v431
      %v732 = vunpack.c.l.b16 %v432
      %v733 = vunpack.c.l.b16 %v433
      %v734 = vunpack.c.l.b16 %v434
      %v735 = vunpack.c.l.b16 %v435
      %v736 = vunpack.c.l.b16 %v436
      %v737 = vunpack.c.l.b16 %v437
      %v738 = vunpack.c.l.b16 %v438
      %v739 = vunpack.c.l.b16 %v439
      %v740 = vunpack.c.l.b16 %v440
      %v741 = vunpack.c.l.b16 %v441
      %v742 = vunpack.c.l.b16 %v442
      %v743 = vunpack.c.l.b16 %v443
      %v744 = vunpack.c.l.b16 %v444
      %v745 = vunpack.c.l.b16 %v445
      %v746 = vunpack.c.l.b16 %v446
      %v747 = vunpack.c.l.b16 %v447
      %v748 = vunpack.c.l.b16 %v448
      %v749 = vunpack.c.l.b16 %v449
      %v750 = vunpack.c.l.b16 %v450
      %v751 = vunpack.c.l.b16 %v451
      %v752 = vunpack.c.l.b16 %v452
      %v753 = vunpack.c.l.b16 %v453
      %v754 = vunpack.c.l.b16 %v454
      %v755 = vunpack.c.l.b16 %v455
      %v756 = vunpack.c.l.b16 %v456
      %v757 = vunpack.c.l.b16 %v457
      %v758 = vunpack.c.l.b16 %v458
      %v759 = vunpack.c.l.b16 %v459
      %v760 = vunpack.c.l.b16 %v460
      %v761 = vunpack.c.l.b16 %v461
      %v762 = vunpack.c.l.b16 %v462
      %v763 = vunpack.c.l.b16 %v463
      %v764 = vunpack.c.l.b16 %v464
      %v765 = vunpack.c.l.b16 %v465
      %v766 = vunpack.c.l.b16 %v466
      %v767 = vunpack.c.l.b16 %v467
      %v768 = vunpack.c.l.b16 %v468
      %v769 = vunpack.c.l.b16 %v469
      %v770 = vunpack.c.l.b16 %v470
      %v771 = vunpack.c.l.b16 %v471
      %v772 = vunpack.c.l.b16 %v472
      %v773 = vunpack.c.l.b16 %v473
      %v774 = vpack.c.b16 %v647, %v646
      %v775 = vpack.c.b16 %v649, %v648
      %v776 = vpack.c.b16 %v651, %v650
      %v777 = vpack.c.b16 %v653, %v652
      %v778 = vpack.c.b16 %v655, %v654
      %v779 = vpack.c.b16 %v657, %v656
      %v780 = vpack.c.b16 %v659, %v658
      %v781 = vpack.c.b16 %v661, %v660
      %v782 = vpack.c.b16 %v663, %v662
      %v783 = vpack.c.b16 %v665, %v664
      %v784 = vpack.c.b16 %v667, %v666
      %v785 = vpack.c.b16 %v669, %v668
      %v786 = vpack.c.b16 %v671, %v670
      %v787 = vpack.c.b16 %v673, %v672
      %v788 = vpack.c.b16 %v675, %v674
      %v789 = vpack.c.b16 %v677, %v676
      %v790 = vpack.c.b16 %v679, %v678
      %v791 = vpack.c.b16 %v681, %v680
      %v792 = vpack.c.b16 %v683, %v682
      %v793 = vpack.c.b16 %v685, %v684
      %v794 = vpack.c.b16 %v687, %v686
      %v795 = vpack.c.b16 %v689, %v688
      %v796 = vpack.c.b16 %v691, %v690
      %v797 = vpack.c.b16 %v693, %v692
      %v798 = vpack.c.b16 %v695, %v694
      %v799 = vpack.c.b16 %v697, %v696
      %v800 = vpack.c.b16 %v699, %v698
      %v801 = vpack.c.b16 %v701, %v700
      %v802 = vpack.c.b16 %v703, %v702
      %v803 = vpack.c.b16 %v705, %v704
      %v804 = vpack.c.b16 %v707, %v706
      %v805 = vpack.c.b16 %v709, %v708
      %v806 = vpack.c.b16 %v711, %v710
      %v807 = vpack.c.b16 %v713, %v712
      %v808 = vpack.c.b16 %v715, %v714
      %v809 = vpack.c.b16 %v717, %v716
      %v810 = vpack.c.b16 %v719, %v718
      %v811 = vpack.c.b16 %v721, %v720
      %v812 = vpack.c.b16 %v723, %v722
      %v813 = vpack.c.b16 %v725, %v724
      %v814 = vpack.c.b16 %v727, %v726
      %v815 = vpack.c.b16 %v729, %v728
      %v816 = vpack.c.b16 %v731, %v730
      %v817 = vpack.c.b16 %v733, %v732
      %v818 = vpack.c.b16 %v735, %v734
      %v819 = vpack.c.b16 %v737, %v736
      %v820 = vpack.c.b16 %v739, %v738
      %v821 = vpack.c.b16 %v741, %v740
      %v822 = vpack.c.b16 %v743, %v742
      %v823 = vpack.c.b16 %v745, %v744
      %v824 = vpack.c.b16 %v747, %v746
      %v825 = vpack.c.b16 %v749, %v748
      %v826 = vpack.c.b16 %v751, %v750
      %v827 = vpack.c.b16 %v753, %v752
      %v828 = vpack.c.b16 %v755, %v754
      %v829 = vpack.c.b16 %v757, %v756
      %v830 = vpack.c.b16 %v759, %v758
      %v831 = vpack.c.b16 %v761, %v760
      %v832 = vpack.c.b16 %v763, %v762
      %v833 = vpack.c.b16 %v765, %v764
      %v834 = vpack.c.b16 %v767, %v766
      %v835 = vpack.c.b16 %v769, %v768
      %v836 = vpack.c.b16 %v771, %v770
      %v837 = vpack.c.b16 %v773, %v772
      %902 = vmatpush.bf16.msra.mxu0 %v781
      %903 = vmatpush.bf16.msra.mxu0 %v780
      %904 = vmatpush.bf16.msra.mxu0 %v779
      %905 = vmatpush.bf16.msra.mxu0 %v778
      %906 = vmatpush.bf16.msra.mxu0 %v777
      %907 = vmatpush.bf16.msra.mxu0 %v776
      %908 = vmatpush.bf16.msra.mxu0 %v775
      %909 = vmatpush.bf16.msra.mxu0 %v774
      %910 = vmatmul.bf16.gmra.mxu0 %v502
      %v911 = vpop.f32.mrf.mxu0
      %v912 = vadd.f32 %v476, %v911
      %v913 = vpop.f32.mrf.mxu0
      %v914 = vadd.f32 %v476, %v913
      %915 = vdwg.mxu0
      %916 = vmatpush.bf16.msra.mxu0 %v789
      %917 = vmatpush.bf16.msra.mxu0 %v788
      %918 = vmatpush.bf16.msra.mxu0 %v787
      %919 = vmatpush.bf16.msra.mxu0 %v786
      %920 = vmatpush.bf16.msra.mxu0 %v785
      %921 = vmatpush.bf16.msra.mxu0 %v784
      %922 = vmatpush.bf16.msra.mxu0 %v783
      %923 = vmatpush.bf16.msra.mxu0 %v782
      %924 = vmatmul.bf16.gmra.mxu0 %v503
      %v925 = vpop.f32.mrf.mxu0
      %v926 = vadd.f32 %v912, %v925
      %v927 = vpop.f32.mrf.mxu0
      %v928 = vadd.f32 %v914, %v927
      %929 = vdwg.mxu0
      %930 = vmatpush.bf16.msra.mxu0 %v797
      %931 = vmatpush.bf16.msra.mxu0 %v796
      %932 = vmatpush.bf16.msra.mxu0 %v795
      %933 = vmatpush.bf16.msra.mxu0 %v794
      %934 = vmatpush.bf16.msra.mxu0 %v793
      %935 = vmatpush.bf16.msra.mxu0 %v792
      %936 = vmatpush.bf16.msra.mxu0 %v791
      %937 = vmatpush.bf16.msra.mxu0 %v790
      %938 = vmatmul.bf16.gmra.mxu0 %v504
      %v939 = vpop.f32.mrf.mxu0
      %v940 = vadd.f32 %v926, %v939
      %v941 = vpop.f32.mrf.mxu0
      %v942 = vadd.f32 %v928, %v941
      %943 = vdwg.mxu0
      %944 = vmatpush.bf16.msra.mxu0 %v805
      %945 = vmatpush.bf16.msra.mxu0 %v804
      %946 = vmatpush.bf16.msra.mxu0 %v803
      %947 = vmatpush.bf16.msra.mxu0 %v802
      %948 = vmatpush.bf16.msra.mxu0 %v801
      %949 = vmatpush.bf16.msra.mxu0 %v800
      %950 = vmatpush.bf16.msra.mxu0 %v799
      %951 = vmatpush.bf16.msra.mxu0 %v798
      %952 = vmatmul.bf16.gmra.mxu0 %v505
      %v953 = vpop.f32.mrf.mxu0
      %v954 = vadd.f32 %v940, %v953
      %v955 = vpop.f32.mrf.mxu0
      %v956 = vadd.f32 %v942, %v955
      %957 = vdwg.mxu0
      %958 = vmatpush.bf16.msra.mxu0 %v813
      %959 = vmatpush.bf16.msra.mxu0 %v812
      %960 = vmatpush.bf16.msra.mxu0 %v811
      %961 = vmatpush.bf16.msra.mxu0 %v810
      %962 = vmatpush.bf16.msra.mxu0 %v809
      %963 = vmatpush.bf16.msra.mxu0 %v808
      %964 = vmatpush.bf16.msra.mxu0 %v807
      %965 = vmatpush.bf16.msra.mxu0 %v806
      %966 = vmatmul.bf16.gmra.mxu0 %v506
      %v967 = vpop.f32.mrf.mxu0
      %v968 = vadd.f32 %v954, %v967
      %v969 = vpop.f32.mrf.mxu0
      %v970 = vadd.f32 %v956, %v969
      %971 = vdwg.mxu0
      %972 = vmatpush.bf16.msra.mxu0 %v821
      %973 = vmatpush.bf16.msra.mxu0 %v820
      %974 = vmatpush.bf16.msra.mxu0 %v819
      %975 = vmatpush.bf16.msra.mxu0 %v818
      %976 = vmatpush.bf16.msra.mxu0 %v817
      %977 = vmatpush.bf16.msra.mxu0 %v816
      %978 = vmatpush.bf16.msra.mxu0 %v815
      %979 = vmatpush.bf16.msra.mxu0 %v814
      %980 = vmatmul.bf16.gmra.mxu0 %v507
      %v981 = vpop.f32.mrf.mxu0
      %v982 = vadd.f32 %v968, %v981
      %v983 = vpop.f32.mrf.mxu0
      %v984 = vadd.f32 %v970, %v983
      %985 = vdwg.mxu0
      %986 = vmatpush.bf16.msra.mxu0 %v829
      %987 = vmatpush.bf16.msra.mxu0 %v828
      %988 = vmatpush.bf16.msra.mxu0 %v827
      %989 = vmatpush.bf16.msra.mxu0 %v826
      %990 = vmatpush.bf16.msra.mxu0 %v825
      %991 = vmatpush.bf16.msra.mxu0 %v824
      %992 = vmatpush.bf16.msra.mxu0 %v823
      %993 = vmatpush.bf16.msra.mxu0 %v822
      %994 = vmatmul.bf16.gmra.mxu0 %v508
      %v995 = vpop.f32.mrf.mxu0
      %v996 = vadd.f32 %v982, %v995
      %v997 = vpop.f32.mrf.mxu0
      %v998 = vadd.f32 %v984, %v997
      %999 = vdwg.mxu0
      %1000 = vmatpush.bf16.msra.mxu0 %v837
      %1001 = vmatpush.bf16.msra.mxu0 %v836
      %1002 = vmatpush.bf16.msra.mxu0 %v835
      %1003 = vmatpush.bf16.msra.mxu0 %v834
      %1004 = vmatpush.bf16.msra.mxu0 %v833
      %1005 = vmatpush.bf16.msra.mxu0 %v832
      %1006 = vmatpush.bf16.msra.mxu0 %v831
      %1007 = vmatpush.bf16.msra.mxu0 %v830
      %1008 = vmatmul.bf16.gmra.mxu0 %v509
      %v1009 = vpop.f32.mrf.mxu0
      %v1010 = vadd.f32 %v996, %v1009
      %v1011 = vpop.f32.mrf.mxu0
      %v1012 = vadd.f32 %v998, %v1011
      %1013 = vdwg.mxu0
      %v1014 = vmul.f32 %v1010, 0.01
      %v1015 = vmul.f32 %v1012, 0.01
      %v1016 = vmax.f32 %v1010, %v1014
      %v1017 = vmax.f32 %v1012, %v1015
      %vm1018 = vcmask 1041408
      %v1019 = vsel %vm1018, %v1016, -inf
      %v1020 = vrot.slane %v1019, 4
      %v1021 = vmax.f32 %v1019, %v1020
      %v1022 = vrot.slane %v1021, 2
      %v1023 = vmax.f32 %v1021, %v1022
      %v1024 = vrot.slane %v1023, 1
      %v1025 = vmax.f32 %v1023, %v1024
      %1026 = vst [vmem:[#allocation2 + $0x4] sm:$0x1] %v1025
      %vm1027 = vcmask 1045506
      %v1028 = vsel %vm1027, %v1016, -inf
      %v1029 = vrot.slane %v1028, 4
      %v1030 = vmax.f32 %v1028, %v1029
      %v1031 = vrot.slane %v1030, 2
      %v1032 = vmax.f32 %v1030, %v1031
      %v1033 = vrot.slane %v1032, 1
      %v1034 = vmax.f32 %v1032, %v1033
      %1035 = vst [vmem:[#allocation2 + $0x5] sm:$0x1] %v1034
      %vm1036 = vcmask 1047558
      %v1037 = vsel %vm1036, %v1016, -inf
      %vm1038 = vcmask 1040384
      %v1039 = vsel %vm1038, %v1017, -inf
      %v1040 = vmax.f32 %v1037, %v1039
      %v1041 = vrot.slane %v1040, 4
      %v1042 = vmax.f32 %v1040, %v1041
      %v1043 = vrot.slane %v1042, 2
      %v1044 = vmax.f32 %v1042, %v1043
      %v1045 = vrot.slane %v1044, 1
      %v1046 = vmax.f32 %v1044, %v1045
      %1047 = vst [vmem:[#allocation2 + $0x6] sm:$0x1] %v1046
      %v1048 = vld [vmem:[#allocation2] sm:$0x3f]
      %v1049 = vld [vmem:[%s3] sm:$0xff]
      %v1050 = vld [vmem:[%s3 + $0x8] sm:$0xff]
      %v1051 = vld [vmem:[%s3 + $0x10] sm:$0xff]
      %v1052 = vld [vmem:[%s3 + $0x18] sm:$0xff]
      %v1053 = vld [vmem:[%s3 + $0x20] sm:$0xff]
      %v1054 = vld [vmem:[%s3 + $0x28] sm:$0xff]
      %v1055 = vld [vmem:[%s3 + $0x30] sm:$0xff]
      %v1056 = vld [vmem:[%s3 + $0x38] sm:$0xff]
      %v1057 = vld [vmem:[%s3 + $0x40] sm:$0xff]
      %v1058 = vld [vmem:[%s3 + $0x48] sm:$0xff]
      %v1059 = vld [vmem:[%s3 + $0x50] sm:$0xff]
      %v1060 = vld [vmem:[%s3 + $0x58] sm:$0xff]
      %v1061 = vld [vmem:[%s3 + $0x60] sm:$0xff]
      %v1062 = vld [vmem:[%s3 + $0x68] sm:$0xff]
      %v1063 = vld [vmem:[%s3 + $0x70] sm:$0xff]
      %v1064 = vld [vmem:[%s3 + $0x78] sm:$0xff]
      %v1065 = vld [vmem:[#allocation2 + $0x1] sm:$0x3f]
      %s1066 = scalar_lea.vmem %s3, 128
      %v1067 = vld [vmem:[%s1066] sm:$0xff]
      %v1068 = vld [vmem:[%s1066 + $0x8] sm:$0xff]
      %v1069 = vld [vmem:[%s1066 + $0x10] sm:$0xff]
      %v1070 = vld [vmem:[%s1066 + $0x18] sm:$0xff]
      %v1071 = vld [vmem:[%s1066 + $0x20] sm:$0xff]
      %v1072 = vld [vmem:[%s1066 + $0x28] sm:$0xff]
      %v1073 = vld [vmem:[%s1066 + $0x30] sm:$0xff]
      %v1074 = vld [vmem:[%s1066 + $0x38] sm:$0xff]
      %v1075 = vld [vmem:[%s1066 + $0x40] sm:$0xff]
      %v1076 = vld [vmem:[%s1066 + $0x48] sm:$0xff]
      %v1077 = vld [vmem:[%s1066 + $0x50] sm:$0xff]
      %v1078 = vld [vmem:[%s1066 + $0x58] sm:$0xff]
      %v1079 = vld [vmem:[%s1066 + $0x60] sm:$0xff]
      %v1080 = vld [vmem:[%s1066 + $0x68] sm:$0xff]
      %v1081 = vld [vmem:[%s1066 + $0x70] sm:$0xff]
      %v1082 = vld [vmem:[%s1066 + $0x78] sm:$0xff]
      %1083 = vmatpush.msra.mxu0 %v1082
      %1084 = vmatpush.msra.mxu0 %v1081
      %1085 = vmatpush.msra.mxu0 %v1080
      %1086 = vmatpush.msra.mxu0 %v1079
      %1087 = vmatpush.msra.mxu0 %v1078
      %1088 = vmatpush.msra.mxu0 %v1077
      %1089 = vmatpush.msra.mxu0 %v1076
      %1090 = vmatpush.msra.mxu0 %v1075
      %1091 = vmatpush.msra.mxu0 %v1074
      %1092 = vmatpush.msra.mxu0 %v1073
      %1093 = vmatpush.msra.mxu0 %v1072
      %1094 = vmatpush.msra.mxu0 %v1071
      %1095 = vmatpush.msra.mxu0 %v1070
      %1096 = vmatpush.msra.mxu0 %v1069
      %1097 = vmatpush.msra.mxu0 %v1068
      %1098 = vmatpush.msra.mxu0 %v1067
      %1099 = vmatmul.f32.gmra.mxu0 %v1065
      %v1100 = vpop.f32.mrf.mxu0
      %v1101 = vadd.f32 0.0, %v1100
      %1102 = vdwg.mxu0
      %1103 = vmatpush.msra.mxu0 %v1064
      %1104 = vmatpush.msra.mxu0 %v1063
      %1105 = vmatpush.msra.mxu0 %v1062
      %1106 = vmatpush.msra.mxu0 %v1061
      %1107 = vmatpush.msra.mxu0 %v1060
      %1108 = vmatpush.msra.mxu0 %v1059
      %1109 = vmatpush.msra.mxu0 %v1058
      %1110 = vmatpush.msra.mxu0 %v1057
      %1111 = vmatpush.msra.mxu0 %v1056
      %1112 = vmatpush.msra.mxu0 %v1055
      %1113 = vmatpush.msra.mxu0 %v1054
      %1114 = vmatpush.msra.mxu0 %v1053
      %1115 = vmatpush.msra.mxu0 %v1052
      %1116 = vmatpush.msra.mxu0 %v1051
      %1117 = vmatpush.msra.mxu0 %v1050
      %1118 = vmatpush.msra.mxu0 %v1049
      %1119 = vmatmul.f32.gmra.mxu0 %v1048
      %v1120 = vpop.f32.mrf.mxu0
      %v1121 = vadd.f32 %v1101, %v1120
      %1122 = vdwg.mxu0
      %v1123 = vld [vmem:[#allocation2 + $0x2] sm:$0x3f]
      %s1124 = scalar_lea.vmem %s3, 256
      %v1125 = vld [vmem:[%s1124] sm:$0xff]
      %v1126 = vld [vmem:[%s1124 + $0x8] sm:$0xff]
      %v1127 = vld [vmem:[%s1124 + $0x10] sm:$0xff]
      %v1128 = vld [vmem:[%s1124 + $0x18] sm:$0xff]
      %v1129 = vld [vmem:[%s1124 + $0x20] sm:$0xff]
      %v1130 = vld [vmem:[%s1124 + $0x28] sm:$0xff]
      %v1131 = vld [vmem:[%s1124 + $0x30] sm:$0xff]
      %v1132 = vld [vmem:[%s1124 + $0x38] sm:$0xff]
      %v1133 = vld [vmem:[%s1124 + $0x40] sm:$0xff]
      %v1134 = vld [vmem:[%s1124 + $0x48] sm:$0xff]
      %v1135 = vld [vmem:[%s1124 + $0x50] sm:$0xff]
      %v1136 = vld [vmem:[%s1124 + $0x58] sm:$0xff]
      %v1137 = vld [vmem:[%s1124 + $0x60] sm:$0xff]
      %v1138 = vld [vmem:[%s1124 + $0x68] sm:$0xff]
      %v1139 = vld [vmem:[%s1124 + $0x70] sm:$0xff]
      %v1140 = vld [vmem:[%s1124 + $0x78] sm:$0xff]
      %1141 = vmatpush.msra.mxu0 %v1140
      %1142 = vmatpush.msra.mxu0 %v1139
      %1143 = vmatpush.msra.mxu0 %v1138
      %1144 = vmatpush.msra.mxu0 %v1137
      %1145 = vmatpush.msra.mxu0 %v1136
      %1146 = vmatpush.msra.mxu0 %v1135
      %1147 = vmatpush.msra.mxu0 %v1134
      %1148 = vmatpush.msra.mxu0 %v1133
      %1149 = vmatpush.msra.mxu0 %v1132
      %1150 = vmatpush.msra.mxu0 %v1131
      %1151 = vmatpush.msra.mxu0 %v1130
      %1152 = vmatpush.msra.mxu0 %v1129
      %1153 = vmatpush.msra.mxu0 %v1128
      %1154 = vmatpush.msra.mxu0 %v1127
      %1155 = vmatpush.msra.mxu0 %v1126
      %1156 = vmatpush.msra.mxu0 %v1125
      %1157 = vmatmul.f32.gmra.mxu0 %v1123
      %v1158 = vpop.f32.mrf.mxu0
      %v1159 = vadd.f32 0.0, %v1158
      %1160 = vdwg.mxu0
      %v1161 = vadd.f32 %v1121, %v1159
      %v1162 = vld [vmem:[#allocation2 + $0x3] sm:$0x3f]
      %s1163 = scalar_lea.vmem %s3, 384
      %v1164 = vld [vmem:[%s1163] sm:$0xff]
      %v1165 = vld [vmem:[%s1163 + $0x8] sm:$0xff]
      %v1166 = vld [vmem:[%s1163 + $0x10] sm:$0xff]
      %v1167 = vld [vmem:[%s1163 + $0x18] sm:$0xff]
      %v1168 = vld [vmem:[%s1163 + $0x20] sm:$0xff]
      %v1169 = vld [vmem:[%s1163 + $0x28] sm:$0xff]
      %v1170 = vld [vmem:[%s1163 + $0x30] sm:$0xff]
      %v1171 = vld [vmem:[%s1163 + $0x38] sm:$0xff]
      %v1172 = vld [vmem:[%s1163 + $0x40] sm:$0xff]
      %v1173 = vld [vmem:[%s1163 + $0x48] sm:$0xff]
      %v1174 = vld [vmem:[%s1163 + $0x50] sm:$0xff]
      %v1175 = vld [vmem:[%s1163 + $0x58] sm:$0xff]
      %v1176 = vld [vmem:[%s1163 + $0x60] sm:$0xff]
      %v1177 = vld [vmem:[%s1163 + $0x68] sm:$0xff]
      %v1178 = vld [vmem:[%s1163 + $0x70] sm:$0xff]
      %v1179 = vld [vmem:[%s1163 + $0x78] sm:$0xff]
      %1180 = vmatpush.msra.mxu0 %v1179
      %1181 = vmatpush.msra.mxu0 %v1178
      %1182 = vmatpush.msra.mxu0 %v1177
      %1183 = vmatpush.msra.mxu0 %v1176
      %1184 = vmatpush.msra.mxu0 %v1175
      %1185 = vmatpush.msra.mxu0 %v1174
      %1186 = vmatpush.msra.mxu0 %v1173
      %1187 = vmatpush.msra.mxu0 %v1172
      %1188 = vmatpush.msra.mxu0 %v1171
      %1189 = vmatpush.msra.mxu0 %v1170
      %1190 = vmatpush.msra.mxu0 %v1169
      %1191 = vmatpush.msra.mxu0 %v1168
      %1192 = vmatpush.msra.mxu0 %v1167
      %1193 = vmatpush.msra.mxu0 %v1166
      %1194 = vmatpush.msra.mxu0 %v1165
      %1195 = vmatpush.msra.mxu0 %v1164
      %1196 = vmatmul.f32.gmra.mxu0 %v1162
      %v1197 = vpop.f32.mrf.mxu0
      %v1198 = vadd.f32 0.0, %v1197
      %1199 = vdwg.mxu0
      %v1200 = vadd.f32 %v1161, %v1198
      %v1201 = vld [vmem:[#allocation2 + $0x4] sm:$0x3f]
      %s1202 = scalar_lea.vmem %s3, 512
      %v1203 = vld [vmem:[%s1202] sm:$0xff]
      %v1204 = vld [vmem:[%s1202 + $0x8] sm:$0xff]
      %v1205 = vld [vmem:[%s1202 + $0x10] sm:$0xff]
      %v1206 = vld [vmem:[%s1202 + $0x18] sm:$0xff]
      %v1207 = vld [vmem:[%s1202 + $0x20] sm:$0xff]
      %v1208 = vld [vmem:[%s1202 + $0x28] sm:$0xff]
      %v1209 = vld [vmem:[%s1202 + $0x30] sm:$0xff]
      %v1210 = vld [vmem:[%s1202 + $0x38] sm:$0xff]
      %v1211 = vld [vmem:[%s1202 + $0x40] sm:$0xff]
      %v1212 = vld [vmem:[%s1202 + $0x48] sm:$0xff]
      %v1213 = vld [vmem:[%s1202 + $0x50] sm:$0xff]
      %v1214 = vld [vmem:[%s1202 + $0x58] sm:$0xff]
      %v1215 = vld [vmem:[%s1202 + $0x60] sm:$0xff]
      %v1216 = vld [vmem:[%s1202 + $0x68] sm:$0xff]
      %v1217 = vld [vmem:[%s1202 + $0x70] sm:$0xff]
      %v1218 = vld [vmem:[%s1202 + $0x78] sm:$0xff]
      %1219 = vmatpush.msra.mxu0 %v1218
      %1220 = vmatpush.msra.mxu0 %v1217
      %1221 = vmatpush.msra.mxu0 %v1216
      %1222 = vmatpush.msra.mxu0 %v1215
      %1223 = vmatpush.msra.mxu0 %v1214
      %1224 = vmatpush.msra.mxu0 %v1213
      %1225 = vmatpush.msra.mxu0 %v1212
      %1226 = vmatpush.msra.mxu0 %v1211
      %1227 = vmatpush.msra.mxu0 %v1210
      %1228 = vmatpush.msra.mxu0 %v1209
      %1229 = vmatpush.msra.mxu0 %v1208
      %1230 = vmatpush.msra.mxu0 %v1207
      %1231 = vmatpush.msra.mxu0 %v1206
      %1232 = vmatpush.msra.mxu0 %v1205
      %1233 = vmatpush.msra.mxu0 %v1204
      %1234 = vmatpush.msra.mxu0 %v1203
      %1235 = vmatmul.f32.gmra.mxu0 %v1201
      %v1236 = vpop.f32.mrf.mxu0
      %v1237 = vadd.f32 0.0, %v1236
      %1238 = vdwg.mxu0
      %v1239 = vadd.f32 %v1200, %v1237
      %v1240 = vld [vmem:[#allocation2 + $0x5] sm:$0x3f]
      %s1241 = scalar_lea.vmem %s3, 640
      %v1242 = vld [vmem:[%s1241] sm:$0xff]
      %v1243 = vld [vmem:[%s1241 + $0x8] sm:$0xff]
      %v1244 = vld [vmem:[%s1241 + $0x10] sm:$0xff]
      %v1245 = vld [vmem:[%s1241 + $0x18] sm:$0xff]
      %v1246 = vld [vmem:[%s1241 + $0x20] sm:$0xff]
      %v1247 = vld [vmem:[%s1241 + $0x28] sm:$0xff]
      %v1248 = vld [vmem:[%s1241 + $0x30] sm:$0xff]
      %v1249 = vld [vmem:[%s1241 + $0x38] sm:$0xff]
      %v1250 = vld [vmem:[%s1241 + $0x40] sm:$0xff]
      %v1251 = vld [vmem:[%s1241 + $0x48] sm:$0xff]
      %v1252 = vld [vmem:[%s1241 + $0x50] sm:$0xff]
      %v1253 = vld [vmem:[%s1241 + $0x58] sm:$0xff]
      %v1254 = vld [vmem:[%s1241 + $0x60] sm:$0xff]
      %v1255 = vld [vmem:[%s1241 + $0x68] sm:$0xff]
      %v1256 = vld [vmem:[%s1241 + $0x70] sm:$0xff]
      %v1257 = vld [vmem:[%s1241 + $0x78] sm:$0xff]
      %1258 = vmatpush.msra.mxu0 %v1257
      %1259 = vmatpush.msra.mxu0 %v1256
      %1260 = vmatpush.msra.mxu0 %v1255
      %1261 = vmatpush.msra.mxu0 %v1254
      %1262 = vmatpush.msra.mxu0 %v1253
      %1263 = vmatpush.msra.mxu0 %v1252
      %1264 = vmatpush.msra.mxu0 %v1251
      %1265 = vmatpush.msra.mxu0 %v1250
      %1266 = vmatpush.msra.mxu0 %v1249
      %1267 = vmatpush.msra.mxu0 %v1248
      %1268 = vmatpush.msra.mxu0 %v1247
      %1269 = vmatpush.msra.mxu0 %v1246
      %1270 = vmatpush.msra.mxu0 %v1245
      %1271 = vmatpush.msra.mxu0 %v1244
      %1272 = vmatpush.msra.mxu0 %v1243
      %1273 = vmatpush.msra.mxu0 %v1242
      %1274 = vmatmul.f32.gmra.mxu0 %v1240
      %v1275 = vpop.f32.mrf.mxu0
      %v1276 = vadd.f32 0.0, %v1275
      %1277 = vdwg.mxu0
      %v1278 = vadd.f32 %v1239, %v1276
      %v1279 = vld [vmem:[%s4] sm:$0x1]
      %v1281 = vperm.slane %v1279, 0
      %v1283 = vadd.f32 %v1278, %v1281
      %v1284 = vmul.f32 %v1283, 0.01
      %v1285 = vmax.f32 %v1283, %v1284
      %1286 = vst [vmem:[#allocation3 + $0x4] sm:$0x3f] %v1285
      %v1287 = vld [vmem:[#allocation3] sm:$0xff]
      %v1288 = vld [vmem:[#allocation3 + $0x8] sm:$0x1]
      %v1289 = vld [vmem:[%s5] sm:$0xff]
      %v1290 = vld [vmem:[%s5 + $0x8] sm:$0xff]
      %v1291 = vld [vmem:[%s5 + $0x10] sm:$0xff]
      %v1292 = vld [vmem:[%s5 + $0x18] sm:$0xff]
      %v1293 = vld [vmem:[%s5 + $0x20] sm:$0xff]
      %v1294 = vld [vmem:[%s5 + $0x28] sm:$0xff]
      %v1295 = vld [vmem:[%s5 + $0x30] sm:$0xff]
      %v1296 = vld [vmem:[%s5 + $0x38] sm:$0xff]
      %v1297 = vld [vmem:[%s5 + $0x40] sm:$0xff]
      %v1298 = vld [vmem:[%s5 + $0x48] sm:$0xff]
      %v1299 = vld [vmem:[%s5 + $0x50] sm:$0xff]
      %v1300 = vld [vmem:[%s5 + $0x58] sm:$0xff]
      %v1301 = vld [vmem:[%s5 + $0x60] sm:$0xff]
      %v1302 = vld [vmem:[%s5 + $0x68] sm:$0xff]
      %v1303 = vld [vmem:[%s5 + $0x70] sm:$0xff]
      %v1304 = vld [vmem:[%s5 + $0x78] sm:$0xff]
      %v1305 = vld [vmem:[#allocation3 + $0x1] sm:$0xff]
      %v1306 = vld [vmem:[#allocation3 + $0x9] sm:$0x1]
      %s1307 = scalar_lea.vmem %s5, 128
      %v1308 = vld [vmem:[%s1307] sm:$0xff]
      %v1309 = vld [vmem:[%s1307 + $0x8] sm:$0xff]
      %v1310 = vld [vmem:[%s1307 + $0x10] sm:$0xff]
      %v1311 = vld [vmem:[%s1307 + $0x18] sm:$0xff]
      %v1312 = vld [vmem:[%s1307 + $0x20] sm:$0xff]
      %v1313 = vld [vmem:[%s1307 + $0x28] sm:$0xff]
      %v1314 = vld [vmem:[%s1307 + $0x30] sm:$0xff]
      %v1315 = vld [vmem:[%s1307 + $0x38] sm:$0xff]
      %v1316 = vld [vmem:[%s1307 + $0x40] sm:$0xff]
      %v1317 = vld [vmem:[%s1307 + $0x48] sm:$0xff]
      %v1318 = vld [vmem:[%s1307 + $0x50] sm:$0xff]
      %v1319 = vld [vmem:[%s1307 + $0x58] sm:$0xff]
      %v1320 = vld [vmem:[%s1307 + $0x60] sm:$0xff]
      %v1321 = vld [vmem:[%s1307 + $0x68] sm:$0xff]
      %v1322 = vld [vmem:[%s1307 + $0x70] sm:$0xff]
      %v1323 = vld [vmem:[%s1307 + $0x78] sm:$0xff]
      %1324 = vmatpush.msra.mxu0 %v1323
      %1325 = vmatpush.msra.mxu0 %v1322
      %1326 = vmatpush.msra.mxu0 %v1321
      %1327 = vmatpush.msra.mxu0 %v1320
      %1328 = vmatpush.msra.mxu0 %v1319
      %1329 = vmatpush.msra.mxu0 %v1318
      %1330 = vmatpush.msra.mxu0 %v1317
      %1331 = vmatpush.msra.mxu0 %v1316
      %1332 = vmatpush.msra.mxu0 %v1315
      %1333 = vmatpush.msra.mxu0 %v1314
      %1334 = vmatpush.msra.mxu0 %v1313
      %1335 = vmatpush.msra.mxu0 %v1312
      %1336 = vmatpush.msra.mxu0 %v1311
      %1337 = vmatpush.msra.mxu0 %v1310
      %1338 = vmatpush.msra.mxu0 %v1309
      %1339 = vmatpush.msra.mxu0 %v1308
      %1340 = vmatmul.f32.gmra.mxu0 %v1305
      %v1341 = vpop.f32.mrf.mxu0
      %v1342 = vadd.f32 0.0, %v1341
      %1343 = vmatmul.f32.gmra.mxu0 %v1306
      %v1344 = vpop.f32.mrf.mxu0
      %v1345 = vadd.f32 0.0, %v1344
      %1346 = vdwg.mxu0
      %1347 = vmatpush.msra.mxu0 %v1304
      %1348 = vmatpush.msra.mxu0 %v1303
      %1349 = vmatpush.msra.mxu0 %v1302
      %1350 = vmatpush.msra.mxu0 %v1301
      %1351 = vmatpush.msra.mxu0 %v1300
      %1352 = vmatpush.msra.mxu0 %v1299
      %1353 = vmatpush.msra.mxu0 %v1298
      %1354 = vmatpush.msra.mxu0 %v1297
      %1355 = vmatpush.msra.mxu0 %v1296
      %1356 = vmatpush.msra.mxu0 %v1295
      %1357 = vmatpush.msra.mxu0 %v1294
      %1358 = vmatpush.msra.mxu0 %v1293
      %1359 = vmatpush.msra.mxu0 %v1292
      %1360 = vmatpush.msra.mxu0 %v1291
      %1361 = vmatpush.msra.mxu0 %v1290
      %1362 = vmatpush.msra.mxu0 %v1289
      %1363 = vmatmul.f32.gmra.mxu0 %v1287
      %v1364 = vpop.f32.mrf.mxu0
      %v1365 = vadd.f32 %v1342, %v1364
      %1366 = vmatmul.f32.gmra.mxu0 %v1288
      %v1367 = vpop.f32.mrf.mxu0
      %v1368 = vadd.f32 %v1345, %v1367
      %1369 = vdwg.mxu0
      %v1370 = vld [vmem:[#allocation3 + $0x2] sm:$0xff]
      %v1371 = vld [vmem:[#allocation3 + $0xa] sm:$0x1]
      %s1372 = scalar_lea.vmem %s5, 256
      %v1373 = vld [vmem:[%s1372] sm:$0xff]
      %v1374 = vld [vmem:[%s1372 + $0x8] sm:$0xff]
      %v1375 = vld [vmem:[%s1372 + $0x10] sm:$0xff]
      %v1376 = vld [vmem:[%s1372 + $0x18] sm:$0xff]
      %v1377 = vld [vmem:[%s1372 + $0x20] sm:$0xff]
      %v1378 = vld [vmem:[%s1372 + $0x28] sm:$0xff]
      %v1379 = vld [vmem:[%s1372 + $0x30] sm:$0xff]
      %v1380 = vld [vmem:[%s1372 + $0x38] sm:$0xff]
      %v1381 = vld [vmem:[%s1372 + $0x40] sm:$0xff]
      %v1382 = vld [vmem:[%s1372 + $0x48] sm:$0xff]
      %v1383 = vld [vmem:[%s1372 + $0x50] sm:$0xff]
      %v1384 = vld [vmem:[%s1372 + $0x58] sm:$0xff]
      %v1385 = vld [vmem:[%s1372 + $0x60] sm:$0xff]
      %v1386 = vld [vmem:[%s1372 + $0x68] sm:$0xff]
      %v1387 = vld [vmem:[%s1372 + $0x70] sm:$0xff]
      %v1388 = vld [vmem:[%s1372 + $0x78] sm:$0xff]
      %1389 = vmatpush.msra.mxu0 %v1388
      %1390 = vmatpush.msra.mxu0 %v1387
      %1391 = vmatpush.msra.mxu0 %v1386
      %1392 = vmatpush.msra.mxu0 %v1385
      %1393 = vmatpush.msra.mxu0 %v1384
      %1394 = vmatpush.msra.mxu0 %v1383
      %1395 = vmatpush.msra.mxu0 %v1382
      %1396 = vmatpush.msra.mxu0 %v1381
      %1397 = vmatpush.msra.mxu0 %v1380
      %1398 = vmatpush.msra.mxu0 %v1379
      %1399 = vmatpush.msra.mxu0 %v1378
      %1400 = vmatpush.msra.mxu0 %v1377
      %1401 = vmatpush.msra.mxu0 %v1376
      %1402 = vmatpush.msra.mxu0 %v1375
      %1403 = vmatpush.msra.mxu0 %v1374
      %1404 = vmatpush.msra.mxu0 %v1373
      %1405 = vmatmul.f32.gmra.mxu0 %v1370
      %v1406 = vpop.f32.mrf.mxu0
      %v1407 = vadd.f32 0.0, %v1406
      %1408 = vmatmul.f32.gmra.mxu0 %v1371
      %v1409 = vpop.f32.mrf.mxu0
      %v1410 = vadd.f32 0.0, %v1409
      %1411 = vdwg.mxu0
      %v1412 = vadd.f32 %v1365, %v1407
      %v1413 = vadd.f32 %v1368, %v1410
      %v1414 = vld [vmem:[#allocation3 + $0x3] sm:$0xff]
      %v1415 = vld [vmem:[#allocation3 + $0xb] sm:$0x1]
      %s1416 = scalar_lea.vmem %s5, 384
      %v1417 = vld [vmem:[%s1416] sm:$0xff]
      %v1418 = vld [vmem:[%s1416 + $0x8] sm:$0xff]
      %v1419 = vld [vmem:[%s1416 + $0x10] sm:$0xff]
      %v1420 = vld [vmem:[%s1416 + $0x18] sm:$0xff]
      %v1421 = vld [vmem:[%s1416 + $0x20] sm:$0xff]
      %v1422 = vld [vmem:[%s1416 + $0x28] sm:$0xff]
      %v1423 = vld [vmem:[%s1416 + $0x30] sm:$0xff]
      %v1424 = vld [vmem:[%s1416 + $0x38] sm:$0xff]
      %v1425 = vld [vmem:[%s1416 + $0x40] sm:$0xff]
      %v1426 = vld [vmem:[%s1416 + $0x48] sm:$0xff]
      %v1427 = vld [vmem:[%s1416 + $0x50] sm:$0xff]
      %v1428 = vld [vmem:[%s1416 + $0x58] sm:$0xff]
      %v1429 = vld [vmem:[%s1416 + $0x60] sm:$0xff]
      %v1430 = vld [vmem:[%s1416 + $0x68] sm:$0xff]
      %v1431 = vld [vmem:[%s1416 + $0x70] sm:$0xff]
      %v1432 = vld [vmem:[%s1416 + $0x78] sm:$0xff]
      %1433 = vmatpush.msra.mxu0 %v1432
      %1434 = vmatpush.msra.mxu0 %v1431
      %1435 = vmatpush.msra.mxu0 %v1430
      %1436 = vmatpush.msra.mxu0 %v1429
      %1437 = vmatpush.msra.mxu0 %v1428
      %1438 = vmatpush.msra.mxu0 %v1427
      %1439 = vmatpush.msra.mxu0 %v1426
      %1440 = vmatpush.msra.mxu0 %v1425
      %1441 = vmatpush.msra.mxu0 %v1424
      %1442 = vmatpush.msra.mxu0 %v1423
      %1443 = vmatpush.msra.mxu0 %v1422
      %1444 = vmatpush.msra.mxu0 %v1421
      %1445 = vmatpush.msra.mxu0 %v1420
      %1446 = vmatpush.msra.mxu0 %v1419
      %1447 = vmatpush.msra.mxu0 %v1418
      %1448 = vmatpush.msra.mxu0 %v1417
      %1449 = vmatmul.f32.gmra.mxu0 %v1414
      %v1450 = vpop.f32.mrf.mxu0
      %v1451 = vadd.f32 0.0, %v1450
      %1452 = vmatmul.f32.gmra.mxu0 %v1415
      %v1453 = vpop.f32.mrf.mxu0
      %v1454 = vadd.f32 0.0, %v1453
      %1455 = vdwg.mxu0
      %v1456 = vadd.f32 %v1412, %v1451
      %v1457 = vadd.f32 %v1413, %v1454
      %v1458 = vld [vmem:[#allocation3 + $0x4] sm:$0xff]
      %v1459 = vld [vmem:[#allocation3 + $0xc] sm:$0x1]
      %s1460 = scalar_lea.vmem %s5, 512
      %v1461 = vld [vmem:[%s1460] sm:$0xff]
      %v1462 = vld [vmem:[%s1460 + $0x8] sm:$0xff]
      %v1463 = vld [vmem:[%s1460 + $0x10] sm:$0xff]
      %v1464 = vld [vmem:[%s1460 + $0x18] sm:$0xff]
      %v1465 = vld [vmem:[%s1460 + $0x20] sm:$0xff]
      %v1466 = vld [vmem:[%s1460 + $0x28] sm:$0xff]
      %v1467 = vld [vmem:[%s1460 + $0x30] sm:$0xff]
      %v1468 = vld [vmem:[%s1460 + $0x38] sm:$0xff]
      %v1469 = vld [vmem:[%s1460 + $0x40] sm:$0xff]
      %v1470 = vld [vmem:[%s1460 + $0x48] sm:$0xff]
      %v1471 = vld [vmem:[%s1460 + $0x50] sm:$0xff]
      %v1472 = vld [vmem:[%s1460 + $0x58] sm:$0xff]
      %v1473 = vld [vmem:[%s1460 + $0x60] sm:$0xff]
      %v1474 = vld [vmem:[%s1460 + $0x68] sm:$0xff]
      %v1475 = vld [vmem:[%s1460 + $0x70] sm:$0xff]
      %v1476 = vld [vmem:[%s1460 + $0x78] sm:$0xff]
      %1477 = vmatpush.msra.mxu0 %v1476
      %1478 = vmatpush.msra.mxu0 %v1475
      %1479 = vmatpush.msra.mxu0 %v1474
      %1480 = vmatpush.msra.mxu0 %v1473
      %1481 = vmatpush.msra.mxu0 %v1472
      %1482 = vmatpush.msra.mxu0 %v1471
      %1483 = vmatpush.msra.mxu0 %v1470
      %1484 = vmatpush.msra.mxu0 %v1469
      %1485 = vmatpush.msra.mxu0 %v1468
      %1486 = vmatpush.msra.mxu0 %v1467
      %1487 = vmatpush.msra.mxu0 %v1466
      %1488 = vmatpush.msra.mxu0 %v1465
      %1489 = vmatpush.msra.mxu0 %v1464
      %1490 = vmatpush.msra.mxu0 %v1463
      %1491 = vmatpush.msra.mxu0 %v1462
      %1492 = vmatpush.msra.mxu0 %v1461
      %1493 = vmatmul.f32.gmra.mxu0 %v1458
      %v1494 = vpop.f32.mrf.mxu0
      %v1495 = vadd.f32 0.0, %v1494
      %1496 = vmatmul.f32.gmra.mxu0 %v1459
      %v1497 = vpop.f32.mrf.mxu0
      %v1498 = vadd.f32 0.0, %v1497
      %1499 = vdwg.mxu0
      %v1500 = vadd.f32 %v1456, %v1495
      %v1501 = vadd.f32 %v1457, %v1498
      %v1502 = vld [vmem:[#allocation3 + $0x5] sm:$0xff]
      %v1503 = vld [vmem:[#allocation3 + $0xd] sm:$0x1]
      %s1504 = scalar_lea.vmem %s5, 640
      %v1505 = vld [vmem:[%s1504] sm:$0xff]
      %v1506 = vld [vmem:[%s1504 + $0x8] sm:$0xff]
      %v1507 = vld [vmem:[%s1504 + $0x10] sm:$0xff]
      %v1508 = vld [vmem:[%s1504 + $0x18] sm:$0xff]
      %v1509 = vld [vmem:[%s1504 + $0x20] sm:$0xff]
      %v1510 = vld [vmem:[%s1504 + $0x28] sm:$0xff]
      %v1511 = vld [vmem:[%s1504 + $0x30] sm:$0xff]
      %v1512 = vld [vmem:[%s1504 + $0x38] sm:$0xff]
      %v1513 = vld [vmem:[%s1504 + $0x40] sm:$0xff]
      %v1514 = vld [vmem:[%s1504 + $0x48] sm:$0xff]
      %v1515 = vld [vmem:[%s1504 + $0x50] sm:$0xff]
      %v1516 = vld [vmem:[%s1504 + $0x58] sm:$0xff]
      %v1517 = vld [vmem:[%s1504 + $0x60] sm:$0xff]
      %v1518 = vld [vmem:[%s1504 + $0x68] sm:$0xff]
      %v1519 = vld [vmem:[%s1504 + $0x70] sm:$0xff]
      %v1520 = vld [vmem:[%s1504 + $0x78] sm:$0xff]
      %1521 = vmatpush.msra.mxu0 %v1520
      %1522 = vmatpush.msra.mxu0 %v1519
      %1523 = vmatpush.msra.mxu0 %v1518
      %1524 = vmatpush.msra.mxu0 %v1517
      %1525 = vmatpush.msra.mxu0 %v1516
      %1526 = vmatpush.msra.mxu0 %v1515
      %1527 = vmatpush.msra.mxu0 %v1514
      %1528 = vmatpush.msra.mxu0 %v1513
      %1529 = vmatpush.msra.mxu0 %v1512
      %1530 = vmatpush.msra.mxu0 %v1511
      %1531 = vmatpush.msra.mxu0 %v1510
      %1532 = vmatpush.msra.mxu0 %v1509
      %1533 = vmatpush.msra.mxu0 %v1508
      %1534 = vmatpush.msra.mxu0 %v1507
      %1535 = vmatpush.msra.mxu0 %v1506
      %1536 = vmatpush.msra.mxu0 %v1505
      %1537 = vmatmul.f32.gmra.mxu0 %v1502
      %v1538 = vpop.f32.mrf.mxu0
      %v1539 = vadd.f32 0.0, %v1538
      %1540 = vmatmul.f32.gmra.mxu0 %v1503
      %v1541 = vpop.f32.mrf.mxu0
      %v1542 = vadd.f32 0.0, %v1541
      %1543 = vdwg.mxu0
      %v1544 = vadd.f32 %v1500, %v1539
      %v1545 = vadd.f32 %v1501, %v1542
      %v1546 = vld [vmem:[%s6] sm:$0x1]
      %v1548 = vperm.slane %v1546, 0
      %v1550 = vadd.f32 %v1544, %v1548
      %v1551 = vadd.f32 %v1545, %v1548
      %v1552 = vmul.f32 %v1550, 0.01
      %v1553 = vmul.f32 %v1551, 0.01
      %v1554 = vmax.f32 %v1550, %v1552
      %v1555 = vmax.f32 %v1551, %v1553
      %1556 = vst [vmem:[#allocation4 + $0x4] sm:$0xff] %v1554
      %1557 = vst [vmem:[#allocation4 + $0xc] sm:$0x1] %v1555
      %v1558 = vld [vmem:[#allocation4] sm:$0xff]
      %v1559 = vld [vmem:[#allocation4 + $0x8] sm:$0xf]
      %v1560 = vld [vmem:[%s7] sm:$0xff]
      %v1561 = vld [vmem:[%s7 + $0x8] sm:$0xff]
      %v1562 = vld [vmem:[%s7 + $0x10] sm:$0xff]
      %v1563 = vld [vmem:[%s7 + $0x18] sm:$0xff]
      %v1564 = vld [vmem:[%s7 + $0x20] sm:$0xff]
      %v1565 = vld [vmem:[%s7 + $0x28] sm:$0xff]
      %v1566 = vld [vmem:[%s7 + $0x30] sm:$0xff]
      %v1567 = vld [vmem:[%s7 + $0x38] sm:$0xff]
      %v1568 = vld [vmem:[%s7 + $0x40] sm:$0xff]
      %v1569 = vld [vmem:[%s7 + $0x48] sm:$0xff]
      %v1570 = vld [vmem:[%s7 + $0x50] sm:$0xff]
      %v1571 = vld [vmem:[%s7 + $0x58] sm:$0xff]
      %v1572 = vld [vmem:[%s7 + $0x60] sm:$0xff]
      %v1573 = vld [vmem:[%s7 + $0x68] sm:$0xff]
      %v1574 = vld [vmem:[%s7 + $0x70] sm:$0xff]
      %v1575 = vld [vmem:[%s7 + $0x78] sm:$0xff]
      %v1576 = vld [vmem:[#allocation4 + $0x1] sm:$0xff]
      %v1577 = vld [vmem:[#allocation4 + $0x9] sm:$0xf]
      %s1578 = scalar_lea.vmem %s7, 128
      %v1579 = vld [vmem:[%s1578] sm:$0xff]
      %v1580 = vld [vmem:[%s1578 + $0x8] sm:$0xff]
      %v1581 = vld [vmem:[%s1578 + $0x10] sm:$0xff]
      %v1582 = vld [vmem:[%s1578 + $0x18] sm:$0xff]
      %v1583 = vld [vmem:[%s1578 + $0x20] sm:$0xff]
      %v1584 = vld [vmem:[%s1578 + $0x28] sm:$0xff]
      %v1585 = vld [vmem:[%s1578 + $0x30] sm:$0xff]
      %v1586 = vld [vmem:[%s1578 + $0x38] sm:$0xff]
      %v1587 = vld [vmem:[%s1578 + $0x40] sm:$0xff]
      %v1588 = vld [vmem:[%s1578 + $0x48] sm:$0xff]
      %v1589 = vld [vmem:[%s1578 + $0x50] sm:$0xff]
      %v1590 = vld [vmem:[%s1578 + $0x58] sm:$0xff]
      %v1591 = vld [vmem:[%s1578 + $0x60] sm:$0xff]
      %v1592 = vld [vmem:[%s1578 + $0x68] sm:$0xff]
      %v1593 = vld [vmem:[%s1578 + $0x70] sm:$0xff]
      %v1594 = vld [vmem:[%s1578 + $0x78] sm:$0xff]
      %1595 = vmatpush.msra.mxu0 %v1594
      %1596 = vmatpush.msra.mxu0 %v1593
      %1597 = vmatpush.msra.mxu0 %v1592
      %1598 = vmatpush.msra.mxu0 %v1591
      %1599 = vmatpush.msra.mxu0 %v1590
      %1600 = vmatpush.msra.mxu0 %v1589
      %1601 = vmatpush.msra.mxu0 %v1588
      %1602 = vmatpush.msra.mxu0 %v1587
      %1603 = vmatpush.msra.mxu0 %v1586
      %1604 = vmatpush.msra.mxu0 %v1585
      %1605 = vmatpush.msra.mxu0 %v1584
      %1606 = vmatpush.msra.mxu0 %v1583
      %1607 = vmatpush.msra.mxu0 %v1582
      %1608 = vmatpush.msra.mxu0 %v1581
      %1609 = vmatpush.msra.mxu0 %v1580
      %1610 = vmatpush.msra.mxu0 %v1579
      %1611 = vmatmul.f32.gmra.mxu0 %v1576
      %v1612 = vpop.f32.mrf.mxu0
      %v1613 = vadd.f32 0.0, %v1612
      %1614 = vmatmul.f32.gmra.mxu0 %v1577
      %v1615 = vpop.f32.mrf.mxu0
      %v1616 = vadd.f32 0.0, %v1615
      %1617 = vdwg.mxu0
      %1618 = vmatpush.msra.mxu0 %v1575
      %1619 = vmatpush.msra.mxu0 %v1574
      %1620 = vmatpush.msra.mxu0 %v1573
      %1621 = vmatpush.msra.mxu0 %v1572
      %1622 = vmatpush.msra.mxu0 %v1571
      %1623 = vmatpush.msra.mxu0 %v1570
      %1624 = vmatpush.msra.mxu0 %v1569
      %1625 = vmatpush.msra.mxu0 %v1568
      %1626 = vmatpush.msra.mxu0 %v1567
      %1627 = vmatpush.msra.mxu0 %v1566
      %1628 = vmatpush.msra.mxu0 %v1565
      %1629 = vmatpush.msra.mxu0 %v1564
      %1630 = vmatpush.msra.mxu0 %v1563
      %1631 = vmatpush.msra.mxu0 %v1562
      %1632 = vmatpush.msra.mxu0 %v1561
      %1633 = vmatpush.msra.mxu0 %v1560
      %1634 = vmatmul.f32.gmra.mxu0 %v1558
      %v1635 = vpop.f32.mrf.mxu0
      %v1636 = vadd.f32 %v1613, %v1635
      %1637 = vmatmul.f32.gmra.mxu0 %v1559
      %v1638 = vpop.f32.mrf.mxu0
      %v1639 = vadd.f32 %v1616, %v1638
      %1640 = vdwg.mxu0
      %v1641 = vld [vmem:[#allocation4 + $0x2] sm:$0xff]
      %v1642 = vld [vmem:[#allocation4 + $0xa] sm:$0xf]
      %s1643 = scalar_lea.vmem %s7, 256
      %v1644 = vld [vmem:[%s1643] sm:$0xff]
      %v1645 = vld [vmem:[%s1643 + $0x8] sm:$0xff]
      %v1646 = vld [vmem:[%s1643 + $0x10] sm:$0xff]
      %v1647 = vld [vmem:[%s1643 + $0x18] sm:$0xff]
      %v1648 = vld [vmem:[%s1643 + $0x20] sm:$0xff]
      %v1649 = vld [vmem:[%s1643 + $0x28] sm:$0xff]
      %v1650 = vld [vmem:[%s1643 + $0x30] sm:$0xff]
      %v1651 = vld [vmem:[%s1643 + $0x38] sm:$0xff]
      %v1652 = vld [vmem:[%s1643 + $0x40] sm:$0xff]
      %v1653 = vld [vmem:[%s1643 + $0x48] sm:$0xff]
      %v1654 = vld [vmem:[%s1643 + $0x50] sm:$0xff]
      %v1655 = vld [vmem:[%s1643 + $0x58] sm:$0xff]
      %v1656 = vld [vmem:[%s1643 + $0x60] sm:$0xff]
      %v1657 = vld [vmem:[%s1643 + $0x68] sm:$0xff]
      %v1658 = vld [vmem:[%s1643 + $0x70] sm:$0xff]
      %v1659 = vld [vmem:[%s1643 + $0x78] sm:$0xff]
      %1660 = vmatpush.msra.mxu0 %v1659
      %1661 = vmatpush.msra.mxu0 %v1658
      %1662 = vmatpush.msra.mxu0 %v1657
      %1663 = vmatpush.msra.mxu0 %v1656
      %1664 = vmatpush.msra.mxu0 %v1655
      %1665 = vmatpush.msra.mxu0 %v1654
      %1666 = vmatpush.msra.mxu0 %v1653
      %1667 = vmatpush.msra.mxu0 %v1652
      %1668 = vmatpush.msra.mxu0 %v1651
      %1669 = vmatpush.msra.mxu0 %v1650
      %1670 = vmatpush.msra.mxu0 %v1649
      %1671 = vmatpush.msra.mxu0 %v1648
      %1672 = vmatpush.msra.mxu0 %v1647
      %1673 = vmatpush.msra.mxu0 %v1646
      %1674 = vmatpush.msra.mxu0 %v1645
      %1675 = vmatpush.msra.mxu0 %v1644
      %1676 = vmatmul.f32.gmra.mxu0 %v1641
      %v1677 = vpop.f32.mrf.mxu0
      %v1678 = vadd.f32 0.0, %v1677
      %1679 = vmatmul.f32.gmra.mxu0 %v1642
      %v1680 = vpop.f32.mrf.mxu0
      %v1681 = vadd.f32 0.0, %v1680
      %1682 = vdwg.mxu0
      %v1683 = vadd.f32 %v1636, %v1678
      %v1684 = vadd.f32 %v1639, %v1681
      %v1685 = vld [vmem:[#allocation4 + $0x3] sm:$0xff]
      %v1686 = vld [vmem:[#allocation4 + $0xb] sm:$0xf]
      %s1687 = scalar_lea.vmem %s7, 384
      %v1688 = vld [vmem:[%s1687] sm:$0xff]
      %v1689 = vld [vmem:[%s1687 + $0x8] sm:$0xff]
      %v1690 = vld [vmem:[%s1687 + $0x10] sm:$0xff]
      %v1691 = vld [vmem:[%s1687 + $0x18] sm:$0xff]
      %v1692 = vld [vmem:[%s1687 + $0x20] sm:$0xff]
      %v1693 = vld [vmem:[%s1687 + $0x28] sm:$0xff]
      %v1694 = vld [vmem:[%s1687 + $0x30] sm:$0xff]
      %v1695 = vld [vmem:[%s1687 + $0x38] sm:$0xff]
      %v1696 = vld [vmem:[%s1687 + $0x40] sm:$0xff]
      %v1697 = vld [vmem:[%s1687 + $0x48] sm:$0xff]
      %v1698 = vld [vmem:[%s1687 + $0x50] sm:$0xff]
      %v1699 = vld [vmem:[%s1687 + $0x58] sm:$0xff]
      %v1700 = vld [vmem:[%s1687 + $0x60] sm:$0xff]
      %v1701 = vld [vmem:[%s1687 + $0x68] sm:$0xff]
      %v1702 = vld [vmem:[%s1687 + $0x70] sm:$0xff]
      %v1703 = vld [vmem:[%s1687 + $0x78] sm:$0xff]
      %1704 = vmatpush.msra.mxu0 %v1703
      %1705 = vmatpush.msra.mxu0 %v1702
      %1706 = vmatpush.msra.mxu0 %v1701
      %1707 = vmatpush.msra.mxu0 %v1700
      %1708 = vmatpush.msra.mxu0 %v1699
      %1709 = vmatpush.msra.mxu0 %v1698
      %1710 = vmatpush.msra.mxu0 %v1697
      %1711 = vmatpush.msra.mxu0 %v1696
      %1712 = vmatpush.msra.mxu0 %v1695
      %1713 = vmatpush.msra.mxu0 %v1694
      %1714 = vmatpush.msra.mxu0 %v1693
      %1715 = vmatpush.msra.mxu0 %v1692
      %1716 = vmatpush.msra.mxu0 %v1691
      %1717 = vmatpush.msra.mxu0 %v1690
      %1718 = vmatpush.msra.mxu0 %v1689
      %1719 = vmatpush.msra.mxu0 %v1688
      %1720 = vmatmul.f32.gmra.mxu0 %v1685
      %v1721 = vpop.f32.mrf.mxu0
      %v1722 = vadd.f32 0.0, %v1721
      %1723 = vmatmul.f32.gmra.mxu0 %v1686
      %v1724 = vpop.f32.mrf.mxu0
      %v1725 = vadd.f32 0.0, %v1724
      %1726 = vdwg.mxu0
      %v1727 = vadd.f32 %v1683, %v1722
      %v1728 = vadd.f32 %v1684, %v1725
      %v1729 = vld [vmem:[#allocation4 + $0x4] sm:$0xff]
      %v1730 = vld [vmem:[#allocation4 + $0xc] sm:$0xf]
      %s1731 = scalar_lea.vmem %s7, 512
      %v1732 = vld [vmem:[%s1731] sm:$0xff]
      %v1733 = vld [vmem:[%s1731 + $0x8] sm:$0xff]
      %v1734 = vld [vmem:[%s1731 + $0x10] sm:$0xff]
      %v1735 = vld [vmem:[%s1731 + $0x18] sm:$0xff]
      %v1736 = vld [vmem:[%s1731 + $0x20] sm:$0xff]
      %v1737 = vld [vmem:[%s1731 + $0x28] sm:$0xff]
      %v1738 = vld [vmem:[%s1731 + $0x30] sm:$0xff]
      %v1739 = vld [vmem:[%s1731 + $0x38] sm:$0xff]
      %v1740 = vld [vmem:[%s1731 + $0x40] sm:$0xff]
      %v1741 = vld [vmem:[%s1731 + $0x48] sm:$0xff]
      %v1742 = vld [vmem:[%s1731 + $0x50] sm:$0xff]
      %v1743 = vld [vmem:[%s1731 + $0x58] sm:$0xff]
      %v1744 = vld [vmem:[%s1731 + $0x60] sm:$0xff]
      %v1745 = vld [vmem:[%s1731 + $0x68] sm:$0xff]
      %v1746 = vld [vmem:[%s1731 + $0x70] sm:$0xff]
      %v1747 = vld [vmem:[%s1731 + $0x78] sm:$0xff]
      %1748 = vmatpush.msra.mxu0 %v1747
      %1749 = vmatpush.msra.mxu0 %v1746
      %1750 = vmatpush.msra.mxu0 %v1745
      %1751 = vmatpush.msra.mxu0 %v1744
      %1752 = vmatpush.msra.mxu0 %v1743
      %1753 = vmatpush.msra.mxu0 %v1742
      %1754 = vmatpush.msra.mxu0 %v1741
      %1755 = vmatpush.msra.mxu0 %v1740
      %1756 = vmatpush.msra.mxu0 %v1739
      %1757 = vmatpush.msra.mxu0 %v1738
      %1758 = vmatpush.msra.mxu0 %v1737
      %1759 = vmatpush.msra.mxu0 %v1736
      %1760 = vmatpush.msra.mxu0 %v1735
      %1761 = vmatpush.msra.mxu0 %v1734
      %1762 = vmatpush.msra.mxu0 %v1733
      %1763 = vmatpush.msra.mxu0 %v1732
      %1764 = vmatmul.f32.gmra.mxu0 %v1729
      %v1765 = vpop.f32.mrf.mxu0
      %v1766 = vadd.f32 0.0, %v1765
      %1767 = vmatmul.f32.gmra.mxu0 %v1730
      %v1768 = vpop.f32.mrf.mxu0
      %v1769 = vadd.f32 0.0, %v1768
      %1770 = vdwg.mxu0
      %v1771 = vadd.f32 %v1727, %v1766
      %v1772 = vadd.f32 %v1728, %v1769
      %v1773 = vld [vmem:[#allocation4 + $0x5] sm:$0xff]
      %v1774 = vld [vmem:[#allocation4 + $0xd] sm:$0xf]
      %s1775 = scalar_lea.vmem %s7, 640
      %v1776 = vld [vmem:[%s1775] sm:$0xff]
      %v1777 = vld [vmem:[%s1775 + $0x8] sm:$0xff]
      %v1778 = vld [vmem:[%s1775 + $0x10] sm:$0xff]
      %v1779 = vld [vmem:[%s1775 + $0x18] sm:$0xff]
      %v1780 = vld [vmem:[%s1775 + $0x20] sm:$0xff]
      %v1781 = vld [vmem:[%s1775 + $0x28] sm:$0xff]
      %v1782 = vld [vmem:[%s1775 + $0x30] sm:$0xff]
      %v1783 = vld [vmem:[%s1775 + $0x38] sm:$0xff]
      %v1784 = vld [vmem:[%s1775 + $0x40] sm:$0xff]
      %v1785 = vld [vmem:[%s1775 + $0x48] sm:$0xff]
      %v1786 = vld [vmem:[%s1775 + $0x50] sm:$0xff]
      %v1787 = vld [vmem:[%s1775 + $0x58] sm:$0xff]
      %v1788 = vld [vmem:[%s1775 + $0x60] sm:$0xff]
      %v1789 = vld [vmem:[%s1775 + $0x68] sm:$0xff]
      %v1790 = vld [vmem:[%s1775 + $0x70] sm:$0xff]
      %v1791 = vld [vmem:[%s1775 + $0x78] sm:$0xff]
      %1792 = vmatpush.msra.mxu0 %v1791
      %1793 = vmatpush.msra.mxu0 %v1790
      %1794 = vmatpush.msra.mxu0 %v1789
      %1795 = vmatpush.msra.mxu0 %v1788
      %1796 = vmatpush.msra.mxu0 %v1787
      %1797 = vmatpush.msra.mxu0 %v1786
      %1798 = vmatpush.msra.mxu0 %v1785
      %1799 = vmatpush.msra.mxu0 %v1784
      %1800 = vmatpush.msra.mxu0 %v1783
      %1801 = vmatpush.msra.mxu0 %v1782
      %1802 = vmatpush.msra.mxu0 %v1781
      %1803 = vmatpush.msra.mxu0 %v1780
      %1804 = vmatpush.msra.mxu0 %v1779
      %1805 = vmatpush.msra.mxu0 %v1778
      %1806 = vmatpush.msra.mxu0 %v1777
      %1807 = vmatpush.msra.mxu0 %v1776
      %1808 = vmatmul.f32.gmra.mxu0 %v1773
      %v1809 = vpop.f32.mrf.mxu0
      %v1810 = vadd.f32 0.0, %v1809
      %1811 = vmatmul.f32.gmra.mxu0 %v1774
      %v1812 = vpop.f32.mrf.mxu0
      %v1813 = vadd.f32 0.0, %v1812
      %1814 = vdwg.mxu0
      %v1815 = vadd.f32 %v1771, %v1810
      %v1816 = vadd.f32 %v1772, %v1813
      %v1817 = vld [vmem:[%s8] sm:$0x1]
      %v1819 = vperm.slane %v1817, 0
      %v1821 = vadd.f32 %v1815, %v1819
      %v1822 = vadd.f32 %v1816, %v1819
      %v1823 = vmul.f32 %v1821, 0.01
      %v1824 = vmul.f32 %v1822, 0.01
      %v1825 = vmax.f32 %v1821, %v1823
      %v1826 = vmax.f32 %v1822, %v1824
      %1827 = vst [vmem:[%s330] sm:$0x1] %v1825
      %vm1828 = vcmask 1042433
      %v1829 = vsel %vm1828, %v1825, -inf
      %v1830 = vrot.slane %v1829, 4
      %v1831 = vmax.f32 %v1829, %v1830
      %v1832 = vrot.slane %v1831, 2
      %v1833 = vmax.f32 %v1831, %v1832
      %v1834 = vrot.slane %v1833, 1
      %v1835 = vmax.f32 %v1833, %v1834
      %1836 = vst [vmem:[%s330 + $0x1] sm:$0x1] %v1835
      %vm1837 = vcmask 1044483
      %v1838 = vsel %vm1837, %v1825, -inf
      %v1839 = vrot.slane %v1838, 4
      %v1840 = vmax.f32 %v1838, %v1839
      %v1841 = vrot.slane %v1840, 2
      %v1842 = vmax.f32 %v1840, %v1841
      %v1843 = vrot.slane %v1842, 1
      %v1844 = vmax.f32 %v1842, %v1843
      %1845 = vst [vmem:[%s330 + $0x2] sm:$0x1] %v1844
      %vm1846 = vcmask 1046533
      %v1847 = vsel %vm1846, %v1825, -inf
      %v1848 = vrot.slane %v1847, 4
      %v1849 = vmax.f32 %v1847, %v1848
      %v1850 = vrot.slane %v1849, 2
      %v1851 = vmax.f32 %v1849, %v1850
      %v1852 = vrot.slane %v1851, 1
      %v1853 = vmax.f32 %v1851, %v1852
      %1854 = vst [vmem:[%s330 + $0x3] sm:$0x1] %v1853
      %vm1855 = vcmask 1047559
      %v1856 = vsel %vm1855, %v1825, -inf
      %v1857 = vsel %vm1038, %v1826, -inf
      %v1858 = vmax.f32 %v1856, %v1857
      %v1859 = vrot.slane %v1858, 4
      %v1860 = vmax.f32 %v1858, %v1859
      %v1861 = vrot.slane %v1860, 2
      %v1862 = vmax.f32 %v1860, %v1861
      %v1863 = vrot.slane %v1862, 1
      %v1864 = vmax.f32 %v1862, %v1863
      %1865 = vst [vmem:[%s330 + $0x4] sm:$0x1] %v1864
      %v1866 = vsel %vm1828, %v1826, -inf
      %v1867 = vrot.slane %v1866, 4
      %v1868 = vmax.f32 %v1866, %v1867
      %v1869 = vrot.slane %v1868, 2
      %v1870 = vmax.f32 %v1868, %v1869
      %v1871 = vrot.slane %v1870, 1
      %v1872 = vmax.f32 %v1870, %v1871
      %1873 = vst [vmem:[%s330 + $0x5] sm:$0x1] %v1872
      %1874 = vst [vmem:[%s330 + $0x3] sm:$0x8] %v1826
      %p1875 = scmp.lt.s32.totalorder %s20, 1
      %s1876 = scalar_select %p1875, %s20, 1
      %s1877 = smul.addr %s1876, 8
      %s1878 = scalar_lea.vmem %s9, %s1877
      // Predicated region
      $region57: #{temporal_feature_eeg.3} parent=55 // pred_check
        %p1879 = pneg %p232
      $region58: #{temporal_feature_eeg.3} parent=55 // pred_check_branch
        %1881 = sbr.rel (%p1879) target = $region60
      $region59: #{temporal_feature_eeg.3} parent=55 // pred_region
        _
      $region60: #{temporal_feature_eeg.3} parent=55 // pred_fallthru
        _
    $region56: #{temporal_feature_eeg.3} parent=5 // pred_fallthru
      _
    %p1882 = scmp.le.s32.totalorder 2, %s15
    // Predicated region
    $region61: #{temporal_feature_eeg.3} parent=5 // pred_check
      %p1883 = pneg %p1882
    $region62: #{temporal_feature_eeg.3} parent=5 // pred_check_branch
      %1885 = sbr.rel (%p1883) target = $region64
    $region63: #{temporal_feature_eeg.3} parent=5 // pred_region
      %s1886 = ssub.s32 %s15, 2
      // Predicated region
      $region65: #{temporal_feature_eeg.3} parent=63 // pred_check
        %p1887 = pneg %p238
      $region66: #{temporal_feature_eeg.3} parent=63 // pred_check_branch
        %1889 = sbr.rel (%p1887) target = $region68
      $region67: #{temporal_feature_eeg.3} parent=63 // pred_region
        %p1890 = scmp.lt.s32.totalorder %s21, 1
        %s1891 = scalar_select %p1890, %s21, 1
        %s1892 = smul.addr %s1891, 8
        %s1893 = scalar_lea.vmem %s9, %s1892
      $region68: #{temporal_feature_eeg.3} parent=63 // pred_fallthru
        _
    $region64: #{temporal_feature_eeg.3} parent=5 // pred_fallthru
      _
  $region6: #{temporal_feature_eeg.3} parent=0 // loop_footer
    %s19 = sadd.s32 1, %s15
  $region7: #{temporal_feature_eeg.3} parent=0 // loop_footer_branch
    %14 = sbr.rel target = $region3
  $region8: #{temporal_feature_eeg.3} parent=0 // loop_exit
    _

// kernel: temporal_feature_eeg.2
$region0: #{temporal_feature_eeg.2}
  #allocation0 [shape = 'u32[]', space=smem, size = 0x4, offset = 0x4, fixed_abs, tag = 'smem constant byte address 0x4 - core index']
  #allocation1 [shape = 'u32[72,128]{1,0:T(1,128)}', space=vmem, size = 0x9000, scoped, tag = 'internal scratch']
  #allocation2 [shape = 'f32[24,128]{1,0:T(8,128)}', space=vmem, size = 0x3000, scoped, tag = 'scratch operand']
  #allocation3 [shape = 'f32[25,128]{1,0:T(8,128)}', space=vmem, size = 0x4000, scoped, tag = 'scratch operand']
  #allocation4 [shape = 'f32[26,128]{1,0:T(8,128)}', space=vmem, size = 0x4000, scoped, tag = 'scratch operand']
  %s0 = inlined_call_operand.vmem [shape: bf16[2,127,128], index: 0, kind: input, shape index: {}]
  %s1 = inlined_call_operand.vmem [shape: bf16[128,128], index: 1, kind: input, shape index: {}]
  %s2 = inlined_call_operand.vmem [shape: f32[1,128], index: 2, kind: input, shape index: {}]
  %s3 = inlined_call_operand.vmem [shape: f32[8,128,128], index: 3, kind: input, shape index: {}]
  %s4 = inlined_call_operand.vmem [shape: f32[1,128], index: 4, kind: input, shape index: {}]
  %s5 = inlined_call_operand.vmem [shape: f32[8,128,128], index: 5, kind: input, shape index: {}]
  %s6 = inlined_call_operand.vmem [shape: f32[1,128], index: 6, kind: input, shape index: {}]
  %s7 = inlined_call_operand.vmem [shape: f32[8,128,128], index: 7, kind: input, shape index: {}]
  %s8 = inlined_call_operand.vmem [shape: f32[1,128], index: 8, kind: input, shape index: {}]
  %s9 = inlined_call_operand.vmem [shape: f32[2,5,128], index: 9, kind: output, shape index: {}]
  %s10 = sld [smem:[#allocation0]]
  $region69: #{temporal_feature_eeg.2} parent=0
    _
  %s12 = ssub.s32 1, %s10
  %s13 = scalar_select 0, %s12, %s10
  loop: start=0, step=1, limit=4
  $region2: #{temporal_feature_eeg.2} parent=0 // loop_pre_header
    _
  $region3: #{temporal_feature_eeg.2} parent=0 // loop_header
    %s15 = sphi 0, %s19
    %p16 = scmp.ge.s32.totalorder %s15, 4
    %s25 = sphi 0, %s27
    %s28 = sphi 0, %s25
    %s29 = sphi 0, %s28
    %s45 = sphi 0, %s29
    %s49 = sphi 0, %s49
    %s51 = sphi 0, %s49
    %s52 = sphi 0, %s51
    %s66 = sphi 0, %s52
    %s70 = sphi 0, %s70
    %s72 = sphi 0, %s70
    %s73 = sphi 0, %s72
    %s87 = sphi 0, %s73
    %s91 = sphi 0, %s91
    %s93 = sphi 0, %s91
    %s94 = sphi 0, %s93
    %s108 = sphi 0, %s94
    %s112 = sphi 0, %s112
    %s114 = sphi 0, %s112
    %s115 = sphi 0, %s114
    %s129 = sphi 0, %s115
    %s133 = sphi 0, %s133
    %s135 = sphi 0, %s133
    %s136 = sphi 0, %s135
    %s150 = sphi 0, %s136
    %s154 = sphi 0, %s154
    %s156 = sphi 0, %s154
    %s157 = sphi 0, %s156
    %s171 = sphi 0, %s157
    %s175 = sphi 0, %s175
    %s177 = sphi 0, %s175
    %s178 = sphi 0, %s177
    %s192 = sphi 0, %s178
    %s196 = sphi 0, %s196
    %s198 = sphi 0, %s196
    %s199 = sphi 0, %s198
    %s213 = sphi 0, %s199
    %s219 = sphi 0, %s221
    %s222 = sphi 0, %s219
    %s223 = sphi 0, %s222
    %s239 = sphi 0, %s223
  $region4: #{temporal_feature_eeg.2} parent=0 // loop_header_branch
    %18 = sbr.rel (%p16) target = $region8
  $region5: #{temporal_feature_eeg.2} parent=0 // loop_body
    %s20 = ssub.s32 %s15, 1
    %s21 = ssub.s32 %s15, 2
    %s22 = sadd.s32 %s15, 1
    %s23 = ssub.s32 %s15, %s22
    %p24 = scmp.eq.s32.totalorder %s23, 0
    %s26 = sadd.s32 %s25, 1
    %s27 = scalar_select %p24, %s25, %s26
    %p30 = pneg %p24
    %p31 = scmp.eq.s32.totalorder %s15, 1
    %p32 = por %p30, %p31
    %p33 = scmp.ne.s32.totalorder %s25, %s28
    %p34 = scmp.eq.s32.totalorder %s15, 0
    %p35 = por %p33, %p34
    %p36 = scmp.ne.s32.totalorder %s25, %s28
    %p37 = scmp.eq.s32.totalorder %s20, 1
    %p38 = por %p36, %p37
    %p39 = scmp.ne.s32.totalorder %s28, %s29
    %p40 = scmp.eq.s32.totalorder %s20, 0
    %p41 = por %p39, %p40
    %p42 = scmp.ne.s32.totalorder %s28, %s29
    %p43 = scmp.eq.s32.totalorder %s21, 1
    %p44 = por %p42, %p43
    %p46 = scmp.ne.s32.totalorder %s29, %s45
    %p47 = scmp.eq.s32.totalorder %s21, 0
    %p48 = por %p46, %p47
    %s50 = sadd.s32 %s49, 1
    %p53 = scmp.eq.s32.totalorder %s15, 1
    %p54 = scmp.ne.s32.totalorder %s49, %s51
    %p55 = scmp.eq.s32.totalorder %s15, 0
    %p56 = por %p54, %p55
    %p57 = scmp.ne.s32.totalorder %s49, %s51
    %p58 = scmp.eq.s32.totalorder %s20, 1
    %p59 = por %p57, %p58
    %p60 = scmp.ne.s32.totalorder %s51, %s52
    %p61 = scmp.eq.s32.totalorder %s20, 0
    %p62 = por %p60, %p61
    %p63 = scmp.ne.s32.totalorder %s51, %s52
    %p64 = scmp.eq.s32.totalorder %s21, 1
    %p65 = por %p63, %p64
    %p67 = scmp.ne.s32.totalorder %s52, %s66
    %p68 = scmp.eq.s32.totalorder %s21, 0
    %p69 = por %p67, %p68
    %s71 = sadd.s32 %s70, 1
    %p74 = scmp.eq.s32.totalorder %s15, 1
    %p75 = scmp.ne.s32.totalorder %s70, %s72
    %p76 = scmp.eq.s32.totalorder %s15, 0
    %p77 = por %p75, %p76
    %p78 = scmp.ne.s32.totalorder %s70, %s72
    %p79 = scmp.eq.s32.totalorder %s20, 1
    %p80 = por %p78, %p79
    %p81 = scmp.ne.s32.totalorder %s72, %s73
    %p82 = scmp.eq.s32.totalorder %s20, 0
    %p83 = por %p81, %p82
    %p84 = scmp.ne.s32.totalorder %s72, %s73
    %p85 = scmp.eq.s32.totalorder %s21, 1
    %p86 = por %p84, %p85
    %p88 = scmp.ne.s32.totalorder %s73, %s87
    %p89 = scmp.eq.s32.totalorder %s21, 0
    %p90 = por %p88, %p89
    %s92 = sadd.s32 %s91, 1
    %p95 = scmp.eq.s32.totalorder %s15, 1
    %p96 = scmp.ne.s32.totalorder %s91, %s93
    %p97 = scmp.eq.s32.totalorder %s15, 0
    %p98 = por %p96, %p97
    %p99 = scmp.ne.s32.totalorder %s91, %s93
    %p100 = scmp.eq.s32.totalorder %s20, 1
    %p101 = por %p99, %p100
    %p102 = scmp.ne.s32.totalorder %s93, %s94
    %p103 = scmp.eq.s32.totalorder %s20, 0
    %p104 = por %p102, %p103
    %p105 = scmp.ne.s32.totalorder %s93, %s94
    %p106 = scmp.eq.s32.totalorder %s21, 1
    %p107 = por %p105, %p106
    %p109 = scmp.ne.s32.totalorder %s94, %s108
    %p110 = scmp.eq.s32.totalorder %s21, 0
    %p111 = por %p109, %p110
    %s113 = sadd.s32 %s112, 1
    %p116 = scmp.eq.s32.totalorder %s15, 1
    %p117 = scmp.ne.s32.totalorder %s112, %s114
    %p118 = scmp.eq.s32.totalorder %s15, 0
    %p119 = por %p117, %p118
    %p120 = scmp.ne.s32.totalorder %s112, %s114
    %p121 = scmp.eq.s32.totalorder %s20, 1
    %p122 = por %p120, %p121
    %p123 = scmp.ne.s32.totalorder %s114, %s115
    %p124 = scmp.eq.s32.totalorder %s20, 0
    %p125 = por %p123, %p124
    %p126 = scmp.ne.s32.totalorder %s114, %s115
    %p127 = scmp.eq.s32.totalorder %s21, 1
    %p128 = por %p126, %p127
    %p130 = scmp.ne.s32.totalorder %s115, %s129
    %p131 = scmp.eq.s32.totalorder %s21, 0
    %p132 = por %p130, %p131
    %s134 = sadd.s32 %s133, 1
    %p137 = scmp.eq.s32.totalorder %s15, 1
    %p138 = scmp.ne.s32.totalorder %s133, %s135
    %p139 = scmp.eq.s32.totalorder %s15, 0
    %p140 = por %p138, %p139
    %p141 = scmp.ne.s32.totalorder %s133, %s135
    %p142 = scmp.eq.s32.totalorder %s20, 1
    %p143 = por %p141, %p142
    %p144 = scmp.ne.s32.totalorder %s135, %s136
    %p145 = scmp.eq.s32.totalorder %s20, 0
    %p146 = por %p144, %p145
    %p147 = scmp.ne.s32.totalorder %s135, %s136
    %p148 = scmp.eq.s32.totalorder %s21, 1
    %p149 = por %p147, %p148
    %p151 = scmp.ne.s32.totalorder %s136, %s150
    %p152 = scmp.eq.s32.totalorder %s21, 0
    %p153 = por %p151, %p152
    %s155 = sadd.s32 %s154, 1
    %p158 = scmp.eq.s32.totalorder %s15, 1
    %p159 = scmp.ne.s32.totalorder %s154, %s156
    %p160 = scmp.eq.s32.totalorder %s15, 0
    %p161 = por %p159, %p160
    %p162 = scmp.ne.s32.totalorder %s154, %s156
    %p163 = scmp.eq.s32.totalorder %s20, 1
    %p164 = por %p162, %p163
    %p165 = scmp.ne.s32.totalorder %s156, %s157
    %p166 = scmp.eq.s32.totalorder %s20, 0
    %p167 = por %p165, %p166
    %p168 = scmp.ne.s32.totalorder %s156, %s157
    %p169 = scmp.eq.s32.totalorder %s21, 1
    %p170 = por %p168, %p169
    %p172 = scmp.ne.s32.totalorder %s157, %s171
    %p173 = scmp.eq.s32.totalorder %s21, 0
    %p174 = por %p172, %p173
    %s176 = sadd.s32 %s175, 1
    %p179 = scmp.eq.s32.totalorder %s15, 1
    %p180 = scmp.ne.s32.totalorder %s175, %s177
    %p181 = scmp.eq.s32.totalorder %s15, 0
    %p182 = por %p180, %p181
    %p183 = scmp.ne.s32.totalorder %s175, %s177
    %p184 = scmp.eq.s32.totalorder %s20, 1
    %p185 = por %p183, %p184
    %p186 = scmp.ne.s32.totalorder %s177, %s178
    %p187 = scmp.eq.s32.totalorder %s20, 0
    %p188 = por %p186, %p187
    %p189 = scmp.ne.s32.totalorder %s177, %s178
    %p190 = scmp.eq.s32.totalorder %s21, 1
    %p191 = por %p189, %p190
    %p193 = scmp.ne.s32.totalorder %s178, %s192
    %p194 = scmp.eq.s32.totalorder %s21, 0
    %p195 = por %p193, %p194
    %s197 = sadd.s32 %s196, 1
    %p200 = scmp.eq.s32.totalorder %s15, 1
    %p201 = scmp.ne.s32.totalorder %s196, %s198
    %p202 = scmp.eq.s32.totalorder %s15, 0
    %p203 = por %p201, %p202
    %p204 = scmp.ne.s32.totalorder %s196, %s198
    %p205 = scmp.eq.s32.totalorder %s20, 1
    %p206 = por %p204, %p205
    %p207 = scmp.ne.s32.totalorder %s198, %s199
    %p208 = scmp.eq.s32.totalorder %s20, 0
    %p209 = por %p207, %p208
    %p210 = scmp.ne.s32.totalorder %s198, %s199
    %p211 = scmp.eq.s32.totalorder %s21, 1
    %p212 = por %p210, %p211
    %p214 = scmp.ne.s32.totalorder %s199, %s213
    %p215 = scmp.eq.s32.totalorder %s21, 0
    %p216 = por %p214, %p215
    %s217 = ssub.s32 %s15, %s22
    %p218 = scmp.eq.s32.totalorder %s217, 0
    %s220 = sadd.s32 %s219, 1
    %s221 = scalar_select %p218, %s219, %s220
    %p224 = pneg %p218
    %p225 = scmp.eq.s32.totalorder %s15, 1
    %p226 = por %p224, %p225
    %p227 = scmp.ne.s32.totalorder %s219, %s222
    %p228 = scmp.eq.s32.totalorder %s15, 0
    %p229 = por %p227, %p228
    %p230 = scmp.ne.s32.totalorder %s219, %s222
    %p231 = scmp.eq.s32.totalorder %s20, 1
    %p232 = por %p230, %p231
    %p233 = scmp.ne.s32.totalorder %s222, %s223
    %p234 = scmp.eq.s32.totalorder %s20, 0
    %p235 = por %p233, %p234
    %p236 = scmp.ne.s32.totalorder %s222, %s223
    %p237 = scmp.eq.s32.totalorder %s21, 1
    %p238 = por %p236, %p237
    %p240 = scmp.ne.s32.totalorder %s223, %s239
    %p241 = scmp.eq.s32.totalorder %s21, 0
    %p242 = por %p240, %p241
    %p243 = scmp.le.s32.totalorder 1, %s15
    %p244 = scmp.lt.s32.totalorder %s15, 3
    %p245 = pnand %p243, %p244
    %p246 = pneg %p245
    // Predicated region
    $region9: #{temporal_feature_eeg.2} parent=5 // pred_check
      _
    $region10: #{temporal_feature_eeg.2} parent=5 // pred_check_branch
      %248 = sbr.rel (%p245) target = $region12
    $region11: #{temporal_feature_eeg.2} parent=5 // pred_region
      %s249 = ssub.s32 %s15, 1
      // Predicated region
      $region13: #{temporal_feature_eeg.2} parent=11 // pred_check
        %p250 = pneg %p62
      $region14: #{temporal_feature_eeg.2} parent=11 // pred_check_branch
        %252 = sbr.rel (%p250) target = $region16
      $region15: #{temporal_feature_eeg.2} parent=11 // pred_region
        _
      $region16: #{temporal_feature_eeg.2} parent=11 // pred_fallthru
        _
      // Predicated region
      $region17: #{temporal_feature_eeg.2} parent=11 // pred_check
        %p253 = pneg %p83
      $region18: #{temporal_feature_eeg.2} parent=11 // pred_check_branch
        %255 = sbr.rel (%p253) target = $region20
      $region19: #{temporal_feature_eeg.2} parent=11 // pred_region
        _
      $region20: #{temporal_feature_eeg.2} parent=11 // pred_fallthru
        _
      // Predicated region
      $region21: #{temporal_feature_eeg.2} parent=11 // pred_check
        %p256 = pneg %p104
      $region22: #{temporal_feature_eeg.2} parent=11 // pred_check_branch
        %258 = sbr.rel (%p256) target = $region24
      $region23: #{temporal_feature_eeg.2} parent=11 // pred_region
        _
      $region24: #{temporal_feature_eeg.2} parent=11 // pred_fallthru
        _
      // Predicated region
      $region25: #{temporal_feature_eeg.2} parent=11 // pred_check
        %p259 = pneg %p125
      $region26: #{temporal_feature_eeg.2} parent=11 // pred_check_branch
        %261 = sbr.rel (%p259) target = $region28
      $region27: #{temporal_feature_eeg.2} parent=11 // pred_region
        _
      $region28: #{temporal_feature_eeg.2} parent=11 // pred_fallthru
        _
      // Predicated region
      $region29: #{temporal_feature_eeg.2} parent=11 // pred_check
        %p262 = pneg %p146
      $region30: #{temporal_feature_eeg.2} parent=11 // pred_check_branch
        %264 = sbr.rel (%p262) target = $region32
      $region31: #{temporal_feature_eeg.2} parent=11 // pred_region
        _
      $region32: #{temporal_feature_eeg.2} parent=11 // pred_fallthru
        _
      // Predicated region
      $region33: #{temporal_feature_eeg.2} parent=11 // pred_check
        %p265 = pneg %p167
      $region34: #{temporal_feature_eeg.2} parent=11 // pred_check_branch
        %267 = sbr.rel (%p265) target = $region36
      $region35: #{temporal_feature_eeg.2} parent=11 // pred_region
        _
      $region36: #{temporal_feature_eeg.2} parent=11 // pred_fallthru
        _
      // Predicated region
      $region37: #{temporal_feature_eeg.2} parent=11 // pred_check
        %p268 = pneg %p188
      $region38: #{temporal_feature_eeg.2} parent=11 // pred_check_branch
        %270 = sbr.rel (%p268) target = $region40
      $region39: #{temporal_feature_eeg.2} parent=11 // pred_region
        _
      $region40: #{temporal_feature_eeg.2} parent=11 // pred_fallthru
        _
      // Predicated region
      $region41: #{temporal_feature_eeg.2} parent=11 // pred_check
        %p271 = pneg %p209
      $region42: #{temporal_feature_eeg.2} parent=11 // pred_check_branch
        %273 = sbr.rel (%p271) target = $region44
      $region43: #{temporal_feature_eeg.2} parent=11 // pred_region
        _
      $region44: #{temporal_feature_eeg.2} parent=11 // pred_fallthru
        _
    $region12: #{temporal_feature_eeg.2} parent=5 // pred_fallthru
      _
    %p274 = scmp.lt.s32.totalorder %s15, 2
    // Predicated region
    $region45: #{temporal_feature_eeg.2} parent=5 // pred_check
      %p275 = pneg %p274
    $region46: #{temporal_feature_eeg.2} parent=5 // pred_check_branch
      %277 = sbr.rel (%p275) target = $region48
    $region47: #{temporal_feature_eeg.2} parent=5 // pred_region
      // Predicated region
      $region49: #{temporal_feature_eeg.2} parent=47 // pred_check
        %p278 = pneg %p35
      $region50: #{temporal_feature_eeg.2} parent=47 // pred_check_branch
        %280 = sbr.rel (%p278) target = $region52
      $region51: #{temporal_feature_eeg.2} parent=47 // pred_region
        %p281 = scmp.lt.s32.totalorder %s15, 1
        %s282 = scalar_select %p281, %s15, 1
        %s283 = smul.addr %s282, 16
        %s284 = smul.addr %s283, 4
        %s285 = scalar_lea.vmem %s0, %s284
      $region52: #{temporal_feature_eeg.2} parent=47 // pred_fallthru
        _
    $region48: #{temporal_feature_eeg.2} parent=5 // pred_fallthru
      _
    %p286 = scmp.le.s32.totalorder 1, %s15
    %p287 = scmp.lt.s32.totalorder %s15, 3
    %p288 = pnand %p286, %p287
    %p289 = pneg %p288
    // Predicated region
    $region53: #{temporal_feature_eeg.2} parent=5 // pred_check
      _
    $region54: #{temporal_feature_eeg.2} parent=5 // pred_check_branch
      %291 = sbr.rel (%p288) target = $region56
    $region55: #{temporal_feature_eeg.2} parent=5 // pred_region
      %s292 = ssub.s32 %s15, 1
      %p293 = scmp.lt.s32.totalorder %s20, 1
      %s294 = scalar_select %p293, %s20, 1
      %s295 = smul.addr %s294, 16
      %s296 = smul.addr %s295, 4
      %s297 = scalar_lea.vmem %s0, %s296
      %p298 = pneg %p41
      %p299 = pneg %p38
      %p300 = pneg %p62
      %p301 = pneg %p59
      %p302 = pneg %p83
      %p303 = pneg %p80
      %p304 = pneg %p104
      %p305 = pneg %p101
      %p306 = pneg %p125
      %p307 = pneg %p122
      %p308 = pneg %p146
      %p309 = pneg %p143
      %p310 = pneg %p167
      %p311 = pneg %p164
      %p312 = pneg %p188
      %p313 = pneg %p185
      %p314 = pneg %p209
      %p315 = pneg %p206
      %p316 = pneg %p235
      %p317 = pneg %p232
      %p318 = scmp.lt.s32.totalorder %s20, 1
      %s319 = scalar_select %p318, %s20, 1
      %s320 = smul.addr %s319, 8
      %s321 = scalar_lea.vmem %s9, %s320
      %p322 = scmp.lt.s32.totalorder %s20, 1
      %s323 = scalar_select %p322, %s20, 1
      %s324 = smul.addr %s323, 16
      %s325 = smul.addr %s324, 4
      %s326 = scalar_lea.vmem %s0, %s325
      %p327 = scmp.lt.s32.totalorder %s20, 1
      %s328 = scalar_select %p327, %s20, 1
      %s329 = smul.addr %s328, 8
      %s330 = scalar_lea.vmem %s9, %s329
      %331 = vst [vmem:[#allocation2] sm:$0xff] 0.0
      %332 = vst [vmem:[#allocation2 + $0x8] sm:$0xff] 0.0
      %333 = vst [vmem:[#allocation2 + $0x10] sm:$0xff] 0.0
      %334 = vst [vmem:[#allocation3] sm:$0xff] 0.0
      %335 = vst [vmem:[#allocation3 + $0x8] sm:$0xff] 0.0
      %336 = vst [vmem:[#allocation3 + $0x10] sm:$0xff] 0.0
      %337 = vst [vmem:[#allocation3 + $0x18] sm:$0x1] 0.0
      %338 = vst [vmem:[#allocation4] sm:$0xff] 0.0
      %339 = vst [vmem:[#allocation4 + $0x8] sm:$0xff] 0.0
      %340 = vst [vmem:[#allocation4 + $0x10] sm:$0xff] 0.0
      %341 = vst [vmem:[#allocation4 + $0x18] sm:$0x3] 0.0
      %v342 = vld [vmem:[%s326] sm:$0xf]
      %v343 = vld [vmem:[%s326 + $0x4] sm:$0xf]
      %v344 = vld [vmem:[%s326 + $0x8] sm:$0xf]
      %v345 = vld [vmem:[%s326 + $0xc] sm:$0xf]
      %v346 = vld [vmem:[%s326 + $0x10] sm:$0xf]
      %v347 = vld [vmem:[%s326 + $0x14] sm:$0xf]
      %v348 = vld [vmem:[%s326 + $0x18] sm:$0xf]
      %v349 = vld [vmem:[%s326 + $0x1c] sm:$0xf]
      %v350 = vld [vmem:[%s326 + $0x20] sm:$0xf]
      %v351 = vld [vmem:[%s326 + $0x24] sm:$0xf]
      %v352 = vld [vmem:[%s326 + $0x28] sm:$0xf]
      %v353 = vld [vmem:[%s326 + $0x2c] sm:$0xf]
      %v354 = vld [vmem:[%s326 + $0x30] sm:$0xf]
      %v355 = vld [vmem:[%s326 + $0x34] sm:$0xf]
      %v356 = vld [vmem:[%s326 + $0x38] sm:$0xf]
      %v357 = vld [vmem:[%s326 + $0x3c] sm:$0xf]
      %v358 = vld [vmem:[%s1] sm:$0xf]
      %v359 = vld [vmem:[%s1 + $0x4] sm:$0xf]
      %v360 = vld [vmem:[%s1 + $0x8] sm:$0xf]
      %v361 = vld [vmem:[%s1 + $0xc] sm:$0xf]
      %v362 = vld [vmem:[%s1 + $0x10] sm:$0xf]
      %v363 = vld [vmem:[%s1 + $0x14] sm:$0xf]
      %v364 = vld [vmem:[%s1 + $0x18] sm:$0xf]
      %v365 = vld [vmem:[%s1 + $0x1c] sm:$0xf]
      %v366 = vld [vmem:[%s1 + $0x20] sm:$0xf]
      %v367 = vld [vmem:[%s1 + $0x24] sm:$0xf]
      %v368 = vld [vmem:[%s1 + $0x28] sm:$0xf]
      %v369 = vld [vmem:[%s1 + $0x2c] sm:$0xf]
      %v370 = vld [vmem:[%s1 + $0x30] sm:$0xf]
      %v371 = vld [vmem:[%s1 + $0x34] sm:$0xf]
      %v372 = vld [vmem:[%s1 + $0x38] sm:$0xf]
      %v373 = vld [vmem:[%s1 + $0x3c] sm:$0xf]
      %v374 = vld [vmem:[%s2] sm:$0x1]
      %v376 = vperm.slane %v374, 0
      %v394 = vunpack.c.l.b16 %v342
      %v395 = vunpack.c.l.b16 %v343
      %v396 = vunpack.c.l.b16 %v344
      %v397 = vunpack.c.l.b16 %v345
      %v398 = vunpack.c.l.b16 %v346
      %v399 = vunpack.c.l.b16 %v347
      %v400 = vunpack.c.l.b16 %v348
      %v401 = vunpack.c.l.b16 %v349
      %v402 = vunpack.c.l.b16 %v350
      %v403 = vunpack.c.l.b16 %v351
      %v404 = vunpack.c.l.b16 %v352
      %v405 = vunpack.c.l.b16 %v353
      %v406 = vunpack.c.l.b16 %v354
      %v407 = vunpack.c.l.b16 %v355
      %v408 = vunpack.c.l.b16 %v356
      %v409 = vunpack.c.l.b16 %v357
      %v410 = vpack.c.b16 %v395, %v394
      %v411 = vpack.c.b16 %v397, %v396
      %v412 = vpack.c.b16 %v399, %v398
      %v413 = vpack.c.b16 %v401, %v400
      %v414 = vpack.c.b16 %v403, %v402
      %v415 = vpack.c.b16 %v405, %v404
      %v416 = vpack.c.b16 %v407, %v406
      %v417 = vpack.c.b16 %v409, %v408
      %v442 = vunpack.c.l.b16 %v358
      %v443 = vunpack.c.l.b16 %v359
      %v444 = vunpack.c.l.b16 %v360
      %v445 = vunpack.c.l.b16 %v361
      %v446 = vunpack.c.l.b16 %v362
      %v447 = vunpack.c.l.b16 %v363
      %v448 = vunpack.c.l.b16 %v364
      %v449 = vunpack.c.l.b16 %v365
      %v450 = vunpack.c.l.b16 %v366
      %v451 = vunpack.c.l.b16 %v367
      %v452 = vunpack.c.l.b16 %v368
      %v453 = vunpack.c.l.b16 %v369
      %v454 = vunpack.c.l.b16 %v370
      %v455 = vunpack.c.l.b16 %v371
      %v456 = vunpack.c.l.b16 %v372
      %v457 = vunpack.c.l.b16 %v373
      %v458 = vpack.c.b16 %v443, %v442
      %v459 = vpack.c.b16 %v445, %v444
      %v460 = vpack.c.b16 %v447, %v446
      %v461 = vpack.c.b16 %v449, %v448
      %v462 = vpack.c.b16 %v451, %v450
      %v463 = vpack.c.b16 %v453, %v452
      %v464 = vpack.c.b16 %v455, %v454
      %v465 = vpack.c.b16 %v457, %v456
      %474 = vmatpush.bf16.msra.mxu0 %v465
      %475 = vmatpush.bf16.msra.mxu0 %v464
      %476 = vmatpush.bf16.msra.mxu0 %v463
      %477 = vmatpush.bf16.msra.mxu0 %v462
      %478 = vmatpush.bf16.msra.mxu0 %v461
      %479 = vmatpush.bf16.msra.mxu0 %v460
      %480 = vmatpush.bf16.msra.mxu0 %v459
      %481 = vmatpush.bf16.msra.mxu0 %v458
      %482 = vmatmul.bf16.gmra.mxu0 %v410
      %v483 = vpop.f32.mrf.mxu0
      %v484 = vadd.f32 %v376, %v483
      %v485 = vpop.f32.mrf.mxu0
      %v486 = vadd.f32 %v376, %v485
      %487 = vmatmul.bf16.gmra.mxu0 %v411
      %v488 = vpop.f32.mrf.mxu0
      %v489 = vadd.f32 %v376, %v488
      %v490 = vpop.f32.mrf.mxu0
      %v491 = vadd.f32 %v376, %v490
      %492 = vmatmul.bf16.gmra.mxu0 %v412
      %v493 = vpop.f32.mrf.mxu0
      %v494 = vadd.f32 %v376, %v493
      %v495 = vpop.f32.mrf.mxu0
      %v496 = vadd.f32 %v376, %v495
      %497 = vmatmul.bf16.gmra.mxu0 %v413
      %v498 = vpop.f32.mrf.mxu0
      %v499 = vadd.f32 %v376, %v498
      %v500 = vpop.f32.mrf.mxu0
      %v501 = vadd.f32 %v376, %v500
      %502 = vmatmul.bf16.gmra.mxu0 %v414
      %v503 = vpop.f32.mrf.mxu0
      %v504 = vadd.f32 %v376, %v503
      %v505 = vpop.f32.mrf.mxu0
      %v506 = vadd.f32 %v376, %v505
      %507 = vmatmul.bf16.gmra.mxu0 %v415
      %v508 = vpop.f32.mrf.mxu0
      %v509 = vadd.f32 %v376, %v508
      %v510 = vpop.f32.mrf.mxu0
      %v511 = vadd.f32 %v376, %v510
      %512 = vmatmul.bf16.gmra.mxu0 %v416
      %v513 = vpop.f32.mrf.mxu0
      %v514 = vadd.f32 %v376, %v513
      %v515 = vpop.f32.mrf.mxu0
      %v516 = vadd.f32 %v376, %v515
      %517 = vmatmul.bf16.gmra.mxu0 %v417
      %v518 = vpop.f32.mrf.mxu0
      %v519 = vadd.f32 %v376, %v518
      %v520 = vpop.f32.mrf.mxu0
      %v521 = vadd.f32 %v376, %v520
      %522 = vdwg.mxu0
      %v523 = vmul.f32 %v484, 0.01
      %v524 = vmul.f32 %v486, 0.01
      %v525 = vmul.f32 %v489, 0.01
      %v526 = vmul.f32 %v491, 0.01
      %v527 = vmul.f32 %v494, 0.01
      %v528 = vmul.f32 %v496, 0.01
      %v529 = vmul.f32 %v499, 0.01
      %v530 = vmul.f32 %v501, 0.01
      %v531 = vmul.f32 %v504, 0.01
      %v532 = vmul.f32 %v506, 0.01
      %v533 = vmul.f32 %v509, 0.01
      %v534 = vmul.f32 %v511, 0.01
      %v535 = vmul.f32 %v514, 0.01
      %v536 = vmul.f32 %v516, 0.01
      %v537 = vmul.f32 %v519, 0.01
      %v538 = vmul.f32 %v521, 0.01
      %v539 = vmax.f32 %v484, %v523
      %v540 = vmax.f32 %v486, %v524
      %v541 = vmax.f32 %v489, %v525
      %v542 = vmax.f32 %v491, %v526
      %v543 = vmax.f32 %v494, %v527
      %v544 = vmax.f32 %v496, %v528
      %v545 = vmax.f32 %v499, %v529
      %v546 = vmax.f32 %v501, %v530
      %v547 = vmax.f32 %v504, %v531
      %v548 = vmax.f32 %v506, %v532
      %v549 = vmax.f32 %v509, %v533
      %v550 = vmax.f32 %v511, %v534
      %v551 = vmax.f32 %v514, %v535
      %v552 = vmax.f32 %v516, %v536
      %v553 = vmax.f32 %v519, %v537
      %v554 = vmax.f32 %v521, %v538
      %vm555 = vcmask 1043456
      %v556 = vsel %vm555, %v539, -inf
      %v557 = vrot.slane %v556, 4
      %v558 = vmax.f32 %v556, %v557
      %v559 = vrot.slane %v558, 2
      %v560 = vmax.f32 %v558, %v559
      %v561 = vrot.slane %v560, 1
      %v562 = vmax.f32 %v560, %v561
      %563 = vst [vmem:[#allocation2 + $0x4] sm:$0x1] %v562
      %vm564 = vcmask 1047556
      %v565 = vsel %vm564, %v539, -inf
      %v566 = vsel %vm555, %v540, -inf
      %v567 = vmax.f32 %v565, %v566
      %v568 = vrot.slane %v567, 4
      %v569 = vmax.f32 %v567, %v568
      %v570 = vrot.slane %v569, 2
      %v571 = vmax.f32 %v569, %v570
      %v572 = vrot.slane %v571, 1
      %v573 = vmax.f32 %v571, %v572
      %574 = vst [vmem:[#allocation2 + $0x5] sm:$0x1] %v573
      %v575 = vsel %vm564, %v540, -inf
      %v576 = vsel %vm555, %v541, -inf
      %v577 = vmax.f32 %v575, %v576
      %v578 = vrot.slane %v577, 4
      %v579 = vmax.f32 %v577, %v578
      %v580 = vrot.slane %v579, 2
      %v581 = vmax.f32 %v579, %v580
      %v582 = vrot.slane %v581, 1
      %v583 = vmax.f32 %v581, %v582
      %584 = vst [vmem:[#allocation2 + $0x6] sm:$0x1] %v583
      %v585 = vsel %vm564, %v541, -inf
      %v586 = vsel %vm555, %v542, -inf
      %v587 = vmax.f32 %v585, %v586
      %v588 = vrot.slane %v587, 4
      %v589 = vmax.f32 %v587, %v588
      %v590 = vrot.slane %v589, 2
      %v591 = vmax.f32 %v589, %v590
      %v592 = vrot.slane %v591, 1
      %v593 = vmax.f32 %v591, %v592
      %594 = vst [vmem:[#allocation2 + $0x7] sm:$0x1] %v593
      %v595 = vsel %vm564, %v542, -inf
      %v596 = vsel %vm555, %v543, -inf
      %v597 = vmax.f32 %v595, %v596
      %v598 = vrot.slane %v597, 4
      %v599 = vmax.f32 %v597, %v598
      %v600 = vrot.slane %v599, 2
      %v601 = vmax.f32 %v599, %v600
      %v602 = vrot.slane %v601, 1
      %v603 = vmax.f32 %v601, %v602
      %604 = vst [vmem:[#allocation2 + $0x8] sm:$0x1] %v603
      %v605 = vsel %vm564, %v543, -inf
      %v606 = vsel %vm555, %v544, -inf
      %v607 = vmax.f32 %v605, %v606
      %v608 = vrot.slane %v607, 4
      %v609 = vmax.f32 %v607, %v608
      %v610 = vrot.slane %v609, 2
      %v611 = vmax.f32 %v609, %v610
      %v612 = vrot.slane %v611, 1
      %v613 = vmax.f32 %v611, %v612
      %614 = vst [vmem:[#allocation2 + $0x9] sm:$0x1] %v613
      %v615 = vsel %vm564, %v544, -inf
      %v616 = vsel %vm555, %v545, -inf
      %v617 = vmax.f32 %v615, %v616
      %v618 = vrot.slane %v617, 4
      %v619 = vmax.f32 %v617, %v618
      %v620 = vrot.slane %v619, 2
      %v621 = vmax.f32 %v619, %v620
      %v622 = vrot.slane %v621, 1
      %v623 = vmax.f32 %v621, %v622
      %624 = vst [vmem:[#allocation2 + $0xa] sm:$0x1] %v623
      %v625 = vsel %vm564, %v545, -inf
      %v626 = vsel %vm555, %v546, -inf
      %v627 = vmax.f32 %v625, %v626
      %v628 = vrot.slane %v627, 4
      %v629 = vmax.f32 %v627, %v628
      %v630 = vrot.slane %v629, 2
      %v631 = vmax.f32 %v629, %v630
      %v632 = vrot.slane %v631, 1
      %v633 = vmax.f32 %v631, %v632
      %634 = vst [vmem:[#allocation2 + $0xb] sm:$0x1] %v633
      %v635 = vsel %vm564, %v546, -inf
      %v636 = vsel %vm555, %v547, -inf
      %v637 = vmax.f32 %v635, %v636
      %v638 = vrot.slane %v637, 4
      %v639 = vmax.f32 %v637, %v638
      %v640 = vrot.slane %v639, 2
      %v641 = vmax.f32 %v639, %v640
      %v642 = vrot.slane %v641, 1
      %v643 = vmax.f32 %v641, %v642
      %644 = vst [vmem:[#allocation2 + $0xc] sm:$0x1] %v643
      %v645 = vsel %vm564, %v547, -inf
      %v646 = vsel %vm555, %v548, -inf
      %v647 = vmax.f32 %v645, %v646
      %v648 = vrot.slane %v647, 4
      %v649 = vmax.f32 %v647, %v648
      %v650 = vrot.slane %v649, 2
      %v651 = vmax.f32 %v649, %v650
      %v652 = vrot.slane %v651, 1
      %v653 = vmax.f32 %v651, %v652
      %654 = vst [vmem:[#allocation2 + $0xd] sm:$0x1] %v653
      %v655 = vsel %vm564, %v548, -inf
      %v656 = vsel %vm555, %v549, -inf
      %v657 = vmax.f32 %v655, %v656
      %v658 = vrot.slane %v657, 4
      %v659 = vmax.f32 %v657, %v658
      %v660 = vrot.slane %v659, 2
      %v661 = vmax.f32 %v659, %v660
      %v662 = vrot.slane %v661, 1
      %v663 = vmax.f32 %v661, %v662
      %664 = vst [vmem:[#allocation2 + $0xe] sm:$0x1] %v663
      %v665 = vsel %vm564, %v549, -inf
      %v666 = vsel %vm555, %v550, -inf
      %v667 = vmax.f32 %v665, %v666
      %v668 = vrot.slane %v667, 4
      %v669 = vmax.f32 %v667, %v668
      %v670 = vrot.slane %v669, 2
      %v671 = vmax.f32 %v669, %v670
      %v672 = vrot.slane %v671, 1
      %v673 = vmax.f32 %v671, %v672
      %674 = vst [vmem:[#allocation2 + $0xf] sm:$0x1] %v673
      %v675 = vsel %vm564, %v550, -inf
      %v676 = vsel %vm555, %v551, -inf
      %v677 = vmax.f32 %v675, %v676
      %v678 = vrot.slane %v677, 4
      %v679 = vmax.f32 %v677, %v678
      %v680 = vrot.slane %v679, 2
      %v681 = vmax.f32 %v679, %v680
      %v682 = vrot.slane %v681, 1
      %v683 = vmax.f32 %v681, %v682
      %684 = vst [vmem:[#allocation2 + $0x10] sm:$0x1] %v683
      %v685 = vsel %vm564, %v551, -inf
      %v686 = vsel %vm555, %v552, -inf
      %v687 = vmax.f32 %v685, %v686
      %v688 = vrot.slane %v687, 4
      %v689 = vmax.f32 %v687, %v688
      %v690 = vrot.slane %v689, 2
      %v691 = vmax.f32 %v689, %v690
      %v692 = vrot.slane %v691, 1
      %v693 = vmax.f32 %v691, %v692
      %694 = vst [vmem:[#allocation2 + $0x11] sm:$0x1] %v693
      %v695 = vsel %vm564, %v552, -inf
      %v696 = vsel %vm555, %v553, -inf
      %v697 = vmax.f32 %v695, %v696
      %v698 = vrot.slane %v697, 4
      %v699 = vmax.f32 %v697, %v698
      %v700 = vrot.slane %v699, 2
      %v701 = vmax.f32 %v699, %v700
      %v702 = vrot.slane %v701, 1
      %v703 = vmax.f32 %v701, %v702
      %704 = vst [vmem:[#allocation2 + $0x12] sm:$0x1] %v703
      %v705 = vsel %vm564, %v553, -inf
      %v706 = vsel %vm555, %v554, -inf
      %v707 = vmax.f32 %v705, %v706
      %v708 = vrot.slane %v707, 4
      %v709 = vmax.f32 %v707, %v708
      %v710 = vrot.slane %v709, 2
      %v711 = vmax.f32 %v709, %v710
      %v712 = vrot.slane %v711, 1
      %v713 = vmax.f32 %v711, %v712
      %714 = vst [vmem:[#allocation2 + $0x13] sm:$0x1] %v713
      %v715 = vld [vmem:[#allocation2] sm:$0xff]
      %v716 = vld [vmem:[#allocation2 + $0x8] sm:$0xff]
      %v717 = vld [vmem:[#allocation2 + $0x10] sm:$0x1]
      %v718 = vld [vmem:[%s3] sm:$0xff]
      %v719 = vld [vmem:[%s3 + $0x8] sm:$0xff]
      %v720 = vld [vmem:[%s3 + $0x10] sm:$0xff]
      %v721 = vld [vmem:[%s3 + $0x18] sm:$0xff]
      %v722 = vld [vmem:[%s3 + $0x20] sm:$0xff]
      %v723 = vld [vmem:[%s3 + $0x28] sm:$0xff]
      %v724 = vld [vmem:[%s3 + $0x30] sm:$0xff]
      %v725 = vld [vmem:[%s3 + $0x38] sm:$0xff]
      %v726 = vld [vmem:[%s3 + $0x40] sm:$0xff]
      %v727 = vld [vmem:[%s3 + $0x48] sm:$0xff]
      %v728 = vld [vmem:[%s3 + $0x50] sm:$0xff]
      %v729 = vld [vmem:[%s3 + $0x58] sm:$0xff]
      %v730 = vld [vmem:[%s3 + $0x60] sm:$0xff]
      %v731 = vld [vmem:[%s3 + $0x68] sm:$0xff]
      %v732 = vld [vmem:[%s3 + $0x70] sm:$0xff]
      %v733 = vld [vmem:[%s3 + $0x78] sm:$0xff]
      %v734 = vld [vmem:[#allocation2 + $0x1] sm:$0xff]
      %v735 = vld [vmem:[#allocation2 + $0x9] sm:$0xff]
      %v736 = vld [vmem:[#allocation2 + $0x11] sm:$0x1]
      %s737 = scalar_lea.vmem %s3, 128
      %v738 = vld [vmem:[%s737] sm:$0xff]
      %v739 = vld [vmem:[%s737 + $0x8] sm:$0xff]
      %v740 = vld [vmem:[%s737 + $0x10] sm:$0xff]
      %v741 = vld [vmem:[%s737 + $0x18] sm:$0xff]
      %v742 = vld [vmem:[%s737 + $0x20] sm:$0xff]
      %v743 = vld [vmem:[%s737 + $0x28] sm:$0xff]
      %v744 = vld [vmem:[%s737 + $0x30] sm:$0xff]
      %v745 = vld [vmem:[%s737 + $0x38] sm:$0xff]
      %v746 = vld [vmem:[%s737 + $0x40] sm:$0xff]
      %v747 = vld [vmem:[%s737 + $0x48] sm:$0xff]
      %v748 = vld [vmem:[%s737 + $0x50] sm:$0xff]
      %v749 = vld [vmem:[%s737 + $0x58] sm:$0xff]
      %v750 = vld [vmem:[%s737 + $0x60] sm:$0xff]
      %v751 = vld [vmem:[%s737 + $0x68] sm:$0xff]
      %v752 = vld [vmem:[%s737 + $0x70] sm:$0xff]
      %v753 = vld [vmem:[%s737 + $0x78] sm:$0xff]
      %754 = vmatpush.msra.mxu0 %v753
      %755 = vmatpush.msra.mxu0 %v752
      %756 = vmatpush.msra.mxu0 %v751
      %757 = vmatpush.msra.mxu0 %v750
      %758 = vmatpush.msra.mxu0 %v749
      %759 = vmatpush.msra.mxu0 %v748
      %760 = vmatpush.msra.mxu0 %v747
      %761 = vmatpush.msra.mxu0 %v746
      %762 = vmatpush.msra.mxu0 %v745
      %763 = vmatpush.msra.mxu0 %v744
      %764 = vmatpush.msra.mxu0 %v743
      %765 = vmatpush.msra.mxu0 %v742
      %766 = vmatpush.msra.mxu0 %v741
      %767 = vmatpush.msra.mxu0 %v740
      %768 = vmatpush.msra.mxu0 %v739
      %769 = vmatpush.msra.mxu0 %v738
      %770 = vmatmul.f32.gmra.mxu0 %v734
      %v771 = vpop.f32.mrf.mxu0
      %v772 = vadd.f32 0.0, %v771
      %773 = vmatmul.f32.gmra.mxu0 %v735
      %v774 = vpop.f32.mrf.mxu0
      %v775 = vadd.f32 0.0, %v774
      %776 = vmatmul.f32.gmra.mxu0 %v736
      %v777 = vpop.f32.mrf.mxu0
      %v778 = vadd.f32 0.0, %v777
      %779 = vdwg.mxu0
      %780 = vmatpush.msra.mxu0 %v733
      %781 = vmatpush.msra.mxu0 %v732
      %782 = vmatpush.msra.mxu0 %v731
      %783 = vmatpush.msra.mxu0 %v730
      %784 = vmatpush.msra.mxu0 %v729
      %785 = vmatpush.msra.mxu0 %v728
      %786 = vmatpush.msra.mxu0 %v727
      %787 = vmatpush.msra.mxu0 %v726
      %788 = vmatpush.msra.mxu0 %v725
      %789 = vmatpush.msra.mxu0 %v724
      %790 = vmatpush.msra.mxu0 %v723
      %791 = vmatpush.msra.mxu0 %v722
      %792 = vmatpush.msra.mxu0 %v721
      %793 = vmatpush.msra.mxu0 %v720
      %794 = vmatpush.msra.mxu0 %v719
      %795 = vmatpush.msra.mxu0 %v718
      %796 = vmatmul.f32.gmra.mxu0 %v715
      %v797 = vpop.f32.mrf.mxu0
      %v798 = vadd.f32 %v772, %v797
      %799 = vmatmul.f32.gmra.mxu0 %v716
      %v800 = vpop.f32.mrf.mxu0
      %v801 = vadd.f32 %v775, %v800
      %802 = vmatmul.f32.gmra.mxu0 %v717
      %v803 = vpop.f32.mrf.mxu0
      %v804 = vadd.f32 %v778, %v803
      %805 = vdwg.mxu0
      %v806 = vld [vmem:[#allocation2 + $0x2] sm:$0xff]
      %v807 = vld [vmem:[#allocation2 + $0xa] sm:$0xff]
      %v808 = vld [vmem:[#allocation2 + $0x12] sm:$0x1]
      %s809 = scalar_lea.vmem %s3, 256
      %v810 = vld [vmem:[%s809] sm:$0xff]
      %v811 = vld [vmem:[%s809 + $0x8] sm:$0xff]
      %v812 = vld [vmem:[%s809 + $0x10] sm:$0xff]
      %v813 = vld [vmem:[%s809 + $0x18] sm:$0xff]
      %v814 = vld [vmem:[%s809 + $0x20] sm:$0xff]
      %v815 = vld [vmem:[%s809 + $0x28] sm:$0xff]
      %v816 = vld [vmem:[%s809 + $0x30] sm:$0xff]
      %v817 = vld [vmem:[%s809 + $0x38] sm:$0xff]
      %v818 = vld [vmem:[%s809 + $0x40] sm:$0xff]
      %v819 = vld [vmem:[%s809 + $0x48] sm:$0xff]
      %v820 = vld [vmem:[%s809 + $0x50] sm:$0xff]
      %v821 = vld [vmem:[%s809 + $0x58] sm:$0xff]
      %v822 = vld [vmem:[%s809 + $0x60] sm:$0xff]
      %v823 = vld [vmem:[%s809 + $0x68] sm:$0xff]
      %v824 = vld [vmem:[%s809 + $0x70] sm:$0xff]
      %v825 = vld [vmem:[%s809 + $0x78] sm:$0xff]
      %826 = vmatpush.msra.mxu0 %v825
      %827 = vmatpush.msra.mxu0 %v824
      %828 = vmatpush.msra.mxu0 %v823
      %829 = vmatpush.msra.mxu0 %v822
      %830 = vmatpush.msra.mxu0 %v821
      %831 = vmatpush.msra.mxu0 %v820
      %832 = vmatpush.msra.mxu0 %v819
      %833 = vmatpush.msra.mxu0 %v818
      %834 = vmatpush.msra.mxu0 %v817
      %835 = vmatpush.msra.mxu0 %v816
      %836 = vmatpush.msra.mxu0 %v815
      %837 = vmatpush.msra.mxu0 %v814
      %838 = vmatpush.msra.mxu0 %v813
      %839 = vmatpush.msra.mxu0 %v812
      %840 = vmatpush.msra.mxu0 %v811
      %841 = vmatpush.msra.mxu0 %v810
      %842 = vmatmul.f32.gmra.mxu0 %v806
      %v843 = vpop.f32.mrf.mxu0
      %v844 = vadd.f32 0.0, %v843
      %845 = vmatmul.f32.gmra.mxu0 %v807
      %v846 = vpop.f32.mrf.mxu0
      %v847 = vadd.f32 0.0, %v846
      %848 = vmatmul.f32.gmra.mxu0 %v808
      %v849 = vpop.f32.mrf.mxu0
      %v850 = vadd.f32 0.0, %v849
      %851 = vdwg.mxu0
      %v852 = vadd.f32 %v798, %v844
      %v853 = vadd.f32 %v801, %v847
      %v854 = vadd.f32 %v804, %v850
      %v855 = vld [vmem:[#allocation2 + $0x3] sm:$0xff]
      %v856 = vld [vmem:[#allocation2 + $0xb] sm:$0xff]
      %v857 = vld [vmem:[#allocation2 + $0x13] sm:$0x1]
      %s858 = scalar_lea.vmem %s3, 384
      %v859 = vld [vmem:[%s858] sm:$0xff]
      %v860 = vld [vmem:[%s858 + $0x8] sm:$0xff]
      %v861 = vld [vmem:[%s858 + $0x10] sm:$0xff]
      %v862 = vld [vmem:[%s858 + $0x18] sm:$0xff]
      %v863 = vld [vmem:[%s858 + $0x20] sm:$0xff]
      %v864 = vld [vmem:[%s858 + $0x28] sm:$0xff]
      %v865 = vld [vmem:[%s858 + $0x30] sm:$0xff]
      %v866 = vld [vmem:[%s858 + $0x38] sm:$0xff]
      %v867 = vld [vmem:[%s858 + $0x40] sm:$0xff]
      %v868 = vld [vmem:[%s858 + $0x48] sm:$0xff]
      %v869 = vld [vmem:[%s858 + $0x50] sm:$0xff]
      %v870 = vld [vmem:[%s858 + $0x58] sm:$0xff]
      %v871 = vld [vmem:[%s858 + $0x60] sm:$0xff]
      %v872 = vld [vmem:[%s858 + $0x68] sm:$0xff]
      %v873 = vld [vmem:[%s858 + $0x70] sm:$0xff]
      %v874 = vld [vmem:[%s858 + $0x78] sm:$0xff]
      %875 = vmatpush.msra.mxu0 %v874
      %876 = vmatpush.msra.mxu0 %v873
      %877 = vmatpush.msra.mxu0 %v872
      %878 = vmatpush.msra.mxu0 %v871
      %879 = vmatpush.msra.mxu0 %v870
      %880 = vmatpush.msra.mxu0 %v869
      %881 = vmatpush.msra.mxu0 %v868
      %882 = vmatpush.msra.mxu0 %v867
      %883 = vmatpush.msra.mxu0 %v866
      %884 = vmatpush.msra.mxu0 %v865
      %885 = vmatpush.msra.mxu0 %v864
      %886 = vmatpush.msra.mxu0 %v863
      %887 = vmatpush.msra.mxu0 %v862
      %888 = vmatpush.msra.mxu0 %v861
      %889 = vmatpush.msra.mxu0 %v860
      %890 = vmatpush.msra.mxu0 %v859
      %891 = vmatmul.f32.gmra.mxu0 %v855
      %v892 = vpop.f32.mrf.mxu0
      %v893 = vadd.f32 0.0, %v892
      %894 = vmatmul.f32.gmra.mxu0 %v856
      %v895 = vpop.f32.mrf.mxu0
      %v896 = vadd.f32 0.0, %v895
      %897 = vmatmul.f32.gmra.mxu0 %v857
      %v898 = vpop.f32.mrf.mxu0
      %v899 = vadd.f32 0.0, %v898
      %900 = vdwg.mxu0
      %v901 = vadd.f32 %v852, %v893
      %v902 = vadd.f32 %v853, %v896
      %v903 = vadd.f32 %v854, %v899
      %v904 = vld [vmem:[#allocation2 + $0x4] sm:$0xff]
      %v905 = vld [vmem:[#allocation2 + $0xc] sm:$0xff]
      %v906 = vld [vmem:[#allocation2 + $0x14] sm:$0x1]
      %s907 = scalar_lea.vmem %s3, 512
      %v908 = vld [vmem:[%s907] sm:$0xff]
      %v909 = vld [vmem:[%s907 + $0x8] sm:$0xff]
      %v910 = vld [vmem:[%s907 + $0x10] sm:$0xff]
      %v911 = vld [vmem:[%s907 + $0x18] sm:$0xff]
      %v912 = vld [vmem:[%s907 + $0x20] sm:$0xff]
      %v913 = vld [vmem:[%s907 + $0x28] sm:$0xff]
      %v914 = vld [vmem:[%s907 + $0x30] sm:$0xff]
      %v915 = vld [vmem:[%s907 + $0x38] sm:$0xff]
      %v916 = vld [vmem:[%s907 + $0x40] sm:$0xff]
      %v917 = vld [vmem:[%s907 + $0x48] sm:$0xff]
      %v918 = vld [vmem:[%s907 + $0x50] sm:$0xff]
      %v919 = vld [vmem:[%s907 + $0x58] sm:$0xff]
      %v920 = vld [vmem:[%s907 + $0x60] sm:$0xff]
      %v921 = vld [vmem:[%s907 + $0x68] sm:$0xff]
      %v922 = vld [vmem:[%s907 + $0x70] sm:$0xff]
      %v923 = vld [vmem:[%s907 + $0x78] sm:$0xff]
      %924 = vmatpush.msra.mxu0 %v923
      %925 = vmatpush.msra.mxu0 %v922
      %926 = vmatpush.msra.mxu0 %v921
      %927 = vmatpush.msra.mxu0 %v920
      %928 = vmatpush.msra.mxu0 %v919
      %929 = vmatpush.msra.mxu0 %v918
      %930 = vmatpush.msra.mxu0 %v917
      %931 = vmatpush.msra.mxu0 %v916
      %932 = vmatpush.msra.mxu0 %v915
      %933 = vmatpush.msra.mxu0 %v914
      %934 = vmatpush.msra.mxu0 %v913
      %935 = vmatpush.msra.mxu0 %v912
      %936 = vmatpush.msra.mxu0 %v911
      %937 = vmatpush.msra.mxu0 %v910
      %938 = vmatpush.msra.mxu0 %v909
      %939 = vmatpush.msra.mxu0 %v908
      %940 = vmatmul.f32.gmra.mxu0 %v904
      %v941 = vpop.f32.mrf.mxu0
      %v942 = vadd.f32 0.0, %v941
      %943 = vmatmul.f32.gmra.mxu0 %v905
      %v944 = vpop.f32.mrf.mxu0
      %v945 = vadd.f32 0.0, %v944
      %946 = vmatmul.f32.gmra.mxu0 %v906
      %v947 = vpop.f32.mrf.mxu0
      %v948 = vadd.f32 0.0, %v947
      %949 = vdwg.mxu0
      %v950 = vadd.f32 %v901, %v942
      %v951 = vadd.f32 %v902, %v945
      %v952 = vadd.f32 %v903, %v948
      %v953 = vld [vmem:[#allocation2 + $0x5] sm:$0xff]
      %v954 = vld [vmem:[#allocation2 + $0xd] sm:$0xff]
      %v955 = vld [vmem:[#allocation2 + $0x15] sm:$0x1]
      %s956 = scalar_lea.vmem %s3, 640
      %v957 = vld [vmem:[%s956] sm:$0xff]
      %v958 = vld [vmem:[%s956 + $0x8] sm:$0xff]
      %v959 = vld [vmem:[%s956 + $0x10] sm:$0xff]
      %v960 = vld [vmem:[%s956 + $0x18] sm:$0xff]
      %v961 = vld [vmem:[%s956 + $0x20] sm:$0xff]
      %v962 = vld [vmem:[%s956 + $0x28] sm:$0xff]
      %v963 = vld [vmem:[%s956 + $0x30] sm:$0xff]
      %v964 = vld [vmem:[%s956 + $0x38] sm:$0xff]
      %v965 = vld [vmem:[%s956 + $0x40] sm:$0xff]
      %v966 = vld [vmem:[%s956 + $0x48] sm:$0xff]
      %v967 = vld [vmem:[%s956 + $0x50] sm:$0xff]
      %v968 = vld [vmem:[%s956 + $0x58] sm:$0xff]
      %v969 = vld [vmem:[%s956 + $0x60] sm:$0xff]
      %v970 = vld [vmem:[%s956 + $0x68] sm:$0xff]
      %v971 = vld [vmem:[%s956 + $0x70] sm:$0xff]
      %v972 = vld [vmem:[%s956 + $0x78] sm:$0xff]
      %973 = vmatpush.msra.mxu0 %v972
      %974 = vmatpush.msra.mxu0 %v971
      %975 = vmatpush.msra.mxu0 %v970
      %976 = vmatpush.msra.mxu0 %v969
      %977 = vmatpush.msra.mxu0 %v968
      %978 = vmatpush.msra.mxu0 %v967
      %979 = vmatpush.msra.mxu0 %v966
      %980 = vmatpush.msra.mxu0 %v965
      %981 = vmatpush.msra.mxu0 %v964
      %982 = vmatpush.msra.mxu0 %v963
      %983 = vmatpush.msra.mxu0 %v962
      %984 = vmatpush.msra.mxu0 %v961
      %985 = vmatpush.msra.mxu0 %v960
      %986 = vmatpush.msra.mxu0 %v959
      %987 = vmatpush.msra.mxu0 %v958
      %988 = vmatpush.msra.mxu0 %v957
      %989 = vmatmul.f32.gmra.mxu0 %v953
      %v990 = vpop.f32.mrf.mxu0
      %v991 = vadd.f32 0.0, %v990
      %992 = vmatmul.f32.gmra.mxu0 %v954
      %v993 = vpop.f32.mrf.mxu0
      %v994 = vadd.f32 0.0, %v993
      %995 = vmatmul.f32.gmra.mxu0 %v955
      %v996 = vpop.f32.mrf.mxu0
      %v997 = vadd.f32 0.0, %v996
      %998 = vdwg.mxu0
      %v999 = vadd.f32 %v950, %v991
      %v1000 = vadd.f32 %v951, %v994
      %v1001 = vadd.f32 %v952, %v997
      %v1002 = vld [vmem:[#allocation2 + $0x6] sm:$0xff]
      %v1003 = vld [vmem:[#allocation2 + $0xe] sm:$0xff]
      %v1004 = vld [vmem:[#allocation2 + $0x16] sm:$0x1]
      %s1005 = scalar_lea.vmem %s3, 768
      %v1006 = vld [vmem:[%s1005] sm:$0xff]
      %v1007 = vld [vmem:[%s1005 + $0x8] sm:$0xff]
      %v1008 = vld [vmem:[%s1005 + $0x10] sm:$0xff]
      %v1009 = vld [vmem:[%s1005 + $0x18] sm:$0xff]
      %v1010 = vld [vmem:[%s1005 + $0x20] sm:$0xff]
      %v1011 = vld [vmem:[%s1005 + $0x28] sm:$0xff]
      %v1012 = vld [vmem:[%s1005 + $0x30] sm:$0xff]
      %v1013 = vld [vmem:[%s1005 + $0x38] sm:$0xff]
      %v1014 = vld [vmem:[%s1005 + $0x40] sm:$0xff]
      %v1015 = vld [vmem:[%s1005 + $0x48] sm:$0xff]
      %v1016 = vld [vmem:[%s1005 + $0x50] sm:$0xff]
      %v1017 = vld [vmem:[%s1005 + $0x58] sm:$0xff]
      %v1018 = vld [vmem:[%s1005 + $0x60] sm:$0xff]
      %v1019 = vld [vmem:[%s1005 + $0x68] sm:$0xff]
      %v1020 = vld [vmem:[%s1005 + $0x70] sm:$0xff]
      %v1021 = vld [vmem:[%s1005 + $0x78] sm:$0xff]
      %1022 = vmatpush.msra.mxu0 %v1021
      %1023 = vmatpush.msra.mxu0 %v1020
      %1024 = vmatpush.msra.mxu0 %v1019
      %1025 = vmatpush.msra.mxu0 %v1018
      %1026 = vmatpush.msra.mxu0 %v1017
      %1027 = vmatpush.msra.mxu0 %v1016
      %1028 = vmatpush.msra.mxu0 %v1015
      %1029 = vmatpush.msra.mxu0 %v1014
      %1030 = vmatpush.msra.mxu0 %v1013
      %1031 = vmatpush.msra.mxu0 %v1012
      %1032 = vmatpush.msra.mxu0 %v1011
      %1033 = vmatpush.msra.mxu0 %v1010
      %1034 = vmatpush.msra.mxu0 %v1009
      %1035 = vmatpush.msra.mxu0 %v1008
      %1036 = vmatpush.msra.mxu0 %v1007
      %1037 = vmatpush.msra.mxu0 %v1006
      %1038 = vmatmul.f32.gmra.mxu0 %v1002
      %v1039 = vpop.f32.mrf.mxu0
      %v1040 = vadd.f32 0.0, %v1039
      %1041 = vmatmul.f32.gmra.mxu0 %v1003
      %v1042 = vpop.f32.mrf.mxu0
      %v1043 = vadd.f32 0.0, %v1042
      %1044 = vmatmul.f32.gmra.mxu0 %v1004
      %v1045 = vpop.f32.mrf.mxu0
      %v1046 = vadd.f32 0.0, %v1045
      %1047 = vdwg.mxu0
      %v1048 = vadd.f32 %v999, %v1040
      %v1049 = vadd.f32 %v1000, %v1043
      %v1050 = vadd.f32 %v1001, %v1046
      %v1051 = vld [vmem:[#allocation2 + $0x7] sm:$0xff]
      %v1052 = vld [vmem:[#allocation2 + $0xf] sm:$0xff]
      %v1053 = vld [vmem:[#allocation2 + $0x17] sm:$0x1]
      %s1054 = scalar_lea.vmem %s3, 896
      %v1055 = vld [vmem:[%s1054] sm:$0xff]
      %v1056 = vld [vmem:[%s1054 + $0x8] sm:$0xff]
      %v1057 = vld [vmem:[%s1054 + $0x10] sm:$0xff]
      %v1058 = vld [vmem:[%s1054 + $0x18] sm:$0xff]
      %v1059 = vld [vmem:[%s1054 + $0x20] sm:$0xff]
      %v1060 = vld [vmem:[%s1054 + $0x28] sm:$0xff]
      %v1061 = vld [vmem:[%s1054 + $0x30] sm:$0xff]
      %v1062 = vld [vmem:[%s1054 + $0x38] sm:$0xff]
      %v1063 = vld [vmem:[%s1054 + $0x40] sm:$0xff]
      %v1064 = vld [vmem:[%s1054 + $0x48] sm:$0xff]
      %v1065 = vld [vmem:[%s1054 + $0x50] sm:$0xff]
      %v1066 = vld [vmem:[%s1054 + $0x58] sm:$0xff]
      %v1067 = vld [vmem:[%s1054 + $0x60] sm:$0xff]
      %v1068 = vld [vmem:[%s1054 + $0x68] sm:$0xff]
      %v1069 = vld [vmem:[%s1054 + $0x70] sm:$0xff]
      %v1070 = vld [vmem:[%s1054 + $0x78] sm:$0xff]
      %1071 = vmatpush.msra.mxu0 %v1070
      %1072 = vmatpush.msra.mxu0 %v1069
      %1073 = vmatpush.msra.mxu0 %v1068
      %1074 = vmatpush.msra.mxu0 %v1067
      %1075 = vmatpush.msra.mxu0 %v1066
      %1076 = vmatpush.msra.mxu0 %v1065
      %1077 = vmatpush.msra.mxu0 %v1064
      %1078 = vmatpush.msra.mxu0 %v1063
      %1079 = vmatpush.msra.mxu0 %v1062
      %1080 = vmatpush.msra.mxu0 %v1061
      %1081 = vmatpush.msra.mxu0 %v1060
      %1082 = vmatpush.msra.mxu0 %v1059
      %1083 = vmatpush.msra.mxu0 %v1058
      %1084 = vmatpush.msra.mxu0 %v1057
      %1085 = vmatpush.msra.mxu0 %v1056
      %1086 = vmatpush.msra.mxu0 %v1055
      %1087 = vmatmul.f32.gmra.mxu0 %v1051
      %v1088 = vpop.f32.mrf.mxu0
      %v1089 = vadd.f32 0.0, %v1088
      %1090 = vmatmul.f32.gmra.mxu0 %v1052
      %v1091 = vpop.f32.mrf.mxu0
      %v1092 = vadd.f32 0.0, %v1091
      %1093 = vmatmul.f32.gmra.mxu0 %v1053
      %v1094 = vpop.f32.mrf.mxu0
      %v1095 = vadd.f32 0.0, %v1094
      %1096 = vdwg.mxu0
      %v1097 = vadd.f32 %v1048, %v1089
      %v1098 = vadd.f32 %v1049, %v1092
      %v1099 = vadd.f32 %v1050, %v1095
      %v1100 = vld [vmem:[%s4] sm:$0x1]
      %v1102 = vperm.slane %v1100, 0
      %v1104 = vadd.f32 %v1097, %v1102
      %v1105 = vadd.f32 %v1098, %v1102
      %v1106 = vadd.f32 %v1099, %v1102
      %v1107 = vmul.f32 %v1104, 0.01
      %v1108 = vmul.f32 %v1105, 0.01
      %v1109 = vmul.f32 %v1106, 0.01
      %v1110 = vmax.f32 %v1104, %v1107
      %v1111 = vmax.f32 %v1105, %v1108
      %v1112 = vmax.f32 %v1106, %v1109
      %1113 = vst [vmem:[#allocation3 + $0x4] sm:$0xff] %v1110
      %1114 = vst [vmem:[#allocation3 + $0xc] sm:$0xff] %v1111
      %1115 = vst [vmem:[#allocation3 + $0x14] sm:$0x1] %v1112
      %v1116 = vld [vmem:[#allocation3] sm:$0xff]
      %v1117 = vld [vmem:[#allocation3 + $0x8] sm:$0xff]
      %v1118 = vld [vmem:[#allocation3 + $0x10] sm:$0x3]
      %v1119 = vld [vmem:[%s5] sm:$0xff]
      %v1120 = vld [vmem:[%s5 + $0x8] sm:$0xff]
      %v1121 = vld [vmem:[%s5 + $0x10] sm:$0xff]
      %v1122 = vld [vmem:[%s5 + $0x18] sm:$0xff]
      %v1123 = vld [vmem:[%s5 + $0x20] sm:$0xff]
      %v1124 = vld [vmem:[%s5 + $0x28] sm:$0xff]
      %v1125 = vld [vmem:[%s5 + $0x30] sm:$0xff]
      %v1126 = vld [vmem:[%s5 + $0x38] sm:$0xff]
      %v1127 = vld [vmem:[%s5 + $0x40] sm:$0xff]
      %v1128 = vld [vmem:[%s5 + $0x48] sm:$0xff]
      %v1129 = vld [vmem:[%s5 + $0x50] sm:$0xff]
      %v1130 = vld [vmem:[%s5 + $0x58] sm:$0xff]
      %v1131 = vld [vmem:[%s5 + $0x60] sm:$0xff]
      %v1132 = vld [vmem:[%s5 + $0x68] sm:$0xff]
      %v1133 = vld [vmem:[%s5 + $0x70] sm:$0xff]
      %v1134 = vld [vmem:[%s5 + $0x78] sm:$0xff]
      %v1135 = vld [vmem:[#allocation3 + $0x1] sm:$0xff]
      %v1136 = vld [vmem:[#allocation3 + $0x9] sm:$0xff]
      %v1137 = vld [vmem:[#allocation3 + $0x11] sm:$0x3]
      %s1138 = scalar_lea.vmem %s5, 128
      %v1139 = vld [vmem:[%s1138] sm:$0xff]
      %v1140 = vld [vmem:[%s1138 + $0x8] sm:$0xff]
      %v1141 = vld [vmem:[%s1138 + $0x10] sm:$0xff]
      %v1142 = vld [vmem:[%s1138 + $0x18] sm:$0xff]
      %v1143 = vld [vmem:[%s1138 + $0x20] sm:$0xff]
      %v1144 = vld [vmem:[%s1138 + $0x28] sm:$0xff]
      %v1145 = vld [vmem:[%s1138 + $0x30] sm:$0xff]
      %v1146 = vld [vmem:[%s1138 + $0x38] sm:$0xff]
      %v1147 = vld [vmem:[%s1138 + $0x40] sm:$0xff]
      %v1148 = vld [vmem:[%s1138 + $0x48] sm:$0xff]
      %v1149 = vld [vmem:[%s1138 + $0x50] sm:$0xff]
      %v1150 = vld [vmem:[%s1138 + $0x58] sm:$0xff]
      %v1151 = vld [vmem:[%s1138 + $0x60] sm:$0xff]
      %v1152 = vld [vmem:[%s1138 + $0x68] sm:$0xff]
      %v1153 = vld [vmem:[%s1138 + $0x70] sm:$0xff]
      %v1154 = vld [vmem:[%s1138 + $0x78] sm:$0xff]
      %1155 = vmatpush.msra.mxu0 %v1154
      %1156 = vmatpush.msra.mxu0 %v1153
      %1157 = vmatpush.msra.mxu0 %v1152
      %1158 = vmatpush.msra.mxu0 %v1151
      %1159 = vmatpush.msra.mxu0 %v1150
      %1160 = vmatpush.msra.mxu0 %v1149
      %1161 = vmatpush.msra.mxu0 %v1148
      %1162 = vmatpush.msra.mxu0 %v1147
      %1163 = vmatpush.msra.mxu0 %v1146
      %1164 = vmatpush.msra.mxu0 %v1145
      %1165 = vmatpush.msra.mxu0 %v1144
      %1166 = vmatpush.msra.mxu0 %v1143
      %1167 = vmatpush.msra.mxu0 %v1142
      %1168 = vmatpush.msra.mxu0 %v1141
      %1169 = vmatpush.msra.mxu0 %v1140
      %1170 = vmatpush.msra.mxu0 %v1139
      %1171 = vmatmul.f32.gmra.mxu0 %v1135
      %v1172 = vpop.f32.mrf.mxu0
      %v1173 = vadd.f32 0.0, %v1172
      %1174 = vmatmul.f32.gmra.mxu0 %v1136
      %v1175 = vpop.f32.mrf.mxu0
      %v1176 = vadd.f32 0.0, %v1175
      %1177 = vmatmul.f32.gmra.mxu0 %v1137
      %v1178 = vpop.f32.mrf.mxu0
      %v1179 = vadd.f32 0.0, %v1178
      %1180 = vdwg.mxu0
      %1181 = vmatpush.msra.mxu0 %v1134
      %1182 = vmatpush.msra.mxu0 %v1133
      %1183 = vmatpush.msra.mxu0 %v1132
      %1184 = vmatpush.msra.mxu0 %v1131
      %1185 = vmatpush.msra.mxu0 %v1130
      %1186 = vmatpush.msra.mxu0 %v1129
      %1187 = vmatpush.msra.mxu0 %v1128
      %1188 = vmatpush.msra.mxu0 %v1127
      %1189 = vmatpush.msra.mxu0 %v1126
      %1190 = vmatpush.msra.mxu0 %v1125
      %1191 = vmatpush.msra.mxu0 %v1124
      %1192 = vmatpush.msra.mxu0 %v1123
      %1193 = vmatpush.msra.mxu0 %v1122
      %1194 = vmatpush.msra.mxu0 %v1121
      %1195 = vmatpush.msra.mxu0 %v1120
      %1196 = vmatpush.msra.mxu0 %v1119
      %1197 = vmatmul.f32.gmra.mxu0 %v1116
      %v1198 = vpop.f32.mrf.mxu0
      %v1199 = vadd.f32 %v1173, %v1198
      %1200 = vmatmul.f32.gmra.mxu0 %v1117
      %v1201 = vpop.f32.mrf.mxu0
      %v1202 = vadd.f32 %v1176, %v1201
      %1203 = vmatmul.f32.gmra.mxu0 %v1118
      %v1204 = vpop.f32.mrf.mxu0
      %v1205 = vadd.f32 %v1179, %v1204
      %1206 = vdwg.mxu0
      %v1207 = vld [vmem:[#allocation3 + $0x2] sm:$0xff]
      %v1208 = vld [vmem:[#allocation3 + $0xa] sm:$0xff]
      %v1209 = vld [vmem:[#allocation3 + $0x12] sm:$0x3]
      %s1210 = scalar_lea.vmem %s5, 256
      %v1211 = vld [vmem:[%s1210] sm:$0xff]
      %v1212 = vld [vmem:[%s1210 + $0x8] sm:$0xff]
      %v1213 = vld [vmem:[%s1210 + $0x10] sm:$0xff]
      %v1214 = vld [vmem:[%s1210 + $0x18] sm:$0xff]
      %v1215 = vld [vmem:[%s1210 + $0x20] sm:$0xff]
      %v1216 = vld [vmem:[%s1210 + $0x28] sm:$0xff]
      %v1217 = vld [vmem:[%s1210 + $0x30] sm:$0xff]
      %v1218 = vld [vmem:[%s1210 + $0x38] sm:$0xff]
      %v1219 = vld [vmem:[%s1210 + $0x40] sm:$0xff]
      %v1220 = vld [vmem:[%s1210 + $0x48] sm:$0xff]
      %v1221 = vld [vmem:[%s1210 + $0x50] sm:$0xff]
      %v1222 = vld [vmem:[%s1210 + $0x58] sm:$0xff]
      %v1223 = vld [vmem:[%s1210 + $0x60] sm:$0xff]
      %v1224 = vld [vmem:[%s1210 + $0x68] sm:$0xff]
      %v1225 = vld [vmem:[%s1210 + $0x70] sm:$0xff]
      %v1226 = vld [vmem:[%s1210 + $0x78] sm:$0xff]
      %1227 = vmatpush.msra.mxu0 %v1226
      %1228 = vmatpush.msra.mxu0 %v1225
      %1229 = vmatpush.msra.mxu0 %v1224
      %1230 = vmatpush.msra.mxu0 %v1223
      %1231 = vmatpush.msra.mxu0 %v1222
      %1232 = vmatpush.msra.mxu0 %v1221
      %1233 = vmatpush.msra.mxu0 %v1220
      %1234 = vmatpush.msra.mxu0 %v1219
      %1235 = vmatpush.msra.mxu0 %v1218
      %1236 = vmatpush.msra.mxu0 %v1217
      %1237 = vmatpush.msra.mxu0 %v1216
      %1238 = vmatpush.msra.mxu0 %v1215
      %1239 = vmatpush.msra.mxu0 %v1214
      %1240 = vmatpush.msra.mxu0 %v1213
      %1241 = vmatpush.msra.mxu0 %v1212
      %1242 = vmatpush.msra.mxu0 %v1211
      %1243 = vmatmul.f32.gmra.mxu0 %v1207
      %v1244 = vpop.f32.mrf.mxu0
      %v1245 = vadd.f32 0.0, %v1244
      %1246 = vmatmul.f32.gmra.mxu0 %v1208
      %v1247 = vpop.f32.mrf.mxu0
      %v1248 = vadd.f32 0.0, %v1247
      %1249 = vmatmul.f32.gmra.mxu0 %v1209
      %v1250 = vpop.f32.mrf.mxu0
      %v1251 = vadd.f32 0.0, %v1250
      %1252 = vdwg.mxu0
      %v1253 = vadd.f32 %v1199, %v1245
      %v1254 = vadd.f32 %v1202, %v1248
      %v1255 = vadd.f32 %v1205, %v1251
      %v1256 = vld [vmem:[#allocation3 + $0x3] sm:$0xff]
      %v1257 = vld [vmem:[#allocation3 + $0xb] sm:$0xff]
      %v1258 = vld [vmem:[#allocation3 + $0x13] sm:$0x3]
      %s1259 = scalar_lea.vmem %s5, 384
      %v1260 = vld [vmem:[%s1259] sm:$0xff]
      %v1261 = vld [vmem:[%s1259 + $0x8] sm:$0xff]
      %v1262 = vld [vmem:[%s1259 + $0x10] sm:$0xff]
      %v1263 = vld [vmem:[%s1259 + $0x18] sm:$0xff]
      %v1264 = vld [vmem:[%s1259 + $0x20] sm:$0xff]
      %v1265 = vld [vmem:[%s1259 + $0x28] sm:$0xff]
      %v1266 = vld [vmem:[%s1259 + $0x30] sm:$0xff]
      %v1267 = vld [vmem:[%s1259 + $0x38] sm:$0xff]
      %v1268 = vld [vmem:[%s1259 + $0x40] sm:$0xff]
      %v1269 = vld [vmem:[%s1259 + $0x48] sm:$0xff]
      %v1270 = vld [vmem:[%s1259 + $0x50] sm:$0xff]
      %v1271 = vld [vmem:[%s1259 + $0x58] sm:$0xff]
      %v1272 = vld [vmem:[%s1259 + $0x60] sm:$0xff]
      %v1273 = vld [vmem:[%s1259 + $0x68] sm:$0xff]
      %v1274 = vld [vmem:[%s1259 + $0x70] sm:$0xff]
      %v1275 = vld [vmem:[%s1259 + $0x78] sm:$0xff]
      %1276 = vmatpush.msra.mxu0 %v1275
      %1277 = vmatpush.msra.mxu0 %v1274
      %1278 = vmatpush.msra.mxu0 %v1273
      %1279 = vmatpush.msra.mxu0 %v1272
      %1280 = vmatpush.msra.mxu0 %v1271
      %1281 = vmatpush.msra.mxu0 %v1270
      %1282 = vmatpush.msra.mxu0 %v1269
      %1283 = vmatpush.msra.mxu0 %v1268
      %1284 = vmatpush.msra.mxu0 %v1267
      %1285 = vmatpush.msra.mxu0 %v1266
      %1286 = vmatpush.msra.mxu0 %v1265
      %1287 = vmatpush.msra.mxu0 %v1264
      %1288 = vmatpush.msra.mxu0 %v1263
      %1289 = vmatpush.msra.mxu0 %v1262
      %1290 = vmatpush.msra.mxu0 %v1261
      %1291 = vmatpush.msra.mxu0 %v1260
      %1292 = vmatmul.f32.gmra.mxu0 %v1256
      %v1293 = vpop.f32.mrf.mxu0
      %v1294 = vadd.f32 0.0, %v1293
      %1295 = vmatmul.f32.gmra.mxu0 %v1257
      %v1296 = vpop.f32.mrf.mxu0
      %v1297 = vadd.f32 0.0, %v1296
      %1298 = vmatmul.f32.gmra.mxu0 %v1258
      %v1299 = vpop.f32.mrf.mxu0
      %v1300 = vadd.f32 0.0, %v1299
      %1301 = vdwg.mxu0
      %v1302 = vadd.f32 %v1253, %v1294
      %v1303 = vadd.f32 %v1254, %v1297
      %v1304 = vadd.f32 %v1255, %v1300
      %v1305 = vld [vmem:[#allocation3 + $0x4] sm:$0xff]
      %v1306 = vld [vmem:[#allocation3 + $0xc] sm:$0xff]
      %v1307 = vld [vmem:[#allocation3 + $0x14] sm:$0x3]
      %s1308 = scalar_lea.vmem %s5, 512
      %v1309 = vld [vmem:[%s1308] sm:$0xff]
      %v1310 = vld [vmem:[%s1308 + $0x8] sm:$0xff]
      %v1311 = vld [vmem:[%s1308 + $0x10] sm:$0xff]
      %v1312 = vld [vmem:[%s1308 + $0x18] sm:$0xff]
      %v1313 = vld [vmem:[%s1308 + $0x20] sm:$0xff]
      %v1314 = vld [vmem:[%s1308 + $0x28] sm:$0xff]
      %v1315 = vld [vmem:[%s1308 + $0x30] sm:$0xff]
      %v1316 = vld [vmem:[%s1308 + $0x38] sm:$0xff]
      %v1317 = vld [vmem:[%s1308 + $0x40] sm:$0xff]
      %v1318 = vld [vmem:[%s1308 + $0x48] sm:$0xff]
      %v1319 = vld [vmem:[%s1308 + $0x50] sm:$0xff]
      %v1320 = vld [vmem:[%s1308 + $0x58] sm:$0xff]
      %v1321 = vld [vmem:[%s1308 + $0x60] sm:$0xff]
      %v1322 = vld [vmem:[%s1308 + $0x68] sm:$0xff]
      %v1323 = vld [vmem:[%s1308 + $0x70] sm:$0xff]
      %v1324 = vld [vmem:[%s1308 + $0x78] sm:$0xff]
      %1325 = vmatpush.msra.mxu0 %v1324
      %1326 = vmatpush.msra.mxu0 %v1323
      %1327 = vmatpush.msra.mxu0 %v1322
      %1328 = vmatpush.msra.mxu0 %v1321
      %1329 = vmatpush.msra.mxu0 %v1320
      %1330 = vmatpush.msra.mxu0 %v1319
      %1331 = vmatpush.msra.mxu0 %v1318
      %1332 = vmatpush.msra.mxu0 %v1317
      %1333 = vmatpush.msra.mxu0 %v1316
      %1334 = vmatpush.msra.mxu0 %v1315
      %1335 = vmatpush.msra.mxu0 %v1314
      %1336 = vmatpush.msra.mxu0 %v1313
      %1337 = vmatpush.msra.mxu0 %v1312
      %1338 = vmatpush.msra.mxu0 %v1311
      %1339 = vmatpush.msra.mxu0 %v1310
      %1340 = vmatpush.msra.mxu0 %v1309
      %1341 = vmatmul.f32.gmra.mxu0 %v1305
      %v1342 = vpop.f32.mrf.mxu0
      %v1343 = vadd.f32 0.0, %v1342
      %1344 = vmatmul.f32.gmra.mxu0 %v1306
      %v1345 = vpop.f32.mrf.mxu0
      %v1346 = vadd.f32 0.0, %v1345
      %1347 = vmatmul.f32.gmra.mxu0 %v1307
      %v1348 = vpop.f32.mrf.mxu0
      %v1349 = vadd.f32 0.0, %v1348
      %1350 = vdwg.mxu0
      %v1351 = vadd.f32 %v1302, %v1343
      %v1352 = vadd.f32 %v1303, %v1346
      %v1353 = vadd.f32 %v1304, %v1349
      %v1354 = vld [vmem:[#allocation3 + $0x5] sm:$0xff]
      %v1355 = vld [vmem:[#allocation3 + $0xd] sm:$0xff]
      %v1356 = vld [vmem:[#allocation3 + $0x15] sm:$0x3]
      %s1357 = scalar_lea.vmem %s5, 640
      %v1358 = vld [vmem:[%s1357] sm:$0xff]
      %v1359 = vld [vmem:[%s1357 + $0x8] sm:$0xff]
      %v1360 = vld [vmem:[%s1357 + $0x10] sm:$0xff]
      %v1361 = vld [vmem:[%s1357 + $0x18] sm:$0xff]
      %v1362 = vld [vmem:[%s1357 + $0x20] sm:$0xff]
      %v1363 = vld [vmem:[%s1357 + $0x28] sm:$0xff]
      %v1364 = vld [vmem:[%s1357 + $0x30] sm:$0xff]
      %v1365 = vld [vmem:[%s1357 + $0x38] sm:$0xff]
      %v1366 = vld [vmem:[%s1357 + $0x40] sm:$0xff]
      %v1367 = vld [vmem:[%s1357 + $0x48] sm:$0xff]
      %v1368 = vld [vmem:[%s1357 + $0x50] sm:$0xff]
      %v1369 = vld [vmem:[%s1357 + $0x58] sm:$0xff]
      %v1370 = vld [vmem:[%s1357 + $0x60] sm:$0xff]
      %v1371 = vld [vmem:[%s1357 + $0x68] sm:$0xff]
      %v1372 = vld [vmem:[%s1357 + $0x70] sm:$0xff]
      %v1373 = vld [vmem:[%s1357 + $0x78] sm:$0xff]
      %1374 = vmatpush.msra.mxu0 %v1373
      %1375 = vmatpush.msra.mxu0 %v1372
      %1376 = vmatpush.msra.mxu0 %v1371
      %1377 = vmatpush.msra.mxu0 %v1370
      %1378 = vmatpush.msra.mxu0 %v1369
      %1379 = vmatpush.msra.mxu0 %v1368
      %1380 = vmatpush.msra.mxu0 %v1367
      %1381 = vmatpush.msra.mxu0 %v1366
      %1382 = vmatpush.msra.mxu0 %v1365
      %1383 = vmatpush.msra.mxu0 %v1364
      %1384 = vmatpush.msra.mxu0 %v1363
      %1385 = vmatpush.msra.mxu0 %v1362
      %1386 = vmatpush.msra.mxu0 %v1361
      %1387 = vmatpush.msra.mxu0 %v1360
      %1388 = vmatpush.msra.mxu0 %v1359
      %1389 = vmatpush.msra.mxu0 %v1358
      %1390 = vmatmul.f32.gmra.mxu0 %v1354
      %v1391 = vpop.f32.mrf.mxu0
      %v1392 = vadd.f32 0.0, %v1391
      %1393 = vmatmul.f32.gmra.mxu0 %v1355
      %v1394 = vpop.f32.mrf.mxu0
      %v1395 = vadd.f32 0.0, %v1394
      %1396 = vmatmul.f32.gmra.mxu0 %v1356
      %v1397 = vpop.f32.mrf.mxu0
      %v1398 = vadd.f32 0.0, %v1397
      %1399 = vdwg.mxu0
      %v1400 = vadd.f32 %v1351, %v1392
      %v1401 = vadd.f32 %v1352, %v1395
      %v1402 = vadd.f32 %v1353, %v1398
      %v1403 = vld [vmem:[#allocation3 + $0x6] sm:$0xff]
      %v1404 = vld [vmem:[#allocation3 + $0xe] sm:$0xff]
      %v1405 = vld [vmem:[#allocation3 + $0x16] sm:$0x3]
      %s1406 = scalar_lea.vmem %s5, 768
      %v1407 = vld [vmem:[%s1406] sm:$0xff]
      %v1408 = vld [vmem:[%s1406 + $0x8] sm:$0xff]
      %v1409 = vld [vmem:[%s1406 + $0x10] sm:$0xff]
      %v1410 = vld [vmem:[%s1406 + $0x18] sm:$0xff]
      %v1411 = vld [vmem:[%s1406 + $0x20] sm:$0xff]
      %v1412 = vld [vmem:[%s1406 + $0x28] sm:$0xff]
      %v1413 = vld [vmem:[%s1406 + $0x30] sm:$0xff]
      %v1414 = vld [vmem:[%s1406 + $0x38] sm:$0xff]
      %v1415 = vld [vmem:[%s1406 + $0x40] sm:$0xff]
      %v1416 = vld [vmem:[%s1406 + $0x48] sm:$0xff]
      %v1417 = vld [vmem:[%s1406 + $0x50] sm:$0xff]
      %v1418 = vld [vmem:[%s1406 + $0x58] sm:$0xff]
      %v1419 = vld [vmem:[%s1406 + $0x60] sm:$0xff]
      %v1420 = vld [vmem:[%s1406 + $0x68] sm:$0xff]
      %v1421 = vld [vmem:[%s1406 + $0x70] sm:$0xff]
      %v1422 = vld [vmem:[%s1406 + $0x78] sm:$0xff]
      %1423 = vmatpush.msra.mxu0 %v1422
      %1424 = vmatpush.msra.mxu0 %v1421
      %1425 = vmatpush.msra.mxu0 %v1420
      %1426 = vmatpush.msra.mxu0 %v1419
      %1427 = vmatpush.msra.mxu0 %v1418
      %1428 = vmatpush.msra.mxu0 %v1417
      %1429 = vmatpush.msra.mxu0 %v1416
      %1430 = vmatpush.msra.mxu0 %v1415
      %1431 = vmatpush.msra.mxu0 %v1414
      %1432 = vmatpush.msra.mxu0 %v1413
      %1433 = vmatpush.msra.mxu0 %v1412
      %1434 = vmatpush.msra.mxu0 %v1411
      %1435 = vmatpush.msra.mxu0 %v1410
      %1436 = vmatpush.msra.mxu0 %v1409
      %1437 = vmatpush.msra.mxu0 %v1408
      %1438 = vmatpush.msra.mxu0 %v1407
      %1439 = vmatmul.f32.gmra.mxu0 %v1403
      %v1440 = vpop.f32.mrf.mxu0
      %v1441 = vadd.f32 0.0, %v1440
      %1442 = vmatmul.f32.gmra.mxu0 %v1404
      %v1443 = vpop.f32.mrf.mxu0
      %v1444 = vadd.f32 0.0, %v1443
      %1445 = vmatmul.f32.gmra.mxu0 %v1405
      %v1446 = vpop.f32.mrf.mxu0
      %v1447 = vadd.f32 0.0, %v1446
      %1448 = vdwg.mxu0
      %v1449 = vadd.f32 %v1400, %v1441
      %v1450 = vadd.f32 %v1401, %v1444
      %v1451 = vadd.f32 %v1402, %v1447
      %v1452 = vld [vmem:[#allocation3 + $0x7] sm:$0xff]
      %v1453 = vld [vmem:[#allocation3 + $0xf] sm:$0xff]
      %v1454 = vld [vmem:[#allocation3 + $0x17] sm:$0x3]
      %s1455 = scalar_lea.vmem %s5, 896
      %v1456 = vld [vmem:[%s1455] sm:$0xff]
      %v1457 = vld [vmem:[%s1455 + $0x8] sm:$0xff]
      %v1458 = vld [vmem:[%s1455 + $0x10] sm:$0xff]
      %v1459 = vld [vmem:[%s1455 + $0x18] sm:$0xff]
      %v1460 = vld [vmem:[%s1455 + $0x20] sm:$0xff]
      %v1461 = vld [vmem:[%s1455 + $0x28] sm:$0xff]
      %v1462 = vld [vmem:[%s1455 + $0x30] sm:$0xff]
      %v1463 = vld [vmem:[%s1455 + $0x38] sm:$0xff]
      %v1464 = vld [vmem:[%s1455 + $0x40] sm:$0xff]
      %v1465 = vld [vmem:[%s1455 + $0x48] sm:$0xff]
      %v1466 = vld [vmem:[%s1455 + $0x50] sm:$0xff]
      %v1467 = vld [vmem:[%s1455 + $0x58] sm:$0xff]
      %v1468 = vld [vmem:[%s1455 + $0x60] sm:$0xff]
      %v1469 = vld [vmem:[%s1455 + $0x68] sm:$0xff]
      %v1470 = vld [vmem:[%s1455 + $0x70] sm:$0xff]
      %v1471 = vld [vmem:[%s1455 + $0x78] sm:$0xff]
      %1472 = vmatpush.msra.mxu0 %v1471
      %1473 = vmatpush.msra.mxu0 %v1470
      %1474 = vmatpush.msra.mxu0 %v1469
      %1475 = vmatpush.msra.mxu0 %v1468
      %1476 = vmatpush.msra.mxu0 %v1467
      %1477 = vmatpush.msra.mxu0 %v1466
      %1478 = vmatpush.msra.mxu0 %v1465
      %1479 = vmatpush.msra.mxu0 %v1464
      %1480 = vmatpush.msra.mxu0 %v1463
      %1481 = vmatpush.msra.mxu0 %v1462
      %1482 = vmatpush.msra.mxu0 %v1461
      %1483 = vmatpush.msra.mxu0 %v1460
      %1484 = vmatpush.msra.mxu0 %v1459
      %1485 = vmatpush.msra.mxu0 %v1458
      %1486 = vmatpush.msra.mxu0 %v1457
      %1487 = vmatpush.msra.mxu0 %v1456
      %1488 = vmatmul.f32.gmra.mxu0 %v1452
      %v1489 = vpop.f32.mrf.mxu0
      %v1490 = vadd.f32 0.0, %v1489
      %1491 = vmatmul.f32.gmra.mxu0 %v1453
      %v1492 = vpop.f32.mrf.mxu0
      %v1493 = vadd.f32 0.0, %v1492
      %1494 = vmatmul.f32.gmra.mxu0 %v1454
      %v1495 = vpop.f32.mrf.mxu0
      %v1496 = vadd.f32 0.0, %v1495
      %1497 = vdwg.mxu0
      %v1498 = vadd.f32 %v1449, %v1490
      %v1499 = vadd.f32 %v1450, %v1493
      %v1500 = vadd.f32 %v1451, %v1496
      %v1501 = vld [vmem:[%s6] sm:$0x1]
      %v1503 = vperm.slane %v1501, 0
      %v1505 = vadd.f32 %v1498, %v1503
      %v1506 = vadd.f32 %v1499, %v1503
      %v1507 = vadd.f32 %v1500, %v1503
      %v1508 = vmul.f32 %v1505, 0.01
      %v1509 = vmul.f32 %v1506, 0.01
      %v1510 = vmul.f32 %v1507, 0.01
      %v1511 = vmax.f32 %v1505, %v1508
      %v1512 = vmax.f32 %v1506, %v1509
      %v1513 = vmax.f32 %v1507, %v1510
      %1514 = vst [vmem:[#allocation4 + $0x4] sm:$0xff] %v1511
      %1515 = vst [vmem:[#allocation4 + $0xc] sm:$0xff] %v1512
      %1516 = vst [vmem:[#allocation4 + $0x14] sm:$0x3] %v1513
      %v1517 = vld [vmem:[#allocation4] sm:$0xff]
      %v1518 = vld [vmem:[#allocation4 + $0x8] sm:$0xff]
      %v1519 = vld [vmem:[#allocation4 + $0x10] sm:$0x7]
      %v1520 = vld [vmem:[%s7] sm:$0xff]
      %v1521 = vld [vmem:[%s7 + $0x8] sm:$0xff]
      %v1522 = vld [vmem:[%s7 + $0x10] sm:$0xff]
      %v1523 = vld [vmem:[%s7 + $0x18] sm:$0xff]
      %v1524 = vld [vmem:[%s7 + $0x20] sm:$0xff]
      %v1525 = vld [vmem:[%s7 + $0x28] sm:$0xff]
      %v1526 = vld [vmem:[%s7 + $0x30] sm:$0xff]
      %v1527 = vld [vmem:[%s7 + $0x38] sm:$0xff]
      %v1528 = vld [vmem:[%s7 + $0x40] sm:$0xff]
      %v1529 = vld [vmem:[%s7 + $0x48] sm:$0xff]
      %v1530 = vld [vmem:[%s7 + $0x50] sm:$0xff]
      %v1531 = vld [vmem:[%s7 + $0x58] sm:$0xff]
      %v1532 = vld [vmem:[%s7 + $0x60] sm:$0xff]
      %v1533 = vld [vmem:[%s7 + $0x68] sm:$0xff]
      %v1534 = vld [vmem:[%s7 + $0x70] sm:$0xff]
      %v1535 = vld [vmem:[%s7 + $0x78] sm:$0xff]
      %v1536 = vld [vmem:[#allocation4 + $0x1] sm:$0xff]
      %v1537 = vld [vmem:[#allocation4 + $0x9] sm:$0xff]
      %v1538 = vld [vmem:[#allocation4 + $0x11] sm:$0x7]
      %s1539 = scalar_lea.vmem %s7, 128
      %v1540 = vld [vmem:[%s1539] sm:$0xff]
      %v1541 = vld [vmem:[%s1539 + $0x8] sm:$0xff]
      %v1542 = vld [vmem:[%s1539 + $0x10] sm:$0xff]
      %v1543 = vld [vmem:[%s1539 + $0x18] sm:$0xff]
      %v1544 = vld [vmem:[%s1539 + $0x20] sm:$0xff]
      %v1545 = vld [vmem:[%s1539 + $0x28] sm:$0xff]
      %v1546 = vld [vmem:[%s1539 + $0x30] sm:$0xff]
      %v1547 = vld [vmem:[%s1539 + $0x38] sm:$0xff]
      %v1548 = vld [vmem:[%s1539 + $0x40] sm:$0xff]
      %v1549 = vld [vmem:[%s1539 + $0x48] sm:$0xff]
      %v1550 = vld [vmem:[%s1539 + $0x50] sm:$0xff]
      %v1551 = vld [vmem:[%s1539 + $0x58] sm:$0xff]
      %v1552 = vld [vmem:[%s1539 + $0x60] sm:$0xff]
      %v1553 = vld [vmem:[%s1539 + $0x68] sm:$0xff]
      %v1554 = vld [vmem:[%s1539 + $0x70] sm:$0xff]
      %v1555 = vld [vmem:[%s1539 + $0x78] sm:$0xff]
      %1556 = vmatpush.msra.mxu0 %v1555
      %1557 = vmatpush.msra.mxu0 %v1554
      %1558 = vmatpush.msra.mxu0 %v1553
      %1559 = vmatpush.msra.mxu0 %v1552
      %1560 = vmatpush.msra.mxu0 %v1551
      %1561 = vmatpush.msra.mxu0 %v1550
      %1562 = vmatpush.msra.mxu0 %v1549
      %1563 = vmatpush.msra.mxu0 %v1548
      %1564 = vmatpush.msra.mxu0 %v1547
      %1565 = vmatpush.msra.mxu0 %v1546
      %1566 = vmatpush.msra.mxu0 %v1545
      %1567 = vmatpush.msra.mxu0 %v1544
      %1568 = vmatpush.msra.mxu0 %v1543
      %1569 = vmatpush.msra.mxu0 %v1542
      %1570 = vmatpush.msra.mxu0 %v1541
      %1571 = vmatpush.msra.mxu0 %v1540
      %1572 = vmatmul.f32.gmra.mxu0 %v1536
      %v1573 = vpop.f32.mrf.mxu0
      %v1574 = vadd.f32 0.0, %v1573
      %1575 = vmatmul.f32.gmra.mxu0 %v1537
      %v1576 = vpop.f32.mrf.mxu0
      %v1577 = vadd.f32 0.0, %v1576
      %1578 = vmatmul.f32.gmra.mxu0 %v1538
      %v1579 = vpop.f32.mrf.mxu0
      %v1580 = vadd.f32 0.0, %v1579
      %1581 = vdwg.mxu0
      %1582 = vmatpush.msra.mxu0 %v1535
      %1583 = vmatpush.msra.mxu0 %v1534
      %1584 = vmatpush.msra.mxu0 %v1533
      %1585 = vmatpush.msra.mxu0 %v1532
      %1586 = vmatpush.msra.mxu0 %v1531
      %1587 = vmatpush.msra.mxu0 %v1530
      %1588 = vmatpush.msra.mxu0 %v1529
      %1589 = vmatpush.msra.mxu0 %v1528
      %1590 = vmatpush.msra.mxu0 %v1527
      %1591 = vmatpush.msra.mxu0 %v1526
      %1592 = vmatpush.msra.mxu0 %v1525
      %1593 = vmatpush.msra.mxu0 %v1524
      %1594 = vmatpush.msra.mxu0 %v1523
      %1595 = vmatpush.msra.mxu0 %v1522
      %1596 = vmatpush.msra.mxu0 %v1521
      %1597 = vmatpush.msra.mxu0 %v1520
      %1598 = vmatmul.f32.gmra.mxu0 %v1517
      %v1599 = vpop.f32.mrf.mxu0
      %v1600 = vadd.f32 %v1574, %v1599
      %1601 = vmatmul.f32.gmra.mxu0 %v1518
      %v1602 = vpop.f32.mrf.mxu0
      %v1603 = vadd.f32 %v1577, %v1602
      %1604 = vmatmul.f32.gmra.mxu0 %v1519
      %v1605 = vpop.f32.mrf.mxu0
      %v1606 = vadd.f32 %v1580, %v1605
      %1607 = vdwg.mxu0
      %v1608 = vld [vmem:[#allocation4 + $0x2] sm:$0xff]
      %v1609 = vld [vmem:[#allocation4 + $0xa] sm:$0xff]
      %v1610 = vld [vmem:[#allocation4 + $0x12] sm:$0x7]
      %s1611 = scalar_lea.vmem %s7, 256
      %v1612 = vld [vmem:[%s1611] sm:$0xff]
      %v1613 = vld [vmem:[%s1611 + $0x8] sm:$0xff]
      %v1614 = vld [vmem:[%s1611 + $0x10] sm:$0xff]
      %v1615 = vld [vmem:[%s1611 + $0x18] sm:$0xff]
      %v1616 = vld [vmem:[%s1611 + $0x20] sm:$0xff]
      %v1617 = vld [vmem:[%s1611 + $0x28] sm:$0xff]
      %v1618 = vld [vmem:[%s1611 + $0x30] sm:$0xff]
      %v1619 = vld [vmem:[%s1611 + $0x38] sm:$0xff]
      %v1620 = vld [vmem:[%s1611 + $0x40] sm:$0xff]
      %v1621 = vld [vmem:[%s1611 + $0x48] sm:$0xff]
      %v1622 = vld [vmem:[%s1611 + $0x50] sm:$0xff]
      %v1623 = vld [vmem:[%s1611 + $0x58] sm:$0xff]
      %v1624 = vld [vmem:[%s1611 + $0x60] sm:$0xff]
      %v1625 = vld [vmem:[%s1611 + $0x68] sm:$0xff]
      %v1626 = vld [vmem:[%s1611 + $0x70] sm:$0xff]
      %v1627 = vld [vmem:[%s1611 + $0x78] sm:$0xff]
      %1628 = vmatpush.msra.mxu0 %v1627
      %1629 = vmatpush.msra.mxu0 %v1626
      %1630 = vmatpush.msra.mxu0 %v1625
      %1631 = vmatpush.msra.mxu0 %v1624
      %1632 = vmatpush.msra.mxu0 %v1623
      %1633 = vmatpush.msra.mxu0 %v1622
      %1634 = vmatpush.msra.mxu0 %v1621
      %1635 = vmatpush.msra.mxu0 %v1620
      %1636 = vmatpush.msra.mxu0 %v1619
      %1637 = vmatpush.msra.mxu0 %v1618
      %1638 = vmatpush.msra.mxu0 %v1617
      %1639 = vmatpush.msra.mxu0 %v1616
      %1640 = vmatpush.msra.mxu0 %v1615
      %1641 = vmatpush.msra.mxu0 %v1614
      %1642 = vmatpush.msra.mxu0 %v1613
      %1643 = vmatpush.msra.mxu0 %v1612
      %1644 = vmatmul.f32.gmra.mxu0 %v1608
      %v1645 = vpop.f32.mrf.mxu0
      %v1646 = vadd.f32 0.0, %v1645
      %1647 = vmatmul.f32.gmra.mxu0 %v1609
      %v1648 = vpop.f32.mrf.mxu0
      %v1649 = vadd.f32 0.0, %v1648
      %1650 = vmatmul.f32.gmra.mxu0 %v1610
      %v1651 = vpop.f32.mrf.mxu0
      %v1652 = vadd.f32 0.0, %v1651
      %1653 = vdwg.mxu0
      %v1654 = vadd.f32 %v1600, %v1646
      %v1655 = vadd.f32 %v1603, %v1649
      %v1656 = vadd.f32 %v1606, %v1652
      %v1657 = vld [vmem:[#allocation4 + $0x3] sm:$0xff]
      %v1658 = vld [vmem:[#allocation4 + $0xb] sm:$0xff]
      %v1659 = vld [vmem:[#allocation4 + $0x13] sm:$0x7]
      %s1660 = scalar_lea.vmem %s7, 384
      %v1661 = vld [vmem:[%s1660] sm:$0xff]
      %v1662 = vld [vmem:[%s1660 + $0x8] sm:$0xff]
      %v1663 = vld [vmem:[%s1660 + $0x10] sm:$0xff]
      %v1664 = vld [vmem:[%s1660 + $0x18] sm:$0xff]
      %v1665 = vld [vmem:[%s1660 + $0x20] sm:$0xff]
      %v1666 = vld [vmem:[%s1660 + $0x28] sm:$0xff]
      %v1667 = vld [vmem:[%s1660 + $0x30] sm:$0xff]
      %v1668 = vld [vmem:[%s1660 + $0x38] sm:$0xff]
      %v1669 = vld [vmem:[%s1660 + $0x40] sm:$0xff]
      %v1670 = vld [vmem:[%s1660 + $0x48] sm:$0xff]
      %v1671 = vld [vmem:[%s1660 + $0x50] sm:$0xff]
      %v1672 = vld [vmem:[%s1660 + $0x58] sm:$0xff]
      %v1673 = vld [vmem:[%s1660 + $0x60] sm:$0xff]
      %v1674 = vld [vmem:[%s1660 + $0x68] sm:$0xff]
      %v1675 = vld [vmem:[%s1660 + $0x70] sm:$0xff]
      %v1676 = vld [vmem:[%s1660 + $0x78] sm:$0xff]
      %1677 = vmatpush.msra.mxu0 %v1676
      %1678 = vmatpush.msra.mxu0 %v1675
      %1679 = vmatpush.msra.mxu0 %v1674
      %1680 = vmatpush.msra.mxu0 %v1673
      %1681 = vmatpush.msra.mxu0 %v1672
      %1682 = vmatpush.msra.mxu0 %v1671
      %1683 = vmatpush.msra.mxu0 %v1670
      %1684 = vmatpush.msra.mxu0 %v1669
      %1685 = vmatpush.msra.mxu0 %v1668
      %1686 = vmatpush.msra.mxu0 %v1667
      %1687 = vmatpush.msra.mxu0 %v1666
      %1688 = vmatpush.msra.mxu0 %v1665
      %1689 = vmatpush.msra.mxu0 %v1664
      %1690 = vmatpush.msra.mxu0 %v1663
      %1691 = vmatpush.msra.mxu0 %v1662
      %1692 = vmatpush.msra.mxu0 %v1661
      %1693 = vmatmul.f32.gmra.mxu0 %v1657
      %v1694 = vpop.f32.mrf.mxu0
      %v1695 = vadd.f32 0.0, %v1694
      %1696 = vmatmul.f32.gmra.mxu0 %v1658
      %v1697 = vpop.f32.mrf.mxu0
      %v1698 = vadd.f32 0.0, %v1697
      %1699 = vmatmul.f32.gmra.mxu0 %v1659
      %v1700 = vpop.f32.mrf.mxu0
      %v1701 = vadd.f32 0.0, %v1700
      %1702 = vdwg.mxu0
      %v1703 = vadd.f32 %v1654, %v1695
      %v1704 = vadd.f32 %v1655, %v1698
      %v1705 = vadd.f32 %v1656, %v1701
      %v1706 = vld [vmem:[#allocation4 + $0x4] sm:$0xff]
      %v1707 = vld [vmem:[#allocation4 + $0xc] sm:$0xff]
      %v1708 = vld [vmem:[#allocation4 + $0x14] sm:$0x7]
      %s1709 = scalar_lea.vmem %s7, 512
      %v1710 = vld [vmem:[%s1709] sm:$0xff]
      %v1711 = vld [vmem:[%s1709 + $0x8] sm:$0xff]
      %v1712 = vld [vmem:[%s1709 + $0x10] sm:$0xff]
      %v1713 = vld [vmem:[%s1709 + $0x18] sm:$0xff]
      %v1714 = vld [vmem:[%s1709 + $0x20] sm:$0xff]
      %v1715 = vld [vmem:[%s1709 + $0x28] sm:$0xff]
      %v1716 = vld [vmem:[%s1709 + $0x30] sm:$0xff]
      %v1717 = vld [vmem:[%s1709 + $0x38] sm:$0xff]
      %v1718 = vld [vmem:[%s1709 + $0x40] sm:$0xff]
      %v1719 = vld [vmem:[%s1709 + $0x48] sm:$0xff]
      %v1720 = vld [vmem:[%s1709 + $0x50] sm:$0xff]
      %v1721 = vld [vmem:[%s1709 + $0x58] sm:$0xff]
      %v1722 = vld [vmem:[%s1709 + $0x60] sm:$0xff]
      %v1723 = vld [vmem:[%s1709 + $0x68] sm:$0xff]
      %v1724 = vld [vmem:[%s1709 + $0x70] sm:$0xff]
      %v1725 = vld [vmem:[%s1709 + $0x78] sm:$0xff]
      %1726 = vmatpush.msra.mxu0 %v1725
      %1727 = vmatpush.msra.mxu0 %v1724
      %1728 = vmatpush.msra.mxu0 %v1723
      %1729 = vmatpush.msra.mxu0 %v1722
      %1730 = vmatpush.msra.mxu0 %v1721
      %1731 = vmatpush.msra.mxu0 %v1720
      %1732 = vmatpush.msra.mxu0 %v1719
      %1733 = vmatpush.msra.mxu0 %v1718
      %1734 = vmatpush.msra.mxu0 %v1717
      %1735 = vmatpush.msra.mxu0 %v1716
      %1736 = vmatpush.msra.mxu0 %v1715
      %1737 = vmatpush.msra.mxu0 %v1714
      %1738 = vmatpush.msra.mxu0 %v1713
      %1739 = vmatpush.msra.mxu0 %v1712
      %1740 = vmatpush.msra.mxu0 %v1711
      %1741 = vmatpush.msra.mxu0 %v1710
      %1742 = vmatmul.f32.gmra.mxu0 %v1706
      %v1743 = vpop.f32.mrf.mxu0
      %v1744 = vadd.f32 0.0, %v1743
      %1745 = vmatmul.f32.gmra.mxu0 %v1707
      %v1746 = vpop.f32.mrf.mxu0
      %v1747 = vadd.f32 0.0, %v1746
      %1748 = vmatmul.f32.gmra.mxu0 %v1708
      %v1749 = vpop.f32.mrf.mxu0
      %v1750 = vadd.f32 0.0, %v1749
      %1751 = vdwg.mxu0
      %v1752 = vadd.f32 %v1703, %v1744
      %v1753 = vadd.f32 %v1704, %v1747
      %v1754 = vadd.f32 %v1705, %v1750
      %v1755 = vld [vmem:[#allocation4 + $0x5] sm:$0xff]
      %v1756 = vld [vmem:[#allocation4 + $0xd] sm:$0xff]
      %v1757 = vld [vmem:[#allocation4 + $0x15] sm:$0x7]
      %s1758 = scalar_lea.vmem %s7, 640
      %v1759 = vld [vmem:[%s1758] sm:$0xff]
      %v1760 = vld [vmem:[%s1758 + $0x8] sm:$0xff]
      %v1761 = vld [vmem:[%s1758 + $0x10] sm:$0xff]
      %v1762 = vld [vmem:[%s1758 + $0x18] sm:$0xff]
      %v1763 = vld [vmem:[%s1758 + $0x20] sm:$0xff]
      %v1764 = vld [vmem:[%s1758 + $0x28] sm:$0xff]
      %v1765 = vld [vmem:[%s1758 + $0x30] sm:$0xff]
      %v1766 = vld [vmem:[%s1758 + $0x38] sm:$0xff]
      %v1767 = vld [vmem:[%s1758 + $0x40] sm:$0xff]
      %v1768 = vld [vmem:[%s1758 + $0x48] sm:$0xff]
      %v1769 = vld [vmem:[%s1758 + $0x50] sm:$0xff]
      %v1770 = vld [vmem:[%s1758 + $0x58] sm:$0xff]
      %v1771 = vld [vmem:[%s1758 + $0x60] sm:$0xff]
      %v1772 = vld [vmem:[%s1758 + $0x68] sm:$0xff]
      %v1773 = vld [vmem:[%s1758 + $0x70] sm:$0xff]
      %v1774 = vld [vmem:[%s1758 + $0x78] sm:$0xff]
      %1775 = vmatpush.msra.mxu0 %v1774
      %1776 = vmatpush.msra.mxu0 %v1773
      %1777 = vmatpush.msra.mxu0 %v1772
      %1778 = vmatpush.msra.mxu0 %v1771
      %1779 = vmatpush.msra.mxu0 %v1770
      %1780 = vmatpush.msra.mxu0 %v1769
      %1781 = vmatpush.msra.mxu0 %v1768
      %1782 = vmatpush.msra.mxu0 %v1767
      %1783 = vmatpush.msra.mxu0 %v1766
      %1784 = vmatpush.msra.mxu0 %v1765
      %1785 = vmatpush.msra.mxu0 %v1764
      %1786 = vmatpush.msra.mxu0 %v1763
      %1787 = vmatpush.msra.mxu0 %v1762
      %1788 = vmatpush.msra.mxu0 %v1761
      %1789 = vmatpush.msra.mxu0 %v1760
      %1790 = vmatpush.msra.mxu0 %v1759
      %1791 = vmatmul.f32.gmra.mxu0 %v1755
      %v1792 = vpop.f32.mrf.mxu0
      %v1793 = vadd.f32 0.0, %v1792
      %1794 = vmatmul.f32.gmra.mxu0 %v1756
      %v1795 = vpop.f32.mrf.mxu0
      %v1796 = vadd.f32 0.0, %v1795
      %1797 = vmatmul.f32.gmra.mxu0 %v1757
      %v1798 = vpop.f32.mrf.mxu0
      %v1799 = vadd.f32 0.0, %v1798
      %1800 = vdwg.mxu0
      %v1801 = vadd.f32 %v1752, %v1793
      %v1802 = vadd.f32 %v1753, %v1796
      %v1803 = vadd.f32 %v1754, %v1799
      %v1804 = vld [vmem:[#allocation4 + $0x6] sm:$0xff]
      %v1805 = vld [vmem:[#allocation4 + $0xe] sm:$0xff]
      %v1806 = vld [vmem:[#allocation4 + $0x16] sm:$0x7]
      %s1807 = scalar_lea.vmem %s7, 768
      %v1808 = vld [vmem:[%s1807] sm:$0xff]
      %v1809 = vld [vmem:[%s1807 + $0x8] sm:$0xff]
      %v1810 = vld [vmem:[%s1807 + $0x10] sm:$0xff]
      %v1811 = vld [vmem:[%s1807 + $0x18] sm:$0xff]
      %v1812 = vld [vmem:[%s1807 + $0x20] sm:$0xff]
      %v1813 = vld [vmem:[%s1807 + $0x28] sm:$0xff]
      %v1814 = vld [vmem:[%s1807 + $0x30] sm:$0xff]
      %v1815 = vld [vmem:[%s1807 + $0x38] sm:$0xff]
      %v1816 = vld [vmem:[%s1807 + $0x40] sm:$0xff]
      %v1817 = vld [vmem:[%s1807 + $0x48] sm:$0xff]
      %v1818 = vld [vmem:[%s1807 + $0x50] sm:$0xff]
      %v1819 = vld [vmem:[%s1807 + $0x58] sm:$0xff]
      %v1820 = vld [vmem:[%s1807 + $0x60] sm:$0xff]
      %v1821 = vld [vmem:[%s1807 + $0x68] sm:$0xff]
      %v1822 = vld [vmem:[%s1807 + $0x70] sm:$0xff]
      %v1823 = vld [vmem:[%s1807 + $0x78] sm:$0xff]
      %1824 = vmatpush.msra.mxu0 %v1823
      %1825 = vmatpush.msra.mxu0 %v1822
      %1826 = vmatpush.msra.mxu0 %v1821
      %1827 = vmatpush.msra.mxu0 %v1820
      %1828 = vmatpush.msra.mxu0 %v1819
      %1829 = vmatpush.msra.mxu0 %v1818
      %1830 = vmatpush.msra.mxu0 %v1817
      %1831 = vmatpush.msra.mxu0 %v1816
      %1832 = vmatpush.msra.mxu0 %v1815
      %1833 = vmatpush.msra.mxu0 %v1814
      %1834 = vmatpush.msra.mxu0 %v1813
      %1835 = vmatpush.msra.mxu0 %v1812
      %1836 = vmatpush.msra.mxu0 %v1811
      %1837 = vmatpush.msra.mxu0 %v1810
      %1838 = vmatpush.msra.mxu0 %v1809
      %1839 = vmatpush.msra.mxu0 %v1808
      %1840 = vmatmul.f32.gmra.mxu0 %v1804
      %v1841 = vpop.f32.mrf.mxu0
      %v1842 = vadd.f32 0.0, %v1841
      %1843 = vmatmul.f32.gmra.mxu0 %v1805
      %v1844 = vpop.f32.mrf.mxu0
      %v1845 = vadd.f32 0.0, %v1844
      %1846 = vmatmul.f32.gmra.mxu0 %v1806
      %v1847 = vpop.f32.mrf.mxu0
      %v1848 = vadd.f32 0.0, %v1847
      %1849 = vdwg.mxu0
      %v1850 = vadd.f32 %v1801, %v1842
      %v1851 = vadd.f32 %v1802, %v1845
      %v1852 = vadd.f32 %v1803, %v1848
      %v1853 = vld [vmem:[#allocation4 + $0x7] sm:$0xff]
      %v1854 = vld [vmem:[#allocation4 + $0xf] sm:$0xff]
      %v1855 = vld [vmem:[#allocation4 + $0x17] sm:$0x7]
      %s1856 = scalar_lea.vmem %s7, 896
      %v1857 = vld [vmem:[%s1856] sm:$0xff]
      %v1858 = vld [vmem:[%s1856 + $0x8] sm:$0xff]
      %v1859 = vld [vmem:[%s1856 + $0x10] sm:$0xff]
      %v1860 = vld [vmem:[%s1856 + $0x18] sm:$0xff]
      %v1861 = vld [vmem:[%s1856 + $0x20] sm:$0xff]
      %v1862 = vld [vmem:[%s1856 + $0x28] sm:$0xff]
      %v1863 = vld [vmem:[%s1856 + $0x30] sm:$0xff]
      %v1864 = vld [vmem:[%s1856 + $0x38] sm:$0xff]
      %v1865 = vld [vmem:[%s1856 + $0x40] sm:$0xff]
      %v1866 = vld [vmem:[%s1856 + $0x48] sm:$0xff]
      %v1867 = vld [vmem:[%s1856 + $0x50] sm:$0xff]
      %v1868 = vld [vmem:[%s1856 + $0x58] sm:$0xff]
      %v1869 = vld [vmem:[%s1856 + $0x60] sm:$0xff]
      %v1870 = vld [vmem:[%s1856 + $0x68] sm:$0xff]
      %v1871 = vld [vmem:[%s1856 + $0x70] sm:$0xff]
      %v1872 = vld [vmem:[%s1856 + $0x78] sm:$0xff]
      %1873 = vmatpush.msra.mxu0 %v1872
      %1874 = vmatpush.msra.mxu0 %v1871
      %1875 = vmatpush.msra.mxu0 %v1870
      %1876 = vmatpush.msra.mxu0 %v1869
      %1877 = vmatpush.msra.mxu0 %v1868
      %1878 = vmatpush.msra.mxu0 %v1867
      %1879 = vmatpush.msra.mxu0 %v1866
      %1880 = vmatpush.msra.mxu0 %v1865
      %1881 = vmatpush.msra.mxu0 %v1864
      %1882 = vmatpush.msra.mxu0 %v1863
      %1883 = vmatpush.msra.mxu0 %v1862
      %1884 = vmatpush.msra.mxu0 %v1861
      %1885 = vmatpush.msra.mxu0 %v1860
      %1886 = vmatpush.msra.mxu0 %v1859
      %1887 = vmatpush.msra.mxu0 %v1858
      %1888 = vmatpush.msra.mxu0 %v1857
      %1889 = vmatmul.f32.gmra.mxu0 %v1853
      %v1890 = vpop.f32.mrf.mxu0
      %v1891 = vadd.f32 0.0, %v1890
      %1892 = vmatmul.f32.gmra.mxu0 %v1854
      %v1893 = vpop.f32.mrf.mxu0
      %v1894 = vadd.f32 0.0, %v1893
      %1895 = vmatmul.f32.gmra.mxu0 %v1855
      %v1896 = vpop.f32.mrf.mxu0
      %v1897 = vadd.f32 0.0, %v1896
      %1898 = vdwg.mxu0
      %v1899 = vadd.f32 %v1850, %v1891
      %v1900 = vadd.f32 %v1851, %v1894
      %v1901 = vadd.f32 %v1852, %v1897
      %v1902 = vld [vmem:[%s8] sm:$0x1]
      %v1904 = vperm.slane %v1902, 0
      %v1906 = vadd.f32 %v1899, %v1904
      %v1907 = vadd.f32 %v1900, %v1904
      %v1908 = vadd.f32 %v1901, %v1904
      %v1909 = vmul.f32 %v1906, 0.01
      %v1910 = vmul.f32 %v1907, 0.01
      %v1911 = vmul.f32 %v1908, 0.01
      %v1912 = vmax.f32 %v1906, %v1909
      %v1913 = vmax.f32 %v1907, %v1910
      %v1914 = vmax.f32 %v1908, %v1911
      %vm1915 = vcmask 1041408
      %v1916 = vsel %vm1915, %v1912, -inf
      %v1917 = vrot.slane %v1916, 4
      %v1918 = vmax.f32 %v1916, %v1917
      %v1919 = vrot.slane %v1918, 2
      %v1920 = vmax.f32 %v1918, %v1919
      %v1921 = vrot.slane %v1920, 1
      %v1922 = vmax.f32 %v1920, %v1921
      %1923 = vst [vmem:[%s330] sm:$0x1] %v1922
      %vm1924 = vcmask 1045506
      %v1925 = vsel %vm1924, %v1912, -inf
      %v1926 = vrot.slane %v1925, 4
      %v1927 = vmax.f32 %v1925, %v1926
      %v1928 = vrot.slane %v1927, 2
      %v1929 = vmax.f32 %v1927, %v1928
      %v1930 = vrot.slane %v1929, 1
      %v1931 = vmax.f32 %v1929, %v1930
      %1932 = vst [vmem:[%s330 + $0x1] sm:$0x1] %v1931
      %vm1933 = vcmask 1047558
      %v1934 = vsel %vm1933, %v1912, -inf
      %v1935 = vsel %vm1915, %v1913, -inf
      %v1936 = vmax.f32 %v1934, %v1935
      %v1937 = vrot.slane %v1936, 4
      %v1938 = vmax.f32 %v1936, %v1937
      %v1939 = vrot.slane %v1938, 2
      %v1940 = vmax.f32 %v1938, %v1939
      %v1941 = vrot.slane %v1940, 1
      %v1942 = vmax.f32 %v1940, %v1941
      %1943 = vst [vmem:[%s330 + $0x2] sm:$0x1] %v1942
      %v1944 = vsel %vm1924, %v1913, -inf
      %v1945 = vrot.slane %v1944, 4
      %v1946 = vmax.f32 %v1944, %v1945
      %v1947 = vrot.slane %v1946, 2
      %v1948 = vmax.f32 %v1946, %v1947
      %v1949 = vrot.slane %v1948, 1
      %v1950 = vmax.f32 %v1948, %v1949
      %1951 = vst [vmem:[%s330 + $0x3] sm:$0x1] %v1950
      %v1952 = vsel %vm1933, %v1913, -inf
      %v1953 = vsel %vm1915, %v1914, -inf
      %v1954 = vmax.f32 %v1952, %v1953
      %v1955 = vrot.slane %v1954, 4
      %v1956 = vmax.f32 %v1954, %v1955
      %v1957 = vrot.slane %v1956, 2
      %v1958 = vmax.f32 %v1956, %v1957
      %v1959 = vrot.slane %v1958, 1
      %v1960 = vmax.f32 %v1958, %v1959
      %1961 = vst [vmem:[%s330 + $0x4] sm:$0x1] %v1960
      %p1962 = scmp.lt.s32.totalorder %s20, 1
      %s1963 = scalar_select %p1962, %s20, 1
      %s1964 = smul.addr %s1963, 8
      %s1965 = scalar_lea.vmem %s9, %s1964
      // Predicated region
      $region57: #{temporal_feature_eeg.2} parent=55 // pred_check
        %p1966 = pneg %p232
      $region58: #{temporal_feature_eeg.2} parent=55 // pred_check_branch
        %1968 = sbr.rel (%p1966) target = $region60
      $region59: #{temporal_feature_eeg.2} parent=55 // pred_region
        _
      $region60: #{temporal_feature_eeg.2} parent=55 // pred_fallthru
        _
    $region56: #{temporal_feature_eeg.2} parent=5 // pred_fallthru
      _
    %p1969 = scmp.le.s32.totalorder 2, %s15
    // Predicated region
    $region61: #{temporal_feature_eeg.2} parent=5 // pred_check
      %p1970 = pneg %p1969
    $region62: #{temporal_feature_eeg.2} parent=5 // pred_check_branch
      %1972 = sbr.rel (%p1970) target = $region64
    $region63: #{temporal_feature_eeg.2} parent=5 // pred_region
      %s1973 = ssub.s32 %s15, 2
      // Predicated region
      $region65: #{temporal_feature_eeg.2} parent=63 // pred_check
        %p1974 = pneg %p238
      $region66: #{temporal_feature_eeg.2} parent=63 // pred_check_branch
        %1976 = sbr.rel (%p1974) target = $region68
      $region67: #{temporal_feature_eeg.2} parent=63 // pred_region
        %p1977 = scmp.lt.s32.totalorder %s21, 1
        %s1978 = scalar_select %p1977, %s21, 1
        %s1979 = smul.addr %s1978, 8
        %s1980 = scalar_lea.vmem %s9, %s1979
      $region68: #{temporal_feature_eeg.2} parent=63 // pred_fallthru
        _
    $region64: #{temporal_feature_eeg.2} parent=5 // pred_fallthru
      _
  $region6: #{temporal_feature_eeg.2} parent=0 // loop_footer
    %s19 = sadd.s32 1, %s15
  $region7: #{temporal_feature_eeg.2} parent=0 // loop_footer_branch
    %14 = sbr.rel target = $region3
  $region8: #{temporal_feature_eeg.2} parent=0 // loop_exit
    _

</llo_original>
